<compile_context>
chip_gen: v6e
topology: v6e:2x2x1
jax: 0.10.0
libtpu: 0.0.40
codegen_flags: <defaults>
</compile_context>

<pallas_src>
import functools

import jax
import jax.numpy as jnp
from jax.experimental import pallas as pl
from jax.experimental.pallas import tpu as pltpu


def _round_up(x, m):
    return ((x + m - 1) // m) * m


def _time_lstm_kernel(xg_ref, ts_ref, h0_ref, c0_ref, wa_ref, wd_ref, bd_ref,
                      o_seq_ref, h_out_ref, c_out_ref,
                      h_scr, c_scr, *, hp, chunk, reverse, unroll):
    s = pl.program_id(1)

    # (Re)load the initial state at the start of every batch-tile's time sweep.
    @pl.when(s == 0)
    def _():
        h_scr[...] = h0_ref[...]
        c_scr[...] = c0_ref[...]

    tb = h_scr.shape[0]
    wa = wa_ref[...]                                 # (Hp, 4Hp), resident
    wd = wd_ref[...]                                 # (Hp, Hp),  resident
    # Hoist the loop-invariant bias broadcast out of the time loop
    # (JAX does not CSE broadcast_in_dim).
    bd = jnp.broadcast_to(bd_ref[...], (tb, hp))     # (tb, Hp) f32

    def step(i, carry):
        h, c = carry
        # Two dense matmuls instead of one zero-padded fused one; the c @ W_d
        # matmul can issue as soon as c is ready, overlapping the EUP work
        # (sigmoid / tanh) of the previous step.
        gates = jnp.dot(h.astype(wa.dtype), wa,
                        preferred_element_type=jnp.float32)
        gates = gates + xg_ref[i].astype(jnp.float32)          # (tb, 4Hp)
        cs1_pre = jnp.dot(c.astype(wd.dtype), wd,
                          preferred_element_type=jnp.float32)
        c_s1 = jnp.tanh(cs1_pre + bd)                          # (tb, Hp)

        tm1 = ts_ref[i]                                        # (tb, 1) = t - 1
        c_adj = c + c_s1 * tm1                                 # c - c_s1 + c_s1*t

        f_g = jax.nn.sigmoid(gates[:, 0 * hp:1 * hp])
        i_g = jax.nn.sigmoid(gates[:, 1 * hp:2 * hp])
        o_g = jax.nn.sigmoid(gates[:, 2 * hp:3 * hp])
        c_tmp = jax.nn.sigmoid(gates[:, 3 * hp:4 * hp])   # sigmoid, as in module

        c_new = f_g * c_adj + i_g * c_tmp
        h_new = o_g * jnp.tanh(c_new)

        j = (chunk - 1 - i) if reverse else i
        o_seq_ref[j] = o_g            # contiguous, lane-dense (tb, Hp) store
        return (h_new, c_new)

    h, c = jax.lax.fori_loop(0, chunk, step, (h_scr[...], c_scr[...]),
                             unroll=unroll)

    h_scr[...] = h
    c_scr[...] = c

    @pl.when(s == pl.num_programs(1) - 1)
    def _():
        h_out_ref[...] = h
        c_out_ref[...] = c


def _vmem_capacity_bytes():
    try:
        info = pltpu.get_tpu_info()
        cap = getattr(info, "vmem_capacity_bytes", None)
        if cap:
            return int(cap)
    except Exception:
        pass
    return 64 * 2 ** 20   # conservative default (v7x per-core VMEM)


def _vmem_bytes_for_chunk(T, tb, Hp, w_bytes, x_bytes):
    """Rough double-buffered VMEM footprint estimate for a time-chunk of T."""
    tb_s = _round_up(tb, 8)
    xg = 2 * T * tb_s * (4 * Hp) * x_bytes          # streamed gate pre-acts
    ts = 2 * T * tb_s * 128 * 4                     # (T, tb, 1): lanes pad to 128
    out = 2 * T * tb_s * Hp * 4                     # streamed o-gate output
    h0c0 = 2 * 2 * tb_s * Hp * 4                    # resident initial state
    wa = 2 * _round_up(Hp, 8) * (4 * Hp) * w_bytes  # resident recurrent weights
    wd = 2 * _round_up(Hp, 8) * Hp * w_bytes
    bd = 2 * 8 * Hp * 4
    scr = 2 * tb_s * Hp * 4                         # h/c scratch
    return xg + ts + out + h0c0 + wa + wd + bd + scr


def _pick_chunk(S, tb, Hp, w_bytes, x_bytes, budget):
    """Largest divisor of S (<= 512) whose VMEM footprint fits the budget."""
    divisors = [d for d in range(1, min(S, 512) + 1) if S % d == 0]
    best = divisors[0]
    for d in divisors:
        if _vmem_bytes_for_chunk(d, tb, Hp, w_bytes, x_bytes) <= budget:
            best = d
    return best


def _pick_batch_tile(B):
    # Split the batch into two blocks when it is large enough so the
    # "parallel" grid axis can use v7x's second TensorCore; keep sublane
    # tiling (multiples of 8) intact.
    if B >= 16 and B % 16 == 0:
        return B // 2
    return B


def time_lstm_forward(inputs, timestamps, h0, c0, params, reverse=False,
                      matmul_dtype=jnp.bfloat16, stream_dtype=jnp.float32):
    """inputs: (B, S, E); timestamps: (B, S); h0, c0: (B, H).

    Returns (outputs (B, S, H), (h_final, c_final)) matching the PyTorch
    module (outputs are the o-gate sequence; reverse only flips the outputs).
    matmul_dtype controls the recurrent-weight MXU operand dtype (bf16 default
    for MXU throughput; pass jnp.float32 for bit-accurate comparison).
    """
    B, S, E = inputs.shape
    H = h0.shape[-1]
    Hp = _round_up(H, 128)
    f32 = jnp.float32

    inputs = inputs.astype(f32)
    timestamps = timestamps.astype(f32)

    # --- parameter padding: every gate boundary lands on a 128-lane boundary.
    W_all_T = params["W_all_w"].T.astype(f32)                      # (H, 4H)
    U_all_T = params["U_all_w"].T.astype(f32)                      # (E, 4H)
    xb = (params["U_all_b"] + params["W_all_b"]).astype(f32)       # (4H,)

    W_all_p = jnp.zeros((Hp, 4 * Hp), f32)
    U_all_p = jnp.zeros((E, 4 * Hp), f32)
    xb_p = jnp.zeros((4 * Hp,), f32)
    for g in range(4):
        W_all_p = W_all_p.at[:H, g * Hp:g * Hp + H].set(W_all_T[:, g * H:(g + 1) * H])
        U_all_p = U_all_p.at[:, g * Hp:g * Hp + H].set(U_all_T[:, g * H:(g + 1) * H])
        xb_p = xb_p.at[g * Hp:g * Hp + H].set(xb[g * H:(g + 1) * H])

    W_d_p = jnp.zeros((Hp, Hp), f32).at[:H, :H].set(params["W_d_w"].T.astype(f32))
    bd_p = jnp.zeros((1, Hp), f32).at[0, :H].set(params["W_d_b"].astype(f32))

    W_all_p = W_all_p.astype(matmul_dtype)
    W_d_p = W_d_p.astype(matmul_dtype)

    h0_p = jnp.zeros((B, Hp), f32).at[:, :H].set(h0.astype(f32))
    c0_p = jnp.zeros((B, Hp), f32).at[:, :H].set(c0.astype(f32))

    # Hoisted, time-independent input projection — one dense XLA matmul,
    # emitted directly time-major so the kernel streams contiguous (tb, 4Hp)
    # tiles per step.
    xg = (jnp.einsum("bse,ef->sbf", inputs, U_all_p)
          + xb_p[None, None, :]).astype(stream_dtype)              # (S, B, 4Hp)
    # (t - 1) precomputed in the wrapper, time-major.
    ts = (jnp.transpose(timestamps, (1, 0))[..., None] - 1.0)      # (S, B, 1)

    # --- tiling: VMEM-aware chunk, optional batch split for megacore.
    tb = _pick_batch_tile(B)
    w_bytes = jnp.dtype(matmul_dtype).itemsize
    x_bytes = jnp.dtype(stream_dtype).itemsize
    vmem_cap = _vmem_capacity_bytes()
    T = _pick_chunk(S, tb, Hp, w_bytes, x_bytes, budget=int(0.6 * vmem_cap))
    nb, n_chunks = B // tb, S // T
    unroll = max(1, min(T, 8))

    est = _vmem_bytes_for_chunk(T, tb, Hp, w_bytes, x_bytes)
    vmem_limit = int(min(0.9 * vmem_cap, max(est + (4 << 20), 32 << 20)))

    stream = lambda b, s: (s, b, 0)
    out_time = (lambda b, s: (n_chunks - 1 - s, b, 0)) if reverse else stream
    state = lambda b, s: (b, 0)
    const2 = lambda b, s: (0, 0)

    kernel = functools.partial(_time_lstm_kernel, hp=Hp, chunk=T,
                               reverse=reverse, unroll=unroll)

    o_seq, h_fin, c_fin = pl.pallas_call(
        kernel,
        out_shape=(jax.ShapeDtypeStruct((S, B, Hp), f32),
                   jax.ShapeDtypeStruct((B, Hp), f32),
                   jax.ShapeDtypeStruct((B, Hp), f32)),
        grid_spec=pltpu.PrefetchScalarGridSpec(
            num_scalar_prefetch=0,
            grid=(nb, n_chunks),
            in_specs=[
                pl.BlockSpec((T, tb, 4 * Hp), stream),    # gate pre-activations
                pl.BlockSpec((T, tb, 1), stream),         # timestamps - 1
                pl.BlockSpec((tb, Hp), state),            # h0
                pl.BlockSpec((tb, Hp), state),            # c0
                pl.BlockSpec((Hp, 4 * Hp), const2),       # W_all^T (padded)
                pl.BlockSpec((Hp, Hp), const2),           # W_d^T   (padded)
                pl.BlockSpec((1, Hp), const2),            # b_d
            ],
            out_specs=(
                pl.BlockSpec((T, tb, Hp), out_time),      # o-gate sequence
                pl.BlockSpec((tb, Hp), state),            # final h
                pl.BlockSpec((tb, Hp), state),            # final c
            ),
            scratch_shapes=[pltpu.VMEM((tb, Hp), f32),
                            pltpu.VMEM((tb, Hp), f32)],
        ),
        compiler_params=pltpu.CompilerParams(
            dimension_semantics=("parallel", "arbitrary"),
            vmem_limit_bytes=vmem_limit),
    )(xg, ts, h0_p, c0_p, W_all_p, W_d_p, bd_p)

    outputs = jnp.transpose(o_seq, (1, 0, 2))[:, :, :H]
    return outputs, (h_fin[:, :H], c_fin[:, :H])


def _init_params(key, input_size, hidden_size):
    """Deterministic synthetic init mimicking uniform(-1/sqrt(fan_in), +)."""
    ks = jax.random.split(key, 6)
    H, E = hidden_size, input_size

    def lin(kw, kb, fan_in, fan_out):
        bound = 1.0 / jnp.sqrt(jnp.float32(fan_in))
        w = jax.random.uniform(kw, (fan_out, fan_in), jnp.float32, -bound, bound)
        b = jax.random.uniform(kb, (fan_out,), jnp.float32, -bound, bound)
        return w, b

    W_all_w, W_all_b = lin(ks[0], ks[1], H, 4 * H)
    U_all_w, U_all_b = lin(ks[2], ks[3], E, 4 * H)
    W_d_w, W_d_b = lin(ks[4], ks[5], H, H)
    return dict(W_all_w=W_all_w, W_all_b=W_all_b,
                U_all_w=U_all_w, U_all_b=U_all_b,
                W_d_w=W_d_w, W_d_b=W_d_b)


def _reference_forward(inputs, timestamps, h0, c0, params):
    """Pure-JAX port of the (Euclidean) time-LSTM loop, correctness oracle."""
    B, S, E = inputs.shape
    h, c = h0, c0
    outs_list = []
    for s in range(S):
        c_s1 = jnp.tanh(c @ params["W_d_w"].T + params["W_d_b"])
        c_s2 = c_s1 * timestamps[:, s:s + 1]
        c_adj = (c - c_s1) + c_s2
        gates = (h @ params["W_all_w"].T + params["W_all_b"]
                 + inputs[:, s] @ params["U_all_w"].T + params["U_all_b"])
        f, i, o, c_tmp = jnp.split(gates, 4, axis=1)
        f, i, o, c_tmp = map(jax.nn.sigmoid, (f, i, o, c_tmp))
        c = f * c_adj + i * c_tmp
        h = o * jnp.tanh(c)
        outs_list.append(o)
    return jnp.stack(outs_list, axis=1), (h, c)


if __name__ == "__main__":
    B, S, E, H = 2, 8, 16, 32

    key = jax.random.PRNGKey(0)
    k_x, k_t, k_h, k_c, k_p = jax.random.split(key, 5)

    inputs = jax.random.normal(k_x, (B, S, E), jnp.float32)
    timestamps = jax.random.uniform(k_t, (B, S), jnp.float32, 0.0, 2.0)
    h0 = jax.random.normal(k_h, (B, H), jnp.float32)
    c0 = jax.random.normal(k_c, (B, H), jnp.float32)
    params = _init_params(k_p, E, H)

    ref_out, (ref_h, ref_c) = _reference_forward(inputs, timestamps, h0, c0, params)

    # Exact path (f32 MXU operands) — tight tolerance against the oracle.
    outputs, (h_fin, c_fin) = time_lstm_forward(
        inputs, timestamps, h0, c0, params, matmul_dtype=jnp.float32)
    jax.block_until_ready((outputs, h_fin, c_fin))
    assert outputs.shape == (B, S, H)
    assert jnp.allclose(outputs, ref_out, atol=1e-5, rtol=1e-5)
    assert jnp.allclose(h_fin, ref_h, atol=1e-5, rtol=1e-5)
    assert jnp.allclose(c_fin, ref_c, atol=1e-5, rtol=1e-5)

    # reverse=True: outputs flipped in time via the index_map (no extra HBM
    # pass); final (h, c) unchanged — matching the PyTorch module.
    out_rev, (h_rev, c_rev) = time_lstm_forward(
        inputs, timestamps, h0, c0, params, reverse=True,
        matmul_dtype=jnp.float32)
    jax.block_until_ready((out_rev, h_rev, c_rev))
    assert jnp.allclose(out_rev, ref_out[:, ::-1, :], atol=1e-5, rtol=1e-5)
    assert jnp.allclose(h_rev, ref_h, atol=1e-5, rtol=1e-5)
    assert jnp.allclose(c_rev, ref_c, atol=1e-5, rtol=1e-5)

    # Default (bf16 MXU operands) path — loose tolerance sanity check.
    out_bf, (h_bf, c_bf) = time_lstm_forward(inputs, timestamps, h0, c0, params)
    jax.block_until_ready((out_bf, h_bf, c_bf))
    assert bool(jnp.all(jnp.isfinite(out_bf)))
    assert float(jnp.max(jnp.abs(out_bf - ref_out))) < 0.1

    print("KERNEL_OK")
</pallas_src>

<mosaic_0001>
module attributes {stable_mosaic.version = 11 : i64} {
  func.func @_time_lstm_kernel(%arg0: i32, %arg1: i32, %arg2: memref<8x2x512xf32, #tpu.memory_space<vmem>>, %arg3: memref<8x2x1xf32, #tpu.memory_space<vmem>>, %arg4: memref<2x128xf32, #tpu.memory_space<vmem>>, %arg5: memref<2x128xf32, #tpu.memory_space<vmem>>, %arg6: memref<128x512xf32, #tpu.memory_space<vmem>>, %arg7: memref<128x128xf32, #tpu.memory_space<vmem>>, %arg8: memref<1x128xf32, #tpu.memory_space<vmem>>, %arg9: memref<8x2x128xf32, #tpu.memory_space<vmem>>, %arg10: memref<2x128xf32, #tpu.memory_space<vmem>>, %arg11: memref<2x128xf32, #tpu.memory_space<vmem>>, %arg12: memref<2x128xf32, #tpu.memory_space<vmem>>, %arg13: memref<2x128xf32, #tpu.memory_space<vmem>>) attributes {dimension_semantics = [#tpu.dimension_semantics<parallel>, #tpu.dimension_semantics<arbitrary>], iteration_bounds = array<i64: 1, 1>, scalar_prefetch = 0 : i64, scratch_operands = 2 : i64, tpu.core_type = #tpu.core_type<tc>, window_params = [{transform_indices = @transform_0, window_bounds = array<i64: 8, 2, 512>}, {transform_indices = @transform_1, window_bounds = array<i64: 8, 2, 1>}, {transform_indices = @transform_2, window_bounds = array<i64: 2, 128>}, {transform_indices = @transform_3, window_bounds = array<i64: 2, 128>}, {pipeline_mode = #tpu.pipeline_mode<synchronous>, transform_indices = @transform_4, window_bounds = array<i64: 128, 512>}, {pipeline_mode = #tpu.pipeline_mode<synchronous>, transform_indices = @transform_5, window_bounds = array<i64: 128, 128>}, {pipeline_mode = #tpu.pipeline_mode<synchronous>, transform_indices = @transform_6, window_bounds = array<i64: 1, 128>}, {transform_indices = @transform_7, window_bounds = array<i64: 8, 2, 128>}, {transform_indices = @transform_8, window_bounds = array<i64: 2, 128>}, {transform_indices = @transform_9, window_bounds = array<i64: 2, 128>}]} {
    %c0_i32 = arith.constant 0 : i32
    %0 = arith.cmpi eq, %arg1, %c0_i32 : i32
    %1 = arith.extui %0 : i1 to i32
    %c0_i32_0 = arith.constant 0 : i32
    %2 = arith.cmpi ne, %1, %c0_i32_0 : i32
    scf.if %2 {
      %c0_112 = arith.constant 0 : index
      %c0_113 = arith.constant 0 : index
      %391 = vector.load %arg4[%c0_112, %c0_113] : memref<2x128xf32, #tpu.memory_space<vmem>>, vector<2x128xf32>
      %c0_114 = arith.constant 0 : index
      %c0_115 = arith.constant 0 : index
      %392 = vector.load %arg12[%c0_114, %c0_115] : memref<2x128xf32, #tpu.memory_space<vmem>>, vector<2x128xf32>
      tpu.vector_store %arg12[%c0_114, %c0_115], %391 {strides = array<i32>} : memref<2x128xf32, #tpu.memory_space<vmem>>, vector<2x128xf32>,
      %c0_116 = arith.constant 0 : index
      %c0_117 = arith.constant 0 : index
      %393 = vector.load %arg5[%c0_116, %c0_117] : memref<2x128xf32, #tpu.memory_space<vmem>>, vector<2x128xf32>
      %c0_118 = arith.constant 0 : index
      %c0_119 = arith.constant 0 : index
      %394 = vector.load %arg13[%c0_118, %c0_119] : memref<2x128xf32, #tpu.memory_space<vmem>>, vector<2x128xf32>
      tpu.vector_store %arg13[%c0_118, %c0_119], %393 {strides = array<i32>} : memref<2x128xf32, #tpu.memory_space<vmem>>, vector<2x128xf32>,
    } else {
    }
    %c0 = arith.constant 0 : index
    %c0_1 = arith.constant 0 : index
    %3 = vector.load %arg6[%c0, %c0_1] : memref<128x512xf32, #tpu.memory_space<vmem>>, vector<128x512xf32>
    %c0_2 = arith.constant 0 : index
    %c0_3 = arith.constant 0 : index
    %4 = vector.load %arg7[%c0_2, %c0_3] : memref<128x128xf32, #tpu.memory_space<vmem>>, vector<128x128xf32>
    %c0_4 = arith.constant 0 : index
    %c0_5 = arith.constant 0 : index
    %5 = vector.load %arg8[%c0_4, %c0_5] : memref<1x128xf32, #tpu.memory_space<vmem>>, vector<1x128xf32>
    %6 = vector.shape_cast %5 : vector<1x128xf32> to vector<1x128xf32>
    %7 = vector.broadcast %6 : vector<1x128xf32> to vector<2x128xf32>
    %c0_6 = arith.constant 0 : index
    %c0_7 = arith.constant 0 : index
    %8 = vector.load %arg12[%c0_6, %c0_7] : memref<2x128xf32, #tpu.memory_space<vmem>>, vector<2x128xf32>
    %c0_8 = arith.constant 0 : index
    %c0_9 = arith.constant 0 : index
    %9 = vector.load %arg13[%c0_8, %c0_9] : memref<2x128xf32, #tpu.memory_space<vmem>>, vector<2x128xf32>
    %c0_i32_10 = arith.constant 0 : i32
    %cst = arith.constant dense<0.000000e+00> : vector<2x512xf32>
    %10 = tpu.matmul %8, %3, %cst {dimension_numbers = #tpu.dot_dimension_numbers<[1], [0], [0], [1], [0, 0, 1, 1], [], []>} : vector<2x128xf32>, vector<128x512xf32>, vector<2x512xf32> -> vector<2x512xf32>
    %11 = arith.index_cast %c0_i32_10 : i32 to index
    %c0_11 = arith.constant 0 : index
    %c0_12 = arith.constant 0 : index
    %12 = vector.load %arg2[%11, %c0_11, %c0_12] : memref<8x2x512xf32, #tpu.memory_space<vmem>>, vector<1x2x512xf32>
    %13 = vector.shape_cast %12 : vector<1x2x512xf32> to vector<2x512xf32>
    %14 = arith.addf %10, %13 : vector<2x512xf32>
    %cst_13 = arith.constant dense<0.000000e+00> : vector<2x128xf32>
    %15 = tpu.matmul %9, %4, %cst_13 {dimension_numbers = #tpu.dot_dimension_numbers<[1], [0], [0], [1], [0, 0, 1, 1], [], []>} : vector<2x128xf32>, vector<128x128xf32>, vector<2x128xf32> -> vector<2x128xf32>
    %16 = arith.addf %15, %7 : vector<2x128xf32>
    %17 = math.tanh %16 : vector<2x128xf32>
    %18 = arith.index_cast %c0_i32_10 : i32 to index
    %c0_14 = arith.constant 0 : index
    %c0_15 = arith.constant 0 : index
    %19 = vector.load %arg3[%18, %c0_14, %c0_15] : memref<8x2x1xf32, #tpu.memory_space<vmem>>, vector<1x2x1xf32>
    %20 = vector.shape_cast %19 : vector<1x2x1xf32> to vector<2x1xf32>
    %21 = vector.broadcast %20 : vector<2x1xf32> to vector<2x128xf32>
    %22 = arith.mulf %17, %21 : vector<2x128xf32>
    %23 = arith.addf %9, %22 : vector<2x128xf32>
    %24 = vector.extract_strided_slice %14 {offsets = [0, 0], sizes = [2, 128], strides = [1, 1]} : vector<2x512xf32> to vector<2x128xf32>
    %25 = arith.negf %24 : vector<2x128xf32>
    %26 = math.exp %25 : vector<2x128xf32>
    %cst_16 = arith.constant 1.000000e+00 : f32
    %27 = vector.broadcast %cst_16 : f32 to vector<2x128xf32>
    %28 = arith.addf %27, %26 : vector<2x128xf32>
    %29 = arith.divf %27, %28 : vector<2x128xf32>
    %30 = vector.extract_strided_slice %14 {offsets = [0, 128], sizes = [2, 128], strides = [1, 1]} : vector<2x512xf32> to vector<2x128xf32>
    %31 = arith.negf %30 : vector<2x128xf32>
    %32 = math.exp %31 : vector<2x128xf32>
    %cst_17 = arith.constant 1.000000e+00 : f32
    %33 = vector.broadcast %cst_17 : f32 to vector<2x128xf32>
    %34 = arith.addf %33, %32 : vector<2x128xf32>
    %35 = arith.divf %33, %34 : vector<2x128xf32>
    %36 = vector.extract_strided_slice %14 {offsets = [0, 256], sizes = [2, 128], strides = [1, 1]} : vector<2x512xf32> to vector<2x128xf32>
    %37 = arith.negf %36 : vector<2x128xf32>
    %38 = math.exp %37 : vector<2x128xf32>
    %cst_18 = arith.constant 1.000000e+00 : f32
    %39 = vector.broadcast %cst_18 : f32 to vector<2x128xf32>
    %40 = arith.addf %39, %38 : vector<2x128xf32>
    %41 = arith.divf %39, %40 : vector<2x128xf32>
    %42 = vector.extract_strided_slice %14 {offsets = [0, 384], sizes = [2, 128], strides = [1, 1]} : vector<2x512xf32> to vector<2x128xf32>
    %43 = arith.negf %42 : vector<2x128xf32>
    %44 = math.exp %43 : vector<2x128xf32>
    %cst_19 = arith.constant 1.000000e+00 : f32
    %45 = vector.broadcast %cst_19 : f32 to vector<2x128xf32>
    %46 = arith.addf %45, %44 : vector<2x128xf32>
    %47 = arith.divf %45, %46 : vector<2x128xf32>
    %48 = arith.mulf %29, %23 : vector<2x128xf32>
    %49 = arith.mulf %35, %47 : vector<2x128xf32>
    %50 = arith.addf %48, %49 : vector<2x128xf32>
    %51 = math.tanh %50 : vector<2x128xf32>
    %52 = arith.mulf %41, %51 : vector<2x128xf32>
    %53 = arith.index_cast %c0_i32_10 : i32 to index
    %c0_20 = arith.constant 0 : index
    %c0_21 = arith.constant 0 : index
    %54 = vector.load %arg9[%53, %c0_20, %c0_21] : memref<8x2x128xf32, #tpu.memory_space<vmem>>, vector<1x2x128xf32>
    %55 = vector.shape_cast %54 : vector<1x2x128xf32> to vector<2x128xf32>
    %56 = vector.shape_cast %41 : vector<2x128xf32> to vector<1x2x128xf32>
    tpu.vector_store %arg9[%53, %c0_20, %c0_21], %56 {strides = array<i32>} : memref<8x2x128xf32, #tpu.memory_space<vmem>>, vector<1x2x128xf32>,
    %c1_i32 = arith.constant 1 : i32
    %cst_22 = arith.constant dense<0.000000e+00> : vector<2x512xf32>
    %57 = tpu.matmul %52, %3, %cst_22 {dimension_numbers = #tpu.dot_dimension_numbers<[1], [0], [0], [1], [0, 0, 1, 1], [], []>} : vector<2x128xf32>, vector<128x512xf32>, vector<2x512xf32> -> vector<2x512xf32>
    %58 = arith.index_cast %c1_i32 : i32 to index
    %c0_23 = arith.constant 0 : index
    %c0_24 = arith.constant 0 : index
    %59 = vector.load %arg2[%58, %c0_23, %c0_24] : memref<8x2x512xf32, #tpu.memory_space<vmem>>, vector<1x2x512xf32>
    %60 = vector.shape_cast %59 : vector<1x2x512xf32> to vector<2x512xf32>
    %61 = arith.addf %57, %60 : vector<2x512xf32>
    %cst_25 = arith.constant dense<0.000000e+00> : vector<2x128xf32>
    %62 = tpu.matmul %50, %4, %cst_25 {dimension_numbers = #tpu.dot_dimension_numbers<[1], [0], [0], [1], [0, 0, 1, 1], [], []>} : vector<2x128xf32>, vector<128x128xf32>, vector<2x128xf32> -> vector<2x128xf32>
    %63 = arith.addf %62, %7 : vector<2x128xf32>
    %64 = math.tanh %63 : vector<2x128xf32>
    %65 = arith.index_cast %c1_i32 : i32 to index
    %c0_26 = arith.constant 0 : index
    %c0_27 = arith.constant 0 : index
    %66 = vector.load %arg3[%65, %c0_26, %c0_27] : memref<8x2x1xf32, #tpu.memory_space<vmem>>, vector<1x2x1xf32>
    %67 = vector.shape_cast %66 : vector<1x2x1xf32> to vector<2x1xf32>
    %68 = vector.broadcast %67 : vector<2x1xf32> to vector<2x128xf32>
    %69 = arith.mulf %64, %68 : vector<2x128xf32>
    %70 = arith.addf %50, %69 : vector<2x128xf32>
    %71 = vector.extract_strided_slice %61 {offsets = [0, 0], sizes = [2, 128], strides = [1, 1]} : vector<2x512xf32> to vector<2x128xf32>
    %72 = arith.negf %71 : vector<2x128xf32>
    %73 = math.exp %72 : vector<2x128xf32>
    %cst_28 = arith.constant 1.000000e+00 : f32
    %74 = vector.broadcast %cst_28 : f32 to vector<2x128xf32>
    %75 = arith.addf %74, %73 : vector<2x128xf32>
    %76 = arith.divf %74, %75 : vector<2x128xf32>
    %77 = vector.extract_strided_slice %61 {offsets = [0, 128], sizes = [2, 128], strides = [1, 1]} : vector<2x512xf32> to vector<2x128xf32>
    %78 = arith.negf %77 : vector<2x128xf32>
    %79 = math.exp %78 : vector<2x128xf32>
    %cst_29 = arith.constant 1.000000e+00 : f32
    %80 = vector.broadcast %cst_29 : f32 to vector<2x128xf32>
    %81 = arith.addf %80, %79 : vector<2x128xf32>
    %82 = arith.divf %80, %81 : vector<2x128xf32>
    %83 = vector.extract_strided_slice %61 {offsets = [0, 256], sizes = [2, 128], strides = [1, 1]} : vector<2x512xf32> to vector<2x128xf32>
    %84 = arith.negf %83 : vector<2x128xf32>
    %85 = math.exp %84 : vector<2x128xf32>
    %cst_30 = arith.constant 1.000000e+00 : f32
    %86 = vector.broadcast %cst_30 : f32 to vector<2x128xf32>
    %87 = arith.addf %86, %85 : vector<2x128xf32>
    %88 = arith.divf %86, %87 : vector<2x128xf32>
    %89 = vector.extract_strided_slice %61 {offsets = [0, 384], sizes = [2, 128], strides = [1, 1]} : vector<2x512xf32> to vector<2x128xf32>
    %90 = arith.negf %89 : vector<2x128xf32>
    %91 = math.exp %90 : vector<2x128xf32>
    %cst_31 = arith.constant 1.000000e+00 : f32
    %92 = vector.broadcast %cst_31 : f32 to vector<2x128xf32>
    %93 = arith.addf %92, %91 : vector<2x128xf32>
    %94 = arith.divf %92, %93 : vector<2x128xf32>
    %95 = arith.mulf %76, %70 : vector<2x128xf32>
    %96 = arith.mulf %82, %94 : vector<2x128xf32>
    %97 = arith.addf %95, %96 : vector<2x128xf32>
    %98 = math.tanh %97 : vector<2x128xf32>
    %99 = arith.mulf %88, %98 : vector<2x128xf32>
    %100 = arith.index_cast %c1_i32 : i32 to index
    %c0_32 = arith.constant 0 : index
    %c0_33 = arith.constant 0 : index
    %101 = vector.load %arg9[%100, %c0_32, %c0_33] : memref<8x2x128xf32, #tpu.memory_space<vmem>>, vector<1x2x128xf32>
    %102 = vector.shape_cast %101 : vector<1x2x128xf32> to vector<2x128xf32>
    %103 = vector.shape_cast %88 : vector<2x128xf32> to vector<1x2x128xf32>
    tpu.vector_store %arg9[%100, %c0_32, %c0_33], %103 {strides = array<i32>} : memref<8x2x128xf32, #tpu.memory_space<vmem>>, vector<1x2x128xf32>,
    %c2_i32 = arith.constant 2 : i32
    %cst_34 = arith.constant dense<0.000000e+00> : vector<2x512xf32>
    %104 = tpu.matmul %99, %3, %cst_34 {dimension_numbers = #tpu.dot_dimension_numbers<[1], [0], [0], [1], [0, 0, 1, 1], [], []>} : vector<2x128xf32>, vector<128x512xf32>, vector<2x512xf32> -> vector<2x512xf32>
    %105 = arith.index_cast %c2_i32 : i32 to index
    %c0_35 = arith.constant 0 : index
    %c0_36 = arith.constant 0 : index
    %106 = vector.load %arg2[%105, %c0_35, %c0_36] : memref<8x2x512xf32, #tpu.memory_space<vmem>>, vector<1x2x512xf32>
    %107 = vector.shape_cast %106 : vector<1x2x512xf32> to vector<2x512xf32>
    %108 = arith.addf %104, %107 : vector<2x512xf32>
    %cst_37 = arith.constant dense<0.000000e+00> : vector<2x128xf32>
    %109 = tpu.matmul %97, %4, %cst_37 {dimension_numbers = #tpu.dot_dimension_numbers<[1], [0], [0], [1], [0, 0, 1, 1], [], []>} : vector<2x128xf32>, vector<128x128xf32>, vector<2x128xf32> -> vector<2x128xf32>
    %110 = arith.addf %109, %7 : vector<2x128xf32>
    %111 = math.tanh %110 : vector<2x128xf32>
    %112 = arith.index_cast %c2_i32 : i32 to index
    %c0_38 = arith.constant 0 : index
    %c0_39 = arith.constant 0 : index
    %113 = vector.load %arg3[%112, %c0_38, %c0_39] : memref<8x2x1xf32, #tpu.memory_space<vmem>>, vector<1x2x1xf32>
    %114 = vector.shape_cast %113 : vector<1x2x1xf32> to vector<2x1xf32>
    %115 = vector.broadcast %114 : vector<2x1xf32> to vector<2x128xf32>
    %116 = arith.mulf %111, %115 : vector<2x128xf32>
    %117 = arith.addf %97, %116 : vector<2x128xf32>
    %118 = vector.extract_strided_slice %108 {offsets = [0, 0], sizes = [2, 128], strides = [1, 1]} : vector<2x512xf32> to vector<2x128xf32>
    %119 = arith.negf %118 : vector<2x128xf32>
    %120 = math.exp %119 : vector<2x128xf32>
    %cst_40 = arith.constant 1.000000e+00 : f32
    %121 = vector.broadcast %cst_40 : f32 to vector<2x128xf32>
    %122 = arith.addf %121, %120 : vector<2x128xf32>
    %123 = arith.divf %121, %122 : vector<2x128xf32>
    %124 = vector.extract_strided_slice %108 {offsets = [0, 128], sizes = [2, 128], strides = [1, 1]} : vector<2x512xf32> to vector<2x128xf32>
    %125 = arith.negf %124 : vector<2x128xf32>
    %126 = math.exp %125 : vector<2x128xf32>
    %cst_41 = arith.constant 1.000000e+00 : f32
    %127 = vector.broadcast %cst_41 : f32 to vector<2x128xf32>
    %128 = arith.addf %127, %126 : vector<2x128xf32>
    %129 = arith.divf %127, %128 : vector<2x128xf32>
    %130 = vector.extract_strided_slice %108 {offsets = [0, 256], sizes = [2, 128], strides = [1, 1]} : vector<2x512xf32> to vector<2x128xf32>
    %131 = arith.negf %130 : vector<2x128xf32>
    %132 = math.exp %131 : vector<2x128xf32>
    %cst_42 = arith.constant 1.000000e+00 : f32
    %133 = vector.broadcast %cst_42 : f32 to vector<2x128xf32>
    %134 = arith.addf %133, %132 : vector<2x128xf32>
    %135 = arith.divf %133, %134 : vector<2x128xf32>
    %136 = vector.extract_strided_slice %108 {offsets = [0, 384], sizes = [2, 128], strides = [1, 1]} : vector<2x512xf32> to vector<2x128xf32>
    %137 = arith.negf %136 : vector<2x128xf32>
    %138 = math.exp %137 : vector<2x128xf32>
    %cst_43 = arith.constant 1.000000e+00 : f32
    %139 = vector.broadcast %cst_43 : f32 to vector<2x128xf32>
    %140 = arith.addf %139, %138 : vector<2x128xf32>
    %141 = arith.divf %139, %140 : vector<2x128xf32>
    %142 = arith.mulf %123, %117 : vector<2x128xf32>
    %143 = arith.mulf %129, %141 : vector<2x128xf32>
    %144 = arith.addf %142, %143 : vector<2x128xf32>
    %145 = math.tanh %144 : vector<2x128xf32>
    %146 = arith.mulf %135, %145 : vector<2x128xf32>
    %147 = arith.index_cast %c2_i32 : i32 to index
    %c0_44 = arith.constant 0 : index
    %c0_45 = arith.constant 0 : index
    %148 = vector.load %arg9[%147, %c0_44, %c0_45] : memref<8x2x128xf32, #tpu.memory_space<vmem>>, vector<1x2x128xf32>
    %149 = vector.shape_cast %148 : vector<1x2x128xf32> to vector<2x128xf32>
    %150 = vector.shape_cast %135 : vector<2x128xf32> to vector<1x2x128xf32>
    tpu.vector_store %arg9[%147, %c0_44, %c0_45], %150 {strides = array<i32>} : memref<8x2x128xf32, #tpu.memory_space<vmem>>, vector<1x2x128xf32>,
    %c3_i32 = arith.constant 3 : i32
    %cst_46 = arith.constant dense<0.000000e+00> : vector<2x512xf32>
    %151 = tpu.matmul %146, %3, %cst_46 {dimension_numbers = #tpu.dot_dimension_numbers<[1], [0], [0], [1], [0, 0, 1, 1], [], []>} : vector<2x128xf32>, vector<128x512xf32>, vector<2x512xf32> -> vector<2x512xf32>
    %152 = arith.index_cast %c3_i32 : i32 to index
    %c0_47 = arith.constant 0 : index
    %c0_48 = arith.constant 0 : index
    %153 = vector.load %arg2[%152, %c0_47, %c0_48] : memref<8x2x512xf32, #tpu.memory_space<vmem>>, vector<1x2x512xf32>
    %154 = vector.shape_cast %153 : vector<1x2x512xf32> to vector<2x512xf32>
    %155 = arith.addf %151, %154 : vector<2x512xf32>
    %cst_49 = arith.constant dense<0.000000e+00> : vector<2x128xf32>
    %156 = tpu.matmul %144, %4, %cst_49 {dimension_numbers = #tpu.dot_dimension_numbers<[1], [0], [0], [1], [0, 0, 1, 1], [], []>} : vector<2x128xf32>, vector<128x128xf32>, vector<2x128xf32> -> vector<2x128xf32>
    %157 = arith.addf %156, %7 : vector<2x128xf32>
    %158 = math.tanh %157 : vector<2x128xf32>
    %159 = arith.index_cast %c3_i32 : i32 to index
    %c0_50 = arith.constant 0 : index
    %c0_51 = arith.constant 0 : index
    %160 = vector.load %arg3[%159, %c0_50, %c0_51] : memref<8x2x1xf32, #tpu.memory_space<vmem>>, vector<1x2x1xf32>
    %161 = vector.shape_cast %160 : vector<1x2x1xf32> to vector<2x1xf32>
    %162 = vector.broadcast %161 : vector<2x1xf32> to vector<2x128xf32>
    %163 = arith.mulf %158, %162 : vector<2x128xf32>
    %164 = arith.addf %144, %163 : vector<2x128xf32>
    %165 = vector.extract_strided_slice %155 {offsets = [0, 0], sizes = [2, 128], strides = [1, 1]} : vector<2x512xf32> to vector<2x128xf32>
    %166 = arith.negf %165 : vector<2x128xf32>
    %167 = math.exp %166 : vector<2x128xf32>
    %cst_52 = arith.constant 1.000000e+00 : f32
    %168 = vector.broadcast %cst_52 : f32 to vector<2x128xf32>
    %169 = arith.addf %168, %167 : vector<2x128xf32>
    %170 = arith.divf %168, %169 : vector<2x128xf32>
    %171 = vector.extract_strided_slice %155 {offsets = [0, 128], sizes = [2, 128], strides = [1, 1]} : vector<2x512xf32> to vector<2x128xf32>
    %172 = arith.negf %171 : vector<2x128xf32>
    %173 = math.exp %172 : vector<2x128xf32>
    %cst_53 = arith.constant 1.000000e+00 : f32
    %174 = vector.broadcast %cst_53 : f32 to vector<2x128xf32>
    %175 = arith.addf %174, %173 : vector<2x128xf32>
    %176 = arith.divf %174, %175 : vector<2x128xf32>
    %177 = vector.extract_strided_slice %155 {offsets = [0, 256], sizes = [2, 128], strides = [1, 1]} : vector<2x512xf32> to vector<2x128xf32>
    %178 = arith.negf %177 : vector<2x128xf32>
    %179 = math.exp %178 : vector<2x128xf32>
    %cst_54 = arith.constant 1.000000e+00 : f32
    %180 = vector.broadcast %cst_54 : f32 to vector<2x128xf32>
    %181 = arith.addf %180, %179 : vector<2x128xf32>
    %182 = arith.divf %180, %181 : vector<2x128xf32>
    %183 = vector.extract_strided_slice %155 {offsets = [0, 384], sizes = [2, 128], strides = [1, 1]} : vector<2x512xf32> to vector<2x128xf32>
    %184 = arith.negf %183 : vector<2x128xf32>
    %185 = math.exp %184 : vector<2x128xf32>
    %cst_55 = arith.constant 1.000000e+00 : f32
    %186 = vector.broadcast %cst_55 : f32 to vector<2x128xf32>
    %187 = arith.addf %186, %185 : vector<2x128xf32>
    %188 = arith.divf %186, %187 : vector<2x128xf32>
    %189 = arith.mulf %170, %164 : vector<2x128xf32>
    %190 = arith.mulf %176, %188 : vector<2x128xf32>
    %191 = arith.addf %189, %190 : vector<2x128xf32>
    %192 = math.tanh %191 : vector<2x128xf32>
    %193 = arith.mulf %182, %192 : vector<2x128xf32>
    %194 = arith.index_cast %c3_i32 : i32 to index
    %c0_56 = arith.constant 0 : index
    %c0_57 = arith.constant 0 : index
    %195 = vector.load %arg9[%194, %c0_56, %c0_57] : memref<8x2x128xf32, #tpu.memory_space<vmem>>, vector<1x2x128xf32>
    %196 = vector.shape_cast %195 : vector<1x2x128xf32> to vector<2x128xf32>
    %197 = vector.shape_cast %182 : vector<2x128xf32> to vector<1x2x128xf32>
    tpu.vector_store %arg9[%194, %c0_56, %c0_57], %197 {strides = array<i32>} : memref<8x2x128xf32, #tpu.memory_space<vmem>>, vector<1x2x128xf32>,
    %c4_i32 = arith.constant 4 : i32
    %cst_58 = arith.constant dense<0.000000e+00> : vector<2x512xf32>
    %198 = tpu.matmul %193, %3, %cst_58 {dimension_numbers = #tpu.dot_dimension_numbers<[1], [0], [0], [1], [0, 0, 1, 1], [], []>} : vector<2x128xf32>, vector<128x512xf32>, vector<2x512xf32> -> vector<2x512xf32>
    %199 = arith.index_cast %c4_i32 : i32 to index
    %c0_59 = arith.constant 0 : index
    %c0_60 = arith.constant 0 : index
    %200 = vector.load %arg2[%199, %c0_59, %c0_60] : memref<8x2x512xf32, #tpu.memory_space<vmem>>, vector<1x2x512xf32>
    %201 = vector.shape_cast %200 : vector<1x2x512xf32> to vector<2x512xf32>
    %202 = arith.addf %198, %201 : vector<2x512xf32>
    %cst_61 = arith.constant dense<0.000000e+00> : vector<2x128xf32>
    %203 = tpu.matmul %191, %4, %cst_61 {dimension_numbers = #tpu.dot_dimension_numbers<[1], [0], [0], [1], [0, 0, 1, 1], [], []>} : vector<2x128xf32>, vector<128x128xf32>, vector<2x128xf32> -> vector<2x128xf32>
    %204 = arith.addf %203, %7 : vector<2x128xf32>
    %205 = math.tanh %204 : vector<2x128xf32>
    %206 = arith.index_cast %c4_i32 : i32 to index
    %c0_62 = arith.constant 0 : index
    %c0_63 = arith.constant 0 : index
    %207 = vector.load %arg3[%206, %c0_62, %c0_63] : memref<8x2x1xf32, #tpu.memory_space<vmem>>, vector<1x2x1xf32>
    %208 = vector.shape_cast %207 : vector<1x2x1xf32> to vector<2x1xf32>
    %209 = vector.broadcast %208 : vector<2x1xf32> to vector<2x128xf32>
    %210 = arith.mulf %205, %209 : vector<2x128xf32>
    %211 = arith.addf %191, %210 : vector<2x128xf32>
    %212 = vector.extract_strided_slice %202 {offsets = [0, 0], sizes = [2, 128], strides = [1, 1]} : vector<2x512xf32> to vector<2x128xf32>
    %213 = arith.negf %212 : vector<2x128xf32>
    %214 = math.exp %213 : vector<2x128xf32>
    %cst_64 = arith.constant 1.000000e+00 : f32
    %215 = vector.broadcast %cst_64 : f32 to vector<2x128xf32>
    %216 = arith.addf %215, %214 : vector<2x128xf32>
    %217 = arith.divf %215, %216 : vector<2x128xf32>
    %218 = vector.extract_strided_slice %202 {offsets = [0, 128], sizes = [2, 128], strides = [1, 1]} : vector<2x512xf32> to vector<2x128xf32>
    %219 = arith.negf %218 : vector<2x128xf32>
    %220 = math.exp %219 : vector<2x128xf32>
    %cst_65 = arith.constant 1.000000e+00 : f32
    %221 = vector.broadcast %cst_65 : f32 to vector<2x128xf32>
    %222 = arith.addf %221, %220 : vector<2x128xf32>
    %223 = arith.divf %221, %222 : vector<2x128xf32>
    %224 = vector.extract_strided_slice %202 {offsets = [0, 256], sizes = [2, 128], strides = [1, 1]} : vector<2x512xf32> to vector<2x128xf32>
    %225 = arith.negf %224 : vector<2x128xf32>
    %226 = math.exp %225 : vector<2x128xf32>
    %cst_66 = arith.constant 1.000000e+00 : f32
    %227 = vector.broadcast %cst_66 : f32 to vector<2x128xf32>
    %228 = arith.addf %227, %226 : vector<2x128xf32>
    %229 = arith.divf %227, %228 : vector<2x128xf32>
    %230 = vector.extract_strided_slice %202 {offsets = [0, 384], sizes = [2, 128], strides = [1, 1]} : vector<2x512xf32> to vector<2x128xf32>
    %231 = arith.negf %230 : vector<2x128xf32>
    %232 = math.exp %231 : vector<2x128xf32>
    %cst_67 = arith.constant 1.000000e+00 : f32
    %233 = vector.broadcast %cst_67 : f32 to vector<2x128xf32>
    %234 = arith.addf %233, %232 : vector<2x128xf32>
    %235 = arith.divf %233, %234 : vector<2x128xf32>
    %236 = arith.mulf %217, %211 : vector<2x128xf32>
    %237 = arith.mulf %223, %235 : vector<2x128xf32>
    %238 = arith.addf %236, %237 : vector<2x128xf32>
    %239 = math.tanh %238 : vector<2x128xf32>
    %240 = arith.mulf %229, %239 : vector<2x128xf32>
    %241 = arith.index_cast %c4_i32 : i32 to index
    %c0_68 = arith.constant 0 : index
    %c0_69 = arith.constant 0 : index
    %242 = vector.load %arg9[%241, %c0_68, %c0_69] : memref<8x2x128xf32, #tpu.memory_space<vmem>>, vector<1x2x128xf32>
    %243 = vector.shape_cast %242 : vector<1x2x128xf32> to vector<2x128xf32>
    %244 = vector.shape_cast %229 : vector<2x128xf32> to vector<1x2x128xf32>
    tpu.vector_store %arg9[%241, %c0_68, %c0_69], %244 {strides = array<i32>} : memref<8x2x128xf32, #tpu.memory_space<vmem>>, vector<1x2x128xf32>,
    %c5_i32 = arith.constant 5 : i32
    %cst_70 = arith.constant dense<0.000000e+00> : vector<2x512xf32>
    %245 = tpu.matmul %240, %3, %cst_70 {dimension_numbers = #tpu.dot_dimension_numbers<[1], [0], [0], [1], [0, 0, 1, 1], [], []>} : vector<2x128xf32>, vector<128x512xf32>, vector<2x512xf32> -> vector<2x512xf32>
    %246 = arith.index_cast %c5_i32 : i32 to index
    %c0_71 = arith.constant 0 : index
    %c0_72 = arith.constant 0 : index
    %247 = vector.load %arg2[%246, %c0_71, %c0_72] : memref<8x2x512xf32, #tpu.memory_space<vmem>>, vector<1x2x512xf32>
    %248 = vector.shape_cast %247 : vector<1x2x512xf32> to vector<2x512xf32>
    %249 = arith.addf %245, %248 : vector<2x512xf32>
    %cst_73 = arith.constant dense<0.000000e+00> : vector<2x128xf32>
    %250 = tpu.matmul %238, %4, %cst_73 {dimension_numbers = #tpu.dot_dimension_numbers<[1], [0], [0], [1], [0, 0, 1, 1], [], []>} : vector<2x128xf32>, vector<128x128xf32>, vector<2x128xf32> -> vector<2x128xf32>
    %251 = arith.addf %250, %7 : vector<2x128xf32>
    %252 = math.tanh %251 : vector<2x128xf32>
    %253 = arith.index_cast %c5_i32 : i32 to index
    %c0_74 = arith.constant 0 : index
    %c0_75 = arith.constant 0 : index
    %254 = vector.load %arg3[%253, %c0_74, %c0_75] : memref<8x2x1xf32, #tpu.memory_space<vmem>>, vector<1x2x1xf32>
    %255 = vector.shape_cast %254 : vector<1x2x1xf32> to vector<2x1xf32>
    %256 = vector.broadcast %255 : vector<2x1xf32> to vector<2x128xf32>
    %257 = arith.mulf %252, %256 : vector<2x128xf32>
    %258 = arith.addf %238, %257 : vector<2x128xf32>
    %259 = vector.extract_strided_slice %249 {offsets = [0, 0], sizes = [2, 128], strides = [1, 1]} : vector<2x512xf32> to vector<2x128xf32>
    %260 = arith.negf %259 : vector<2x128xf32>
    %261 = math.exp %260 : vector<2x128xf32>
    %cst_76 = arith.constant 1.000000e+00 : f32
    %262 = vector.broadcast %cst_76 : f32 to vector<2x128xf32>
    %263 = arith.addf %262, %261 : vector<2x128xf32>
    %264 = arith.divf %262, %263 : vector<2x128xf32>
    %265 = vector.extract_strided_slice %249 {offsets = [0, 128], sizes = [2, 128], strides = [1, 1]} : vector<2x512xf32> to vector<2x128xf32>
    %266 = arith.negf %265 : vector<2x128xf32>
    %267 = math.exp %266 : vector<2x128xf32>
    %cst_77 = arith.constant 1.000000e+00 : f32
    %268 = vector.broadcast %cst_77 : f32 to vector<2x128xf32>
    %269 = arith.addf %268, %267 : vector<2x128xf32>
    %270 = arith.divf %268, %269 : vector<2x128xf32>
    %271 = vector.extract_strided_slice %249 {offsets = [0, 256], sizes = [2, 128], strides = [1, 1]} : vector<2x512xf32> to vector<2x128xf32>
    %272 = arith.negf %271 : vector<2x128xf32>
    %273 = math.exp %272 : vector<2x128xf32>
    %cst_78 = arith.constant 1.000000e+00 : f32
    %274 = vector.broadcast %cst_78 : f32 to vector<2x128xf32>
    %275 = arith.addf %274, %273 : vector<2x128xf32>
    %276 = arith.divf %274, %275 : vector<2x128xf32>
    %277 = vector.extract_strided_slice %249 {offsets = [0, 384], sizes = [2, 128], strides = [1, 1]} : vector<2x512xf32> to vector<2x128xf32>
    %278 = arith.negf %277 : vector<2x128xf32>
    %279 = math.exp %278 : vector<2x128xf32>
    %cst_79 = arith.constant 1.000000e+00 : f32
    %280 = vector.broadcast %cst_79 : f32 to vector<2x128xf32>
    %281 = arith.addf %280, %279 : vector<2x128xf32>
    %282 = arith.divf %280, %281 : vector<2x128xf32>
    %283 = arith.mulf %264, %258 : vector<2x128xf32>
    %284 = arith.mulf %270, %282 : vector<2x128xf32>
    %285 = arith.addf %283, %284 : vector<2x128xf32>
    %286 = math.tanh %285 : vector<2x128xf32>
    %287 = arith.mulf %276, %286 : vector<2x128xf32>
    %288 = arith.index_cast %c5_i32 : i32 to index
    %c0_80 = arith.constant 0 : index
    %c0_81 = arith.constant 0 : index
    %289 = vector.load %arg9[%288, %c0_80, %c0_81] : memref<8x2x128xf32, #tpu.memory_space<vmem>>, vector<1x2x128xf32>
    %290 = vector.shape_cast %289 : vector<1x2x128xf32> to vector<2x128xf32>
    %291 = vector.shape_cast %276 : vector<2x128xf32> to vector<1x2x128xf32>
    tpu.vector_store %arg9[%288, %c0_80, %c0_81], %291 {strides = array<i32>} : memref<8x2x128xf32, #tpu.memory_space<vmem>>, vector<1x2x128xf32>,
    %c6_i32 = arith.constant 6 : i32
    %cst_82 = arith.constant dense<0.000000e+00> : vector<2x512xf32>
    %292 = tpu.matmul %287, %3, %cst_82 {dimension_numbers = #tpu.dot_dimension_numbers<[1], [0], [0], [1], [0, 0, 1, 1], [], []>} : vector<2x128xf32>, vector<128x512xf32>, vector<2x512xf32> -> vector<2x512xf32>
    %293 = arith.index_cast %c6_i32 : i32 to index
    %c0_83 = arith.constant 0 : index
    %c0_84 = arith.constant 0 : index
    %294 = vector.load %arg2[%293, %c0_83, %c0_84] : memref<8x2x512xf32, #tpu.memory_space<vmem>>, vector<1x2x512xf32>
    %295 = vector.shape_cast %294 : vector<1x2x512xf32> to vector<2x512xf32>
    %296 = arith.addf %292, %295 : vector<2x512xf32>
    %cst_85 = arith.constant dense<0.000000e+00> : vector<2x128xf32>
    %297 = tpu.matmul %285, %4, %cst_85 {dimension_numbers = #tpu.dot_dimension_numbers<[1], [0], [0], [1], [0, 0, 1, 1], [], []>} : vector<2x128xf32>, vector<128x128xf32>, vector<2x128xf32> -> vector<2x128xf32>
    %298 = arith.addf %297, %7 : vector<2x128xf32>
    %299 = math.tanh %298 : vector<2x128xf32>
    %300 = arith.index_cast %c6_i32 : i32 to index
    %c0_86 = arith.constant 0 : index
    %c0_87 = arith.constant 0 : index
    %301 = vector.load %arg3[%300, %c0_86, %c0_87] : memref<8x2x1xf32, #tpu.memory_space<vmem>>, vector<1x2x1xf32>
    %302 = vector.shape_cast %301 : vector<1x2x1xf32> to vector<2x1xf32>
    %303 = vector.broadcast %302 : vector<2x1xf32> to vector<2x128xf32>
    %304 = arith.mulf %299, %303 : vector<2x128xf32>
    %305 = arith.addf %285, %304 : vector<2x128xf32>
    %306 = vector.extract_strided_slice %296 {offsets = [0, 0], sizes = [2, 128], strides = [1, 1]} : vector<2x512xf32> to vector<2x128xf32>
    %307 = arith.negf %306 : vector<2x128xf32>
    %308 = math.exp %307 : vector<2x128xf32>
    %cst_88 = arith.constant 1.000000e+00 : f32
    %309 = vector.broadcast %cst_88 : f32 to vector<2x128xf32>
    %310 = arith.addf %309, %308 : vector<2x128xf32>
    %311 = arith.divf %309, %310 : vector<2x128xf32>
    %312 = vector.extract_strided_slice %296 {offsets = [0, 128], sizes = [2, 128], strides = [1, 1]} : vector<2x512xf32> to vector<2x128xf32>
    %313 = arith.negf %312 : vector<2x128xf32>
    %314 = math.exp %313 : vector<2x128xf32>
    %cst_89 = arith.constant 1.000000e+00 : f32
    %315 = vector.broadcast %cst_89 : f32 to vector<2x128xf32>
    %316 = arith.addf %315, %314 : vector<2x128xf32>
    %317 = arith.divf %315, %316 : vector<2x128xf32>
    %318 = vector.extract_strided_slice %296 {offsets = [0, 256], sizes = [2, 128], strides = [1, 1]} : vector<2x512xf32> to vector<2x128xf32>
    %319 = arith.negf %318 : vector<2x128xf32>
    %320 = math.exp %319 : vector<2x128xf32>
    %cst_90 = arith.constant 1.000000e+00 : f32
    %321 = vector.broadcast %cst_90 : f32 to vector<2x128xf32>
    %322 = arith.addf %321, %320 : vector<2x128xf32>
    %323 = arith.divf %321, %322 : vector<2x128xf32>
    %324 = vector.extract_strided_slice %296 {offsets = [0, 384], sizes = [2, 128], strides = [1, 1]} : vector<2x512xf32> to vector<2x128xf32>
    %325 = arith.negf %324 : vector<2x128xf32>
    %326 = math.exp %325 : vector<2x128xf32>
    %cst_91 = arith.constant 1.000000e+00 : f32
    %327 = vector.broadcast %cst_91 : f32 to vector<2x128xf32>
    %328 = arith.addf %327, %326 : vector<2x128xf32>
    %329 = arith.divf %327, %328 : vector<2x128xf32>
    %330 = arith.mulf %311, %305 : vector<2x128xf32>
    %331 = arith.mulf %317, %329 : vector<2x128xf32>
    %332 = arith.addf %330, %331 : vector<2x128xf32>
    %333 = math.tanh %332 : vector<2x128xf32>
    %334 = arith.mulf %323, %333 : vector<2x128xf32>
    %335 = arith.index_cast %c6_i32 : i32 to index
    %c0_92 = arith.constant 0 : index
    %c0_93 = arith.constant 0 : index
    %336 = vector.load %arg9[%335, %c0_92, %c0_93] : memref<8x2x128xf32, #tpu.memory_space<vmem>>, vector<1x2x128xf32>
    %337 = vector.shape_cast %336 : vector<1x2x128xf32> to vector<2x128xf32>
    %338 = vector.shape_cast %323 : vector<2x128xf32> to vector<1x2x128xf32>
    tpu.vector_store %arg9[%335, %c0_92, %c0_93], %338 {strides = array<i32>} : memref<8x2x128xf32, #tpu.memory_space<vmem>>, vector<1x2x128xf32>,
    %c7_i32 = arith.constant 7 : i32
    %cst_94 = arith.constant dense<0.000000e+00> : vector<2x512xf32>
    %339 = tpu.matmul %334, %3, %cst_94 {dimension_numbers = #tpu.dot_dimension_numbers<[1], [0], [0], [1], [0, 0, 1, 1], [], []>} : vector<2x128xf32>, vector<128x512xf32>, vector<2x512xf32> -> vector<2x512xf32>
    %340 = arith.index_cast %c7_i32 : i32 to index
    %c0_95 = arith.constant 0 : index
    %c0_96 = arith.constant 0 : index
    %341 = vector.load %arg2[%340, %c0_95, %c0_96] : memref<8x2x512xf32, #tpu.memory_space<vmem>>, vector<1x2x512xf32>
    %342 = vector.shape_cast %341 : vector<1x2x512xf32> to vector<2x512xf32>
    %343 = arith.addf %339, %342 : vector<2x512xf32>
    %cst_97 = arith.constant dense<0.000000e+00> : vector<2x128xf32>
    %344 = tpu.matmul %332, %4, %cst_97 {dimension_numbers = #tpu.dot_dimension_numbers<[1], [0], [0], [1], [0, 0, 1, 1], [], []>} : vector<2x128xf32>, vector<128x128xf32>, vector<2x128xf32> -> vector<2x128xf32>
    %345 = arith.addf %344, %7 : vector<2x128xf32>
    %346 = math.tanh %345 : vector<2x128xf32>
    %347 = arith.index_cast %c7_i32 : i32 to index
    %c0_98 = arith.constant 0 : index
    %c0_99 = arith.constant 0 : index
    %348 = vector.load %arg3[%347, %c0_98, %c0_99] : memref<8x2x1xf32, #tpu.memory_space<vmem>>, vector<1x2x1xf32>
    %349 = vector.shape_cast %348 : vector<1x2x1xf32> to vector<2x1xf32>
    %350 = vector.broadcast %349 : vector<2x1xf32> to vector<2x128xf32>
    %351 = arith.mulf %346, %350 : vector<2x128xf32>
    %352 = arith.addf %332, %351 : vector<2x128xf32>
    %353 = vector.extract_strided_slice %343 {offsets = [0, 0], sizes = [2, 128], strides = [1, 1]} : vector<2x512xf32> to vector<2x128xf32>
    %354 = arith.negf %353 : vector<2x128xf32>
    %355 = math.exp %354 : vector<2x128xf32>
    %cst_100 = arith.constant 1.000000e+00 : f32
    %356 = vector.broadcast %cst_100 : f32 to vector<2x128xf32>
    %357 = arith.addf %356, %355 : vector<2x128xf32>
    %358 = arith.divf %356, %357 : vector<2x128xf32>
    %359 = vector.extract_strided_slice %343 {offsets = [0, 128], sizes = [2, 128], strides = [1, 1]} : vector<2x512xf32> to vector<2x128xf32>
    %360 = arith.negf %359 : vector<2x128xf32>
    %361 = math.exp %360 : vector<2x128xf32>
    %cst_101 = arith.constant 1.000000e+00 : f32
    %362 = vector.broadcast %cst_101 : f32 to vector<2x128xf32>
    %363 = arith.addf %362, %361 : vector<2x128xf32>
    %364 = arith.divf %362, %363 : vector<2x128xf32>
    %365 = vector.extract_strided_slice %343 {offsets = [0, 256], sizes = [2, 128], strides = [1, 1]} : vector<2x512xf32> to vector<2x128xf32>
    %366 = arith.negf %365 : vector<2x128xf32>
    %367 = math.exp %366 : vector<2x128xf32>
    %cst_102 = arith.constant 1.000000e+00 : f32
    %368 = vector.broadcast %cst_102 : f32 to vector<2x128xf32>
    %369 = arith.addf %368, %367 : vector<2x128xf32>
    %370 = arith.divf %368, %369 : vector<2x128xf32>
    %371 = vector.extract_strided_slice %343 {offsets = [0, 384], sizes = [2, 128], strides = [1, 1]} : vector<2x512xf32> to vector<2x128xf32>
    %372 = arith.negf %371 : vector<2x128xf32>
    %373 = math.exp %372 : vector<2x128xf32>
    %cst_103 = arith.constant 1.000000e+00 : f32
    %374 = vector.broadcast %cst_103 : f32 to vector<2x128xf32>
    %375 = arith.addf %374, %373 : vector<2x128xf32>
    %376 = arith.divf %374, %375 : vector<2x128xf32>
    %377 = arith.mulf %358, %352 : vector<2x128xf32>
    %378 = arith.mulf %364, %376 : vector<2x128xf32>
    %379 = arith.addf %377, %378 : vector<2x128xf32>
    %380 = math.tanh %379 : vector<2x128xf32>
    %381 = arith.mulf %370, %380 : vector<2x128xf32>
    %382 = arith.index_cast %c7_i32 : i32 to index
    %c0_104 = arith.constant 0 : index
    %c0_105 = arith.constant 0 : index
    %383 = vector.load %arg9[%382, %c0_104, %c0_105] : memref<8x2x128xf32, #tpu.memory_space<vmem>>, vector<1x2x128xf32>
    %384 = vector.shape_cast %383 : vector<1x2x128xf32> to vector<2x128xf32>
    %385 = vector.shape_cast %370 : vector<2x128xf32> to vector<1x2x128xf32>
    tpu.vector_store %arg9[%382, %c0_104, %c0_105], %385 {strides = array<i32>} : memref<8x2x128xf32, #tpu.memory_space<vmem>>, vector<1x2x128xf32>,
    %c8_i32 = arith.constant 8 : i32
    %c0_106 = arith.constant 0 : index
    %c0_107 = arith.constant 0 : index
    %386 = vector.load %arg12[%c0_106, %c0_107] : memref<2x128xf32, #tpu.memory_space<vmem>>, vector<2x128xf32>
    tpu.vector_store %arg12[%c0_106, %c0_107], %381 {strides = array<i32>} : memref<2x128xf32, #tpu.memory_space<vmem>>, vector<2x128xf32>,
    %c0_108 = arith.constant 0 : index
    %c0_109 = arith.constant 0 : index
    %387 = vector.load %arg13[%c0_108, %c0_109] : memref<2x128xf32, #tpu.memory_space<vmem>>, vector<2x128xf32>
    tpu.vector_store %arg13[%c0_108, %c0_109], %379 {strides = array<i32>} : memref<2x128xf32, #tpu.memory_space<vmem>>, vector<2x128xf32>,
    %c0_i32_110 = arith.constant 0 : i32
    %388 = arith.cmpi eq, %arg1, %c0_i32_110 : i32
    %389 = arith.extui %388 : i1 to i32
    %c0_i32_111 = arith.constant 0 : i32
    %390 = arith.cmpi ne, %389, %c0_i32_111 : i32
    scf.if %390 {
      %c0_112 = arith.constant 0 : index
      %c0_113 = arith.constant 0 : index
      %391 = vector.load %arg10[%c0_112, %c0_113] : memref<2x128xf32, #tpu.memory_space<vmem>>, vector<2x128xf32>
      tpu.vector_store %arg10[%c0_112, %c0_113], %381 {strides = array<i32>} : memref<2x128xf32, #tpu.memory_space<vmem>>, vector<2x128xf32>,
      %c0_114 = arith.constant 0 : index
      %c0_115 = arith.constant 0 : index
      %392 = vector.load %arg11[%c0_114, %c0_115] : memref<2x128xf32, #tpu.memory_space<vmem>>, vector<2x128xf32>
      tpu.vector_store %arg11[%c0_114, %c0_115], %379 {strides = array<i32>} : memref<2x128xf32, #tpu.memory_space<vmem>>, vector<2x128xf32>,
    } else {
    }
    return
  }
  func.func @transform_0(%arg0: i32, %arg1: i32) -> (i32, i32, i32) {
    %c0_i32 = arith.constant 0 : i32
    %c0_i32_0 = arith.constant 0 : i32
    return %arg1, %arg0, %c0_i32 : i32, i32, i32
  }
  func.func @transform_1(%arg0: i32, %arg1: i32) -> (i32, i32, i32) {
    %c0_i32 = arith.constant 0 : i32
    %c0_i32_0 = arith.constant 0 : i32
    return %arg1, %arg0, %c0_i32 : i32, i32, i32
  }
  func.func @transform_2(%arg0: i32, %arg1: i32) -> (i32, i32) {
    %c0_i32 = arith.constant 0 : i32
    %c0_i32_0 = arith.constant 0 : i32
    return %arg0, %c0_i32 : i32, i32
  }
  func.func @transform_3(%arg0: i32, %arg1: i32) -> (i32, i32) {
    %c0_i32 = arith.constant 0 : i32
    %c0_i32_0 = arith.constant 0 : i32
    return %arg0, %c0_i32 : i32, i32
  }
  func.func @transform_4(%arg0: i32, %arg1: i32) -> (i32, i32) {
    %c0_i32 = arith.constant 0 : i32
    %c0_i32_0 = arith.constant 0 : i32
    %c0_i32_1 = arith.constant 0 : i32
    return %c0_i32, %c0_i32_0 : i32, i32
  }
  func.func @transform_5(%arg0: i32, %arg1: i32) -> (i32, i32) {
    %c0_i32 = arith.constant 0 : i32
    %c0_i32_0 = arith.constant 0 : i32
    %c0_i32_1 = arith.constant 0 : i32
    return %c0_i32, %c0_i32_0 : i32, i32
  }
  func.func @transform_6(%arg0: i32, %arg1: i32) -> (i32, i32) {
    %c0_i32 = arith.constant 0 : i32
    %c0_i32_0 = arith.constant 0 : i32
    %c0_i32_1 = arith.constant 0 : i32
    return %c0_i32, %c0_i32_0 : i32, i32
  }
  func.func @transform_7(%arg0: i32, %arg1: i32) -> (i32, i32, i32) {
    %c0_i32 = arith.constant 0 : i32
    %c0_i32_0 = arith.constant 0 : i32
    return %arg1, %arg0, %c0_i32 : i32, i32, i32
  }
  func.func @transform_8(%arg0: i32, %arg1: i32) -> (i32, i32) {
    %c0_i32 = arith.constant 0 : i32
    %c0_i32_0 = arith.constant 0 : i32
    return %arg0, %c0_i32 : i32, i32
  }
  func.func @transform_9(%arg0: i32, %arg1: i32) -> (i32, i32) {
    %c0_i32 = arith.constant 0 : i32
    %c0_i32_0 = arith.constant 0 : i32
    return %arg0, %c0_i32 : i32, i32
  }
}

</mosaic_0001>

<llo_original>
// kernel: tpu_custom_call.1
$region0: #{tpu_custom_call.1}
  #allocation0 [shape = 'u32[]', space=smem, size = 0x4, offset = 0x4, fixed_abs, tag = 'smem constant byte address 0x4 - core index']
  #allocation1 [shape = 'u32[144,128]{1,0:T(1,128)}', space=vmem, size = 0x12000, scoped, tag = 'internal scratch']
  #allocation2 [shape = 'f32[2,128]{1,0:T(2,128)}', space=vmem, size = 0x400, scoped, tag = 'scratch operand']
  #allocation3 [shape = 'f32[2,128]{1,0:T(2,128)}', space=vmem, size = 0x400, scoped, tag = 'scratch operand']
  %s0 = inlined_call_operand.hbm [shape: f32[8,2,512], index: 0, kind: input, shape index: {}]
  %s1 = inlined_call_operand.vmem [shape: f32[8,2,1], index: 1, kind: input, shape index: {}]
  %s2 = inlined_call_operand.vmem [shape: f32[2,128], index: 2, kind: input, shape index: {}]
  %s3 = inlined_call_operand.vmem [shape: f32[2,128], index: 3, kind: input, shape index: {}]
  %s4 = inlined_call_operand.hbm [shape: f32[128,512], index: 4, kind: input, shape index: {}]
  %s5 = inlined_call_operand.hbm [shape: f32[128,128], index: 5, kind: input, shape index: {}]
  %s6 = inlined_call_operand.vmem [shape: f32[1,128], index: 6, kind: input, shape index: {}]
  %s7 = inlined_call_operand.hbm [shape: f32[8,2,128], index: 7, kind: output, shape index: {0}]
  %s8 = inlined_call_operand.hbm [shape: f32[2,128], index: 8, kind: output, shape index: {1}]
  %s9 = inlined_call_operand.hbm [shape: f32[2,128], index: 9, kind: output, shape index: {2}]
  %10 = xla_tuple %s7, %s8, %s9
  %s11 = sld [smem:[#allocation0]]
  $region74: #{tpu_custom_call.1} parent=0
    _
  %s13 = ssub.s32 1, %s11
  %s14 = scalar_select 0, %s13, %s11
  $region1: #{tpu_custom_call.1} parent=0
    #allocation4 [shape = 'u8[32768]{0}', space=vmem, size = 0x8000, scoped, tag = 'input window, operand 0, single buffered']
    #allocation5 [shape = 's32[1]{0}', space=sflag, size = 0x4, scoped, tag = 'scoped memory for tpu_custom_call.1']
    #allocation6 [shape = 's32[1]{0}', space=sflag, size = 0x4, scoped, tag = 'scoped memory for tpu_custom_call.1']
    #allocation7 [shape = 'u8[262144]{0}', space=vmem, size = 0x40000, scoped, tag = 'input window, operand 4, single buffered']
    #allocation8 [shape = 's32[1]{0}', space=sflag, size = 0x4, scoped, tag = 'scoped memory for tpu_custom_call.1']
    #allocation9 [shape = 'u8[65536]{0}', space=vmem, size = 0x10000, scoped, tag = 'input window, operand 5, single buffered']
    #allocation10 [shape = 'u8[8192]{0}', space=vmem, size = 0x2000, scoped, tag = 'output window, operand 0, single buffered']
    #allocation11 [shape = 'u8[1024]{0}', space=vmem, size = 0x400, scoped, tag = 'output window, operand 1, single buffered']
    #allocation12 [shape = 's32[1]{0}', space=sflag, size = 0x4, scoped, tag = 'scoped memory for tpu_custom_call.1']
    #allocation13 [shape = 'u8[1024]{0}', space=vmem, size = 0x400, scoped, tag = 'output window, operand 2, single buffered']
    %15 = vsyncpa [#allocation5], 0
    %16 = vsyncpa [#allocation8], 0
    %17 = vsyncpa [#allocation6], 0
    %18 = vsyncpa [#allocation12], 0
    // Predicated region
    $region2: #{tpu_custom_call.1} parent=1 // pred_check
      _
    $region3: #{tpu_custom_call.1} parent=1 // pred_check_branch
      %20 = sbr.rel (0) target = $region5
    $region4: #{tpu_custom_call.1} parent=1 // pred_region
      %s22 = ssub.s32 1024, 1024
      %23 = vsyncadd [#allocation5], %s22
      %s24 = sshll.u32 [#allocation4], 4
      %s25 = int_to_ptr.vmem [resolvable:$true] %s24
      %30 = dma.hbm_to_vmem [thread:$0]  %s0, 1024, %s25, [#allocation5], 128, 128, 8
    $region5: #{tpu_custom_call.1} parent=1 // pred_fallthru
      _
    // Predicated region
    $region6: #{tpu_custom_call.1} parent=1 // pred_check
      _
    $region7: #{tpu_custom_call.1} parent=1 // pred_check_branch
      %32 = sbr.rel (0) target = $region9
    $region8: #{tpu_custom_call.1} parent=1 // pred_region
      _
    $region9: #{tpu_custom_call.1} parent=1 // pred_fallthru
      _
    // Predicated region
    $region10: #{tpu_custom_call.1} parent=1 // pred_check
      _
    $region11: #{tpu_custom_call.1} parent=1 // pred_check_branch
      %34 = sbr.rel (0) target = $region13
    $region12: #{tpu_custom_call.1} parent=1 // pred_region
      _
    $region13: #{tpu_custom_call.1} parent=1 // pred_fallthru
      _
    // Predicated region
    $region14: #{tpu_custom_call.1} parent=1 // pred_check
      _
    $region15: #{tpu_custom_call.1} parent=1 // pred_check_branch
      %36 = sbr.rel (0) target = $region17
    $region16: #{tpu_custom_call.1} parent=1 // pred_region
      _
    $region17: #{tpu_custom_call.1} parent=1 // pred_fallthru
      _
    // Predicated region
    $region18: #{tpu_custom_call.1} parent=1 // pred_check
      _
    $region19: #{tpu_custom_call.1} parent=1 // pred_check_branch
      %38 = sbr.rel (0) target = $region21
    $region20: #{tpu_custom_call.1} parent=1 // pred_region
      %s40 = ssub.s32 8192, 8192
      %41 = vsyncadd [#allocation8], %s40
      %s42 = sshll.u32 [#allocation7], 4
      %s43 = int_to_ptr.vmem [resolvable:$true] %s42
      %48 = dma.hbm_to_vmem [thread:$0]  %s4, 8192, %s43, [#allocation8], 512, 512, 32
    $region21: #{tpu_custom_call.1} parent=1 // pred_fallthru
      _
    // Predicated region
    $region22: #{tpu_custom_call.1} parent=1 // pred_check
      _
    $region23: #{tpu_custom_call.1} parent=1 // pred_check_branch
      %50 = sbr.rel (0) target = $region25
    $region24: #{tpu_custom_call.1} parent=1 // pred_region
      %s52 = ssub.s32 2048, 2048
      %53 = vsyncadd [#allocation8], %s52
      %s54 = sshll.u32 [#allocation9], 4
      %s55 = int_to_ptr.vmem [resolvable:$true] %s54
      %60 = dma.hbm_to_vmem [thread:$0]  %s5, 2048, %s55, [#allocation8], 128, 128, 8
    $region25: #{tpu_custom_call.1} parent=1 // pred_fallthru
      _
    // Predicated region
    $region26: #{tpu_custom_call.1} parent=1 // pred_check
      _
    $region27: #{tpu_custom_call.1} parent=1 // pred_check_branch
      %62 = sbr.rel (0) target = $region29
    $region28: #{tpu_custom_call.1} parent=1 // pred_region
      _
    $region29: #{tpu_custom_call.1} parent=1 // pred_fallthru
      _
    // Predicated region
    $region30: #{tpu_custom_call.1} parent=1 // pred_check
      _
    $region31: #{tpu_custom_call.1} parent=1 // pred_check_branch
      %64 = sbr.rel (0) target = $region33
    $region32: #{tpu_custom_call.1} parent=1 // pred_region
      %65 = dma.done [#allocation5], 1024
    $region33: #{tpu_custom_call.1} parent=1 // pred_fallthru
      _
    // Predicated region
    $region34: #{tpu_custom_call.1} parent=1 // pred_check
      _
    $region35: #{tpu_custom_call.1} parent=1 // pred_check_branch
      %67 = sbr.rel (0) target = $region37
    $region36: #{tpu_custom_call.1} parent=1 // pred_region
      %68 = dma.done [#allocation8], 8192
    $region37: #{tpu_custom_call.1} parent=1 // pred_fallthru
      _
    // Predicated region
    $region38: #{tpu_custom_call.1} parent=1 // pred_check
      _
    $region39: #{tpu_custom_call.1} parent=1 // pred_check_branch
      %70 = sbr.rel (0) target = $region41
    $region40: #{tpu_custom_call.1} parent=1 // pred_region
      %71 = dma.done [#allocation8], 2048
    $region41: #{tpu_custom_call.1} parent=1 // pred_fallthru
      _
    %p72 = scmp.eq.s32.totalorder 0, 0
    // Predicated region
    $region42: #{tpu_custom_call.1} parent=1 // pred_check
      %p73 = pneg %p72
    $region43: #{tpu_custom_call.1} parent=1 // pred_check_branch
      %75 = sbr.rel (%p73) target = $region45
    $region44: #{tpu_custom_call.1} parent=1 // pred_region
      %v76 = vld [vmem:[%s2] sm:$0x3]
      %77 = vst [vmem:[#allocation2] sm:$0x3] %v76
      %v78 = vld [vmem:[%s3] sm:$0x3]
      %79 = vst [vmem:[#allocation3] sm:$0x3] %v78
    $region45: #{tpu_custom_call.1} parent=1 // pred_fallthru
      _
    %v80 = vld [vmem:[#allocation7] sm:$0xff]
    %v81 = vld [vmem:[#allocation7 + $0x8] sm:$0xff]
    %v82 = vld [vmem:[#allocation7 + $0x10] sm:$0xff]
    %v83 = vld [vmem:[#allocation7 + $0x18] sm:$0xff]
    %v84 = vld [vmem:[#allocation7 + $0x20] sm:$0xff]
    %v85 = vld [vmem:[#allocation7 + $0x28] sm:$0xff]
    %v86 = vld [vmem:[#allocation7 + $0x30] sm:$0xff]
    %v87 = vld [vmem:[#allocation7 + $0x38] sm:$0xff]
    %v88 = vld [vmem:[#allocation7 + $0x40] sm:$0xff]
    %v89 = vld [vmem:[#allocation7 + $0x48] sm:$0xff]
    %v90 = vld [vmem:[#allocation7 + $0x50] sm:$0xff]
    %v91 = vld [vmem:[#allocation7 + $0x58] sm:$0xff]
    %v92 = vld [vmem:[#allocation7 + $0x60] sm:$0xff]
    %v93 = vld [vmem:[#allocation7 + $0x68] sm:$0xff]
    %v94 = vld [vmem:[#allocation7 + $0x70] sm:$0xff]
    %v95 = vld [vmem:[#allocation7 + $0x78] sm:$0xff]
    %v96 = vld [vmem:[#allocation7 + $0x80] sm:$0xff]
    %v97 = vld [vmem:[#allocation7 + $0x88] sm:$0xff]
    %v98 = vld [vmem:[#allocation7 + $0x90] sm:$0xff]
    %v99 = vld [vmem:[#allocation7 + $0x98] sm:$0xff]
    %v100 = vld [vmem:[#allocation7 + $0xa0] sm:$0xff]
    %v101 = vld [vmem:[#allocation7 + $0xa8] sm:$0xff]
    %v102 = vld [vmem:[#allocation7 + $0xb0] sm:$0xff]
    %v103 = vld [vmem:[#allocation7 + $0xb8] sm:$0xff]
    %v104 = vld [vmem:[#allocation7 + $0xc0] sm:$0xff]
    %v105 = vld [vmem:[#allocation7 + $0xc8] sm:$0xff]
    %v106 = vld [vmem:[#allocation7 + $0xd0] sm:$0xff]
    %v107 = vld [vmem:[#allocation7 + $0xd8] sm:$0xff]
    %v108 = vld [vmem:[#allocation7 + $0xe0] sm:$0xff]
    %v109 = vld [vmem:[#allocation7 + $0xe8] sm:$0xff]
    %v110 = vld [vmem:[#allocation7 + $0xf0] sm:$0xff]
    %v111 = vld [vmem:[#allocation7 + $0xf8] sm:$0xff]
    %v112 = vld [vmem:[#allocation7 + $0x100] sm:$0xff]
    %v113 = vld [vmem:[#allocation7 + $0x108] sm:$0xff]
    %v114 = vld [vmem:[#allocation7 + $0x110] sm:$0xff]
    %v115 = vld [vmem:[#allocation7 + $0x118] sm:$0xff]
    %v116 = vld [vmem:[#allocation7 + $0x120] sm:$0xff]
    %v117 = vld [vmem:[#allocation7 + $0x128] sm:$0xff]
    %v118 = vld [vmem:[#allocation7 + $0x130] sm:$0xff]
    %v119 = vld [vmem:[#allocation7 + $0x138] sm:$0xff]
    %v120 = vld [vmem:[#allocation7 + $0x140] sm:$0xff]
    %v121 = vld [vmem:[#allocation7 + $0x148] sm:$0xff]
    %v122 = vld [vmem:[#allocation7 + $0x150] sm:$0xff]
    %v123 = vld [vmem:[#allocation7 + $0x158] sm:$0xff]
    %v124 = vld [vmem:[#allocation7 + $0x160] sm:$0xff]
    %v125 = vld [vmem:[#allocation7 + $0x168] sm:$0xff]
    %v126 = vld [vmem:[#allocation7 + $0x170] sm:$0xff]
    %v127 = vld [vmem:[#allocation7 + $0x178] sm:$0xff]
    %v128 = vld [vmem:[#allocation7 + $0x180] sm:$0xff]
    %v129 = vld [vmem:[#allocation7 + $0x188] sm:$0xff]
    %v130 = vld [vmem:[#allocation7 + $0x190] sm:$0xff]
    %v131 = vld [vmem:[#allocation7 + $0x198] sm:$0xff]
    %v132 = vld [vmem:[#allocation7 + $0x1a0] sm:$0xff]
    %v133 = vld [vmem:[#allocation7 + $0x1a8] sm:$0xff]
    %v134 = vld [vmem:[#allocation7 + $0x1b0] sm:$0xff]
    %v135 = vld [vmem:[#allocation7 + $0x1b8] sm:$0xff]
    %v136 = vld [vmem:[#allocation7 + $0x1c0] sm:$0xff]
    %v137 = vld [vmem:[#allocation7 + $0x1c8] sm:$0xff]
    %v138 = vld [vmem:[#allocation7 + $0x1d0] sm:$0xff]
    %v139 = vld [vmem:[#allocation7 + $0x1d8] sm:$0xff]
    %v140 = vld [vmem:[#allocation7 + $0x1e0] sm:$0xff]
    %v141 = vld [vmem:[#allocation7 + $0x1e8] sm:$0xff]
    %v142 = vld [vmem:[#allocation7 + $0x1f0] sm:$0xff]
    %v143 = vld [vmem:[#allocation7 + $0x1f8] sm:$0xff]
    %v144 = vld [vmem:[#allocation9] sm:$0xff]
    %v145 = vld [vmem:[#allocation9 + $0x8] sm:$0xff]
    %v146 = vld [vmem:[#allocation9 + $0x10] sm:$0xff]
    %v147 = vld [vmem:[#allocation9 + $0x18] sm:$0xff]
    %v148 = vld [vmem:[#allocation9 + $0x20] sm:$0xff]
    %v149 = vld [vmem:[#allocation9 + $0x28] sm:$0xff]
    %v150 = vld [vmem:[#allocation9 + $0x30] sm:$0xff]
    %v151 = vld [vmem:[#allocation9 + $0x38] sm:$0xff]
    %v152 = vld [vmem:[#allocation9 + $0x40] sm:$0xff]
    %v153 = vld [vmem:[#allocation9 + $0x48] sm:$0xff]
    %v154 = vld [vmem:[#allocation9 + $0x50] sm:$0xff]
    %v155 = vld [vmem:[#allocation9 + $0x58] sm:$0xff]
    %v156 = vld [vmem:[#allocation9 + $0x60] sm:$0xff]
    %v157 = vld [vmem:[#allocation9 + $0x68] sm:$0xff]
    %v158 = vld [vmem:[#allocation9 + $0x70] sm:$0xff]
    %v159 = vld [vmem:[#allocation9 + $0x78] sm:$0xff]
    %v160 = vld [vmem:[%s6] sm:$0x1]
    %v162 = vlaneseq
    %v163 = vshrl.u32 %v162, 7
    %v164 = vsub.s32 0, %v163
    %v165 = vrot.slane %v160, %v164
    %v167 = vld [vmem:[#allocation2] sm:$0x3]
    %v168 = vld [vmem:[#allocation3] sm:$0x3]
    %v169 = vld [vmem:[#allocation4] sm:$0xff]
    %v171 = vcombine.high %v169, %v169
    %v173 = vunpack.c.l.s4 1983009808
    %v174 = vunpack.c.0.s8 %v173
    %v175 = vlaneseq
    %v176 = vshrl.u32 %v175, 7
    %v177 = vsub.s32 %v174, %v176
    %v178 = vrot.slane %v169, %v177
    %v180 = vunpack.c.l.s4 1983009808
    %v181 = vunpack.c.0.s8 %v180
    %v182 = vlaneseq
    %v183 = vshrl.u32 %v182, 7
    %v184 = vsub.s32 %v181, %v183
    %v185 = vrot.slane %v171, %v184
    %v186 = vcombine.high %v178, %v178
    %v187 = vcombine.high %v185, %v185
    %192 = vmatprep.subr.mxu0 %v141
    %193 = vmatpush1.msra.mxu0 %v140
    %194 = vmatprep.subr.mxu0 %v137
    %195 = vmatpush1.msra.mxu0 %v136
    %196 = vmatprep.subr.mxu0 %v133
    %197 = vmatpush1.msra.mxu0 %v132
    %198 = vmatprep.subr.mxu0 %v129
    %199 = vmatpush1.msra.mxu0 %v128
    %200 = vmatprep.subr.mxu0 %v125
    %201 = vmatpush1.msra.mxu0 %v124
    %202 = vmatprep.subr.mxu0 %v121
    %203 = vmatpush1.msra.mxu0 %v120
    %204 = vmatprep.subr.mxu0 %v117
    %205 = vmatpush1.msra.mxu0 %v116
    %206 = vmatprep.subr.mxu0 %v113
    %207 = vmatpush1.msra.mxu0 %v112
    %208 = vmatprep.subr.mxu0 %v109
    %209 = vmatpush1.msra.mxu0 %v108
    %210 = vmatprep.subr.mxu0 %v105
    %211 = vmatpush1.msra.mxu0 %v104
    %212 = vmatprep.subr.mxu0 %v101
    %213 = vmatpush1.msra.mxu0 %v100
    %214 = vmatprep.subr.mxu0 %v97
    %215 = vmatpush1.msra.mxu0 %v96
    %216 = vmatprep.subr.mxu0 %v93
    %217 = vmatpush1.msra.mxu0 %v92
    %218 = vmatprep.subr.mxu0 %v89
    %219 = vmatpush1.msra.mxu0 %v88
    %220 = vmatprep.subr.mxu0 %v85
    %221 = vmatpush1.msra.mxu0 %v84
    %222 = vmatprep.subr.mxu0 %v81
    %223 = vmatpush1.msra.mxu0 %v80
    %224 = vmatprep.subr.mxu0 0.0
    %225 = vmatpush2.msra.mxu0 0.0
    %226 = vmatprep.subr.mxu0 0.0
    %227 = vmatpush2.msra.mxu0 0.0
    %228 = vmatprep.subr.mxu0 0.0
    %229 = vmatpush2.msra.mxu0 0.0
    %230 = vmatprep.subr.mxu0 0.0
    %231 = vmatpush2.msra.mxu0 0.0
    %232 = vmatprep.subr.mxu0 0.0
    %233 = vmatpush2.msra.mxu0 0.0
    %234 = vmatprep.subr.mxu0 0.0
    %235 = vmatpush2.msra.mxu0 0.0
    %236 = vmatprep.subr.mxu0 0.0
    %237 = vmatpush2.msra.mxu0 0.0
    %238 = vmatprep.subr.mxu0 0.0
    %239 = vmatpush2.msra.mxu0 0.0
    %240 = vmatprep.subr.mxu0 0.0
    %241 = vmatpush2.msra.mxu0 0.0
    %242 = vmatprep.subr.mxu0 0.0
    %243 = vmatpush2.msra.mxu0 0.0
    %244 = vmatprep.subr.mxu0 0.0
    %245 = vmatpush2.msra.mxu0 0.0
    %246 = vmatprep.subr.mxu0 0.0
    %247 = vmatpush2.msra.mxu0 0.0
    %248 = vmatprep.subr.mxu0 0.0
    %249 = vmatpush2.msra.mxu0 0.0
    %250 = vmatprep.subr.mxu0 0.0
    %251 = vmatpush2.msra.mxu0 0.0
    %252 = vmatprep.subr.mxu0 0.0
    %253 = vmatpush2.msra.mxu0 0.0
    %254 = vmatprep.subr.mxu0 0.0
    %255 = vmatpush2.msra.mxu0 0.0
    %256 = vmatprep.mubr.f32.mxu0 0.0
    %257 = vmatmul.mubr.f32.gmra.mxu0 %v167
    %v258 = vpop.f32.mrf.mxu0
    %v259 = vadd.f32 %v178, %v258
    %v260 = vpop.f32.mrf.mxu0
    %v261 = vadd.f32 %v186, %v260
    %262 = vdwg.mxu0
    %263 = vmatprep.subr.mxu0 %v143
    %264 = vmatpush1.msra.mxu0 %v142
    %265 = vmatprep.subr.mxu0 %v139
    %266 = vmatpush1.msra.mxu0 %v138
    %267 = vmatprep.subr.mxu0 %v135
    %268 = vmatpush1.msra.mxu0 %v134
    %269 = vmatprep.subr.mxu0 %v131
    %270 = vmatpush1.msra.mxu0 %v130
    %271 = vmatprep.subr.mxu0 %v127
    %272 = vmatpush1.msra.mxu0 %v126
    %273 = vmatprep.subr.mxu0 %v123
    %274 = vmatpush1.msra.mxu0 %v122
    %275 = vmatprep.subr.mxu0 %v119
    %276 = vmatpush1.msra.mxu0 %v118
    %277 = vmatprep.subr.mxu0 %v115
    %278 = vmatpush1.msra.mxu0 %v114
    %279 = vmatprep.subr.mxu0 %v111
    %280 = vmatpush1.msra.mxu0 %v110
    %281 = vmatprep.subr.mxu0 %v107
    %282 = vmatpush1.msra.mxu0 %v106
    %283 = vmatprep.subr.mxu0 %v103
    %284 = vmatpush1.msra.mxu0 %v102
    %285 = vmatprep.subr.mxu0 %v99
    %286 = vmatpush1.msra.mxu0 %v98
    %287 = vmatprep.subr.mxu0 %v95
    %288 = vmatpush1.msra.mxu0 %v94
    %289 = vmatprep.subr.mxu0 %v91
    %290 = vmatpush1.msra.mxu0 %v90
    %291 = vmatprep.subr.mxu0 %v87
    %292 = vmatpush1.msra.mxu0 %v86
    %293 = vmatprep.subr.mxu0 %v83
    %294 = vmatpush1.msra.mxu0 %v82
    %295 = vmatprep.subr.mxu0 0.0
    %296 = vmatpush2.msra.mxu0 0.0
    %297 = vmatprep.subr.mxu0 0.0
    %298 = vmatpush2.msra.mxu0 0.0
    %299 = vmatprep.subr.mxu0 0.0
    %300 = vmatpush2.msra.mxu0 0.0
    %301 = vmatprep.subr.mxu0 0.0
    %302 = vmatpush2.msra.mxu0 0.0
    %303 = vmatprep.subr.mxu0 0.0
    %304 = vmatpush2.msra.mxu0 0.0
    %305 = vmatprep.subr.mxu0 0.0
    %306 = vmatpush2.msra.mxu0 0.0
    %307 = vmatprep.subr.mxu0 0.0
    %308 = vmatpush2.msra.mxu0 0.0
    %309 = vmatprep.subr.mxu0 0.0
    %310 = vmatpush2.msra.mxu0 0.0
    %311 = vmatprep.subr.mxu0 0.0
    %312 = vmatpush2.msra.mxu0 0.0
    %313 = vmatprep.subr.mxu0 0.0
    %314 = vmatpush2.msra.mxu0 0.0
    %315 = vmatprep.subr.mxu0 0.0
    %316 = vmatpush2.msra.mxu0 0.0
    %317 = vmatprep.subr.mxu0 0.0
    %318 = vmatpush2.msra.mxu0 0.0
    %319 = vmatprep.subr.mxu0 0.0
    %320 = vmatpush2.msra.mxu0 0.0
    %321 = vmatprep.subr.mxu0 0.0
    %322 = vmatpush2.msra.mxu0 0.0
    %323 = vmatprep.subr.mxu0 0.0
    %324 = vmatpush2.msra.mxu0 0.0
    %325 = vmatprep.subr.mxu0 0.0
    %326 = vmatpush2.msra.mxu0 0.0
    %327 = vmatprep.mubr.f32.mxu0 0.0
    %328 = vmatmul.mubr.f32.gmra.mxu0 %v167
    %v329 = vpop.f32.mrf.mxu0
    %v330 = vadd.f32 %v185, %v329
    %v331 = vpop.f32.mrf.mxu0
    %v332 = vadd.f32 %v187, %v331
    %333 = vdwg.mxu0
    %334 = vmatprep.subr.mxu0 0.0
    %335 = vmatpush1.msra.mxu0 %v159
    %336 = vmatprep.subr.mxu0 0.0
    %337 = vmatpush1.msra.mxu0 %v158
    %338 = vmatprep.subr.mxu0 0.0
    %339 = vmatpush1.msra.mxu0 %v157
    %340 = vmatprep.subr.mxu0 0.0
    %341 = vmatpush1.msra.mxu0 %v156
    %342 = vmatprep.subr.mxu0 0.0
    %343 = vmatpush1.msra.mxu0 %v155
    %344 = vmatprep.subr.mxu0 0.0
    %345 = vmatpush1.msra.mxu0 %v154
    %346 = vmatprep.subr.mxu0 0.0
    %347 = vmatpush1.msra.mxu0 %v153
    %348 = vmatprep.subr.mxu0 0.0
    %349 = vmatpush1.msra.mxu0 %v152
    %350 = vmatprep.subr.mxu0 0.0
    %351 = vmatpush1.msra.mxu0 %v151
    %352 = vmatprep.subr.mxu0 0.0
    %353 = vmatpush1.msra.mxu0 %v150
    %354 = vmatprep.subr.mxu0 0.0
    %355 = vmatpush1.msra.mxu0 %v149
    %356 = vmatprep.subr.mxu0 0.0
    %357 = vmatpush1.msra.mxu0 %v148
    %358 = vmatprep.subr.mxu0 0.0
    %359 = vmatpush1.msra.mxu0 %v147
    %360 = vmatprep.subr.mxu0 0.0
    %361 = vmatpush1.msra.mxu0 %v146
    %362 = vmatprep.subr.mxu0 0.0
    %363 = vmatpush1.msra.mxu0 %v145
    %364 = vmatprep.subr.mxu0 0.0
    %365 = vmatpush1.msra.mxu0 %v144
    %366 = vmatprep.subr.mxu0 0.0
    %367 = vmatpush2.msra.mxu0 0.0
    %368 = vmatprep.subr.mxu0 0.0
    %369 = vmatpush2.msra.mxu0 0.0
    %370 = vmatprep.subr.mxu0 0.0
    %371 = vmatpush2.msra.mxu0 0.0
    %372 = vmatprep.subr.mxu0 0.0
    %373 = vmatpush2.msra.mxu0 0.0
    %374 = vmatprep.subr.mxu0 0.0
    %375 = vmatpush2.msra.mxu0 0.0
    %376 = vmatprep.subr.mxu0 0.0
    %377 = vmatpush2.msra.mxu0 0.0
    %378 = vmatprep.subr.mxu0 0.0
    %379 = vmatpush2.msra.mxu0 0.0
    %380 = vmatprep.subr.mxu0 0.0
    %381 = vmatpush2.msra.mxu0 0.0
    %382 = vmatprep.subr.mxu0 0.0
    %383 = vmatpush2.msra.mxu0 0.0
    %384 = vmatprep.subr.mxu0 0.0
    %385 = vmatpush2.msra.mxu0 0.0
    %386 = vmatprep.subr.mxu0 0.0
    %387 = vmatpush2.msra.mxu0 0.0
    %388 = vmatprep.subr.mxu0 0.0
    %389 = vmatpush2.msra.mxu0 0.0
    %390 = vmatprep.subr.mxu0 0.0
    %391 = vmatpush2.msra.mxu0 0.0
    %392 = vmatprep.subr.mxu0 0.0
    %393 = vmatpush2.msra.mxu0 0.0
    %394 = vmatprep.subr.mxu0 0.0
    %395 = vmatpush2.msra.mxu0 0.0
    %396 = vmatprep.subr.mxu0 0.0
    %397 = vmatpush2.msra.mxu0 0.0
    %398 = vmatprep.mubr.f32.mxu0 0.0
    %399 = vmatmul.mubr.f32.gmra.mxu0 %v168
    %v400 = vpop.f32.mrf.mxu0
    %v401 = vadd.f32 %v165, %v400
    %v402 = vpop.f32.mrf.mxu0
    %403 = vdwg.mxu0
    %v404 = vtanh.pop %v401
    %v405 = vld [vmem:[%s1] sm:$0x3]
    %407 = vset.pattern.permute.xlu0 0
    %408 = vperm.xlu0 %407, %v405
    %v409 = vpop.permute.xlu0 %408
    %v411 = vmul.f32 %v404, %v409
    %v412 = vadd.f32 %v168, %v411
    %v413 = vxor.u32 %v259, 2147483648
    %v414 = vmul.f32 %v413, 1.442695
    %v415 = vpow.pop %v414
    %v416 = vadd.f32 %v415, 1.0
    %v417 = vrcp.pop %v416
    %v418 = vmul.f32 1.0, %v417
    %v419 = vxor.u32 %v261, 2147483648
    %v420 = vmul.f32 %v419, 1.442695
    %v421 = vpow.pop %v420
    %v422 = vadd.f32 %v421, 1.0
    %v423 = vrcp.pop %v422
    %v424 = vmul.f32 1.0, %v423
    %v425 = vxor.u32 %v330, 2147483648
    %v426 = vmul.f32 %v425, 1.442695
    %v427 = vpow.pop %v426
    %v428 = vadd.f32 %v427, 1.0
    %v429 = vrcp.pop %v428
    %v430 = vmul.f32 1.0, %v429
    %v431 = vxor.u32 %v332, 2147483648
    %v432 = vmul.f32 %v431, 1.442695
    %v433 = vpow.pop %v432
    %v434 = vadd.f32 %v433, 1.0
    %v435 = vrcp.pop %v434
    %v436 = vmul.f32 1.0, %v435
    %v437 = vmul.f32 %v418, %v412
    %v438 = vmul.f32 %v424, %v436
    %v439 = vadd.f32 %v437, %v438
    %v440 = vtanh.pop %v439
    %v441 = vmul.f32 %v430, %v440
    %442 = vst [vmem:[#allocation10] sm:$0x3] %v430
    %s443 = scalar_lea.vmem [#allocation4], 8
    %v444 = vld [vmem:[%s443] sm:$0xff]
    %v446 = vcombine.high %v444, %v444
    %v448 = vunpack.c.l.s4 1983009808
    %v449 = vunpack.c.0.s8 %v448
    %v450 = vlaneseq
    %v451 = vshrl.u32 %v450, 7
    %v452 = vsub.s32 %v449, %v451
    %v453 = vrot.slane %v444, %v452
    %v455 = vunpack.c.l.s4 1983009808
    %v456 = vunpack.c.0.s8 %v455
    %v457 = vlaneseq
    %v458 = vshrl.u32 %v457, 7
    %v459 = vsub.s32 %v456, %v458
    %v460 = vrot.slane %v446, %v459
    %v461 = vcombine.high %v453, %v453
    %v462 = vcombine.high %v460, %v460
    %467 = vmatprep.subr.mxu0 %v141
    %468 = vmatpush1.msra.mxu0 %v140
    %469 = vmatprep.subr.mxu0 %v137
    %470 = vmatpush1.msra.mxu0 %v136
    %471 = vmatprep.subr.mxu0 %v133
    %472 = vmatpush1.msra.mxu0 %v132
    %473 = vmatprep.subr.mxu0 %v129
    %474 = vmatpush1.msra.mxu0 %v128
    %475 = vmatprep.subr.mxu0 %v125
    %476 = vmatpush1.msra.mxu0 %v124
    %477 = vmatprep.subr.mxu0 %v121
    %478 = vmatpush1.msra.mxu0 %v120
    %479 = vmatprep.subr.mxu0 %v117
    %480 = vmatpush1.msra.mxu0 %v116
    %481 = vmatprep.subr.mxu0 %v113
    %482 = vmatpush1.msra.mxu0 %v112
    %483 = vmatprep.subr.mxu0 %v109
    %484 = vmatpush1.msra.mxu0 %v108
    %485 = vmatprep.subr.mxu0 %v105
    %486 = vmatpush1.msra.mxu0 %v104
    %487 = vmatprep.subr.mxu0 %v101
    %488 = vmatpush1.msra.mxu0 %v100
    %489 = vmatprep.subr.mxu0 %v97
    %490 = vmatpush1.msra.mxu0 %v96
    %491 = vmatprep.subr.mxu0 %v93
    %492 = vmatpush1.msra.mxu0 %v92
    %493 = vmatprep.subr.mxu0 %v89
    %494 = vmatpush1.msra.mxu0 %v88
    %495 = vmatprep.subr.mxu0 %v85
    %496 = vmatpush1.msra.mxu0 %v84
    %497 = vmatprep.subr.mxu0 %v81
    %498 = vmatpush1.msra.mxu0 %v80
    %499 = vmatprep.subr.mxu0 0.0
    %500 = vmatpush2.msra.mxu0 0.0
    %501 = vmatprep.subr.mxu0 0.0
    %502 = vmatpush2.msra.mxu0 0.0
    %503 = vmatprep.subr.mxu0 0.0
    %504 = vmatpush2.msra.mxu0 0.0
    %505 = vmatprep.subr.mxu0 0.0
    %506 = vmatpush2.msra.mxu0 0.0
    %507 = vmatprep.subr.mxu0 0.0
    %508 = vmatpush2.msra.mxu0 0.0
    %509 = vmatprep.subr.mxu0 0.0
    %510 = vmatpush2.msra.mxu0 0.0
    %511 = vmatprep.subr.mxu0 0.0
    %512 = vmatpush2.msra.mxu0 0.0
    %513 = vmatprep.subr.mxu0 0.0
    %514 = vmatpush2.msra.mxu0 0.0
    %515 = vmatprep.subr.mxu0 0.0
    %516 = vmatpush2.msra.mxu0 0.0
    %517 = vmatprep.subr.mxu0 0.0
    %518 = vmatpush2.msra.mxu0 0.0
    %519 = vmatprep.subr.mxu0 0.0
    %520 = vmatpush2.msra.mxu0 0.0
    %521 = vmatprep.subr.mxu0 0.0
    %522 = vmatpush2.msra.mxu0 0.0
    %523 = vmatprep.subr.mxu0 0.0
    %524 = vmatpush2.msra.mxu0 0.0
    %525 = vmatprep.subr.mxu0 0.0
    %526 = vmatpush2.msra.mxu0 0.0
    %527 = vmatprep.subr.mxu0 0.0
    %528 = vmatpush2.msra.mxu0 0.0
    %529 = vmatprep.subr.mxu0 0.0
    %530 = vmatpush2.msra.mxu0 0.0
    %531 = vmatprep.mubr.f32.mxu0 0.0
    %532 = vmatmul.mubr.f32.gmra.mxu0 %v441
    %v533 = vpop.f32.mrf.mxu0
    %v534 = vadd.f32 %v453, %v533
    %v535 = vpop.f32.mrf.mxu0
    %v536 = vadd.f32 %v461, %v535
    %537 = vdwg.mxu0
    %538 = vmatprep.subr.mxu0 %v143
    %539 = vmatpush1.msra.mxu0 %v142
    %540 = vmatprep.subr.mxu0 %v139
    %541 = vmatpush1.msra.mxu0 %v138
    %542 = vmatprep.subr.mxu0 %v135
    %543 = vmatpush1.msra.mxu0 %v134
    %544 = vmatprep.subr.mxu0 %v131
    %545 = vmatpush1.msra.mxu0 %v130
    %546 = vmatprep.subr.mxu0 %v127
    %547 = vmatpush1.msra.mxu0 %v126
    %548 = vmatprep.subr.mxu0 %v123
    %549 = vmatpush1.msra.mxu0 %v122
    %550 = vmatprep.subr.mxu0 %v119
    %551 = vmatpush1.msra.mxu0 %v118
    %552 = vmatprep.subr.mxu0 %v115
    %553 = vmatpush1.msra.mxu0 %v114
    %554 = vmatprep.subr.mxu0 %v111
    %555 = vmatpush1.msra.mxu0 %v110
    %556 = vmatprep.subr.mxu0 %v107
    %557 = vmatpush1.msra.mxu0 %v106
    %558 = vmatprep.subr.mxu0 %v103
    %559 = vmatpush1.msra.mxu0 %v102
    %560 = vmatprep.subr.mxu0 %v99
    %561 = vmatpush1.msra.mxu0 %v98
    %562 = vmatprep.subr.mxu0 %v95
    %563 = vmatpush1.msra.mxu0 %v94
    %564 = vmatprep.subr.mxu0 %v91
    %565 = vmatpush1.msra.mxu0 %v90
    %566 = vmatprep.subr.mxu0 %v87
    %567 = vmatpush1.msra.mxu0 %v86
    %568 = vmatprep.subr.mxu0 %v83
    %569 = vmatpush1.msra.mxu0 %v82
    %570 = vmatprep.subr.mxu0 0.0
    %571 = vmatpush2.msra.mxu0 0.0
    %572 = vmatprep.subr.mxu0 0.0
    %573 = vmatpush2.msra.mxu0 0.0
    %574 = vmatprep.subr.mxu0 0.0
    %575 = vmatpush2.msra.mxu0 0.0
    %576 = vmatprep.subr.mxu0 0.0
    %577 = vmatpush2.msra.mxu0 0.0
    %578 = vmatprep.subr.mxu0 0.0
    %579 = vmatpush2.msra.mxu0 0.0
    %580 = vmatprep.subr.mxu0 0.0
    %581 = vmatpush2.msra.mxu0 0.0
    %582 = vmatprep.subr.mxu0 0.0
    %583 = vmatpush2.msra.mxu0 0.0
    %584 = vmatprep.subr.mxu0 0.0
    %585 = vmatpush2.msra.mxu0 0.0
    %586 = vmatprep.subr.mxu0 0.0
    %587 = vmatpush2.msra.mxu0 0.0
    %588 = vmatprep.subr.mxu0 0.0
    %589 = vmatpush2.msra.mxu0 0.0
    %590 = vmatprep.subr.mxu0 0.0
    %591 = vmatpush2.msra.mxu0 0.0
    %592 = vmatprep.subr.mxu0 0.0
    %593 = vmatpush2.msra.mxu0 0.0
    %594 = vmatprep.subr.mxu0 0.0
    %595 = vmatpush2.msra.mxu0 0.0
    %596 = vmatprep.subr.mxu0 0.0
    %597 = vmatpush2.msra.mxu0 0.0
    %598 = vmatprep.subr.mxu0 0.0
    %599 = vmatpush2.msra.mxu0 0.0
    %600 = vmatprep.subr.mxu0 0.0
    %601 = vmatpush2.msra.mxu0 0.0
    %602 = vmatprep.mubr.f32.mxu0 0.0
    %603 = vmatmul.mubr.f32.gmra.mxu0 %v441
    %v604 = vpop.f32.mrf.mxu0
    %v605 = vadd.f32 %v460, %v604
    %v606 = vpop.f32.mrf.mxu0
    %v607 = vadd.f32 %v462, %v606
    %608 = vdwg.mxu0
    %609 = vmatprep.subr.mxu0 0.0
    %610 = vmatpush1.msra.mxu0 %v159
    %611 = vmatprep.subr.mxu0 0.0
    %612 = vmatpush1.msra.mxu0 %v158
    %613 = vmatprep.subr.mxu0 0.0
    %614 = vmatpush1.msra.mxu0 %v157
    %615 = vmatprep.subr.mxu0 0.0
    %616 = vmatpush1.msra.mxu0 %v156
    %617 = vmatprep.subr.mxu0 0.0
    %618 = vmatpush1.msra.mxu0 %v155
    %619 = vmatprep.subr.mxu0 0.0
    %620 = vmatpush1.msra.mxu0 %v154
    %621 = vmatprep.subr.mxu0 0.0
    %622 = vmatpush1.msra.mxu0 %v153
    %623 = vmatprep.subr.mxu0 0.0
    %624 = vmatpush1.msra.mxu0 %v152
    %625 = vmatprep.subr.mxu0 0.0
    %626 = vmatpush1.msra.mxu0 %v151
    %627 = vmatprep.subr.mxu0 0.0
    %628 = vmatpush1.msra.mxu0 %v150
    %629 = vmatprep.subr.mxu0 0.0
    %630 = vmatpush1.msra.mxu0 %v149
    %631 = vmatprep.subr.mxu0 0.0
    %632 = vmatpush1.msra.mxu0 %v148
    %633 = vmatprep.subr.mxu0 0.0
    %634 = vmatpush1.msra.mxu0 %v147
    %635 = vmatprep.subr.mxu0 0.0
    %636 = vmatpush1.msra.mxu0 %v146
    %637 = vmatprep.subr.mxu0 0.0
    %638 = vmatpush1.msra.mxu0 %v145
    %639 = vmatprep.subr.mxu0 0.0
    %640 = vmatpush1.msra.mxu0 %v144
    %641 = vmatprep.subr.mxu0 0.0
    %642 = vmatpush2.msra.mxu0 0.0
    %643 = vmatprep.subr.mxu0 0.0
    %644 = vmatpush2.msra.mxu0 0.0
    %645 = vmatprep.subr.mxu0 0.0
    %646 = vmatpush2.msra.mxu0 0.0
    %647 = vmatprep.subr.mxu0 0.0
    %648 = vmatpush2.msra.mxu0 0.0
    %649 = vmatprep.subr.mxu0 0.0
    %650 = vmatpush2.msra.mxu0 0.0
    %651 = vmatprep.subr.mxu0 0.0
    %652 = vmatpush2.msra.mxu0 0.0
    %653 = vmatprep.subr.mxu0 0.0
    %654 = vmatpush2.msra.mxu0 0.0
    %655 = vmatprep.subr.mxu0 0.0
    %656 = vmatpush2.msra.mxu0 0.0
    %657 = vmatprep.subr.mxu0 0.0
    %658 = vmatpush2.msra.mxu0 0.0
    %659 = vmatprep.subr.mxu0 0.0
    %660 = vmatpush2.msra.mxu0 0.0
    %661 = vmatprep.subr.mxu0 0.0
    %662 = vmatpush2.msra.mxu0 0.0
    %663 = vmatprep.subr.mxu0 0.0
    %664 = vmatpush2.msra.mxu0 0.0
    %665 = vmatprep.subr.mxu0 0.0
    %666 = vmatpush2.msra.mxu0 0.0
    %667 = vmatprep.subr.mxu0 0.0
    %668 = vmatpush2.msra.mxu0 0.0
    %669 = vmatprep.subr.mxu0 0.0
    %670 = vmatpush2.msra.mxu0 0.0
    %671 = vmatprep.subr.mxu0 0.0
    %672 = vmatpush2.msra.mxu0 0.0
    %673 = vmatprep.mubr.f32.mxu0 0.0
    %674 = vmatmul.mubr.f32.gmra.mxu0 %v439
    %v675 = vpop.f32.mrf.mxu0
    %v676 = vadd.f32 %v165, %v675
    %v677 = vpop.f32.mrf.mxu0
    %678 = vdwg.mxu0
    %v679 = vtanh.pop %v676
    %s680 = scalar_lea.vmem %s1, 2
    %v681 = vld [vmem:[%s680] sm:$0x3]
    %683 = vset.pattern.permute.xlu0 0
    %684 = vperm.xlu0 %683, %v681
    %v685 = vpop.permute.xlu0 %684
    %v687 = vmul.f32 %v679, %v685
    %v688 = vadd.f32 %v439, %v687
    %v689 = vxor.u32 %v534, 2147483648
    %v690 = vmul.f32 %v689, 1.442695
    %v691 = vpow.pop %v690
    %v692 = vadd.f32 %v691, 1.0
    %v693 = vrcp.pop %v692
    %v694 = vmul.f32 1.0, %v693
    %v695 = vxor.u32 %v536, 2147483648
    %v696 = vmul.f32 %v695, 1.442695
    %v697 = vpow.pop %v696
    %v698 = vadd.f32 %v697, 1.0
    %v699 = vrcp.pop %v698
    %v700 = vmul.f32 1.0, %v699
    %v701 = vxor.u32 %v605, 2147483648
    %v702 = vmul.f32 %v701, 1.442695
    %v703 = vpow.pop %v702
    %v704 = vadd.f32 %v703, 1.0
    %v705 = vrcp.pop %v704
    %v706 = vmul.f32 1.0, %v705
    %v707 = vxor.u32 %v607, 2147483648
    %v708 = vmul.f32 %v707, 1.442695
    %v709 = vpow.pop %v708
    %v710 = vadd.f32 %v709, 1.0
    %v711 = vrcp.pop %v710
    %v712 = vmul.f32 1.0, %v711
    %v713 = vmul.f32 %v694, %v688
    %v714 = vmul.f32 %v700, %v712
    %v715 = vadd.f32 %v713, %v714
    %v716 = vtanh.pop %v715
    %v717 = vmul.f32 %v706, %v716
    %s718 = scalar_lea.vmem [#allocation10], 2
    %719 = vst [vmem:[%s718] sm:$0x3] %v706
    %s720 = scalar_lea.vmem [#allocation4], 16
    %v721 = vld [vmem:[%s720] sm:$0xff]
    %v723 = vcombine.high %v721, %v721
    %v725 = vunpack.c.l.s4 1983009808
    %v726 = vunpack.c.0.s8 %v725
    %v727 = vlaneseq
    %v728 = vshrl.u32 %v727, 7
    %v729 = vsub.s32 %v726, %v728
    %v730 = vrot.slane %v721, %v729
    %v732 = vunpack.c.l.s4 1983009808
    %v733 = vunpack.c.0.s8 %v732
    %v734 = vlaneseq
    %v735 = vshrl.u32 %v734, 7
    %v736 = vsub.s32 %v733, %v735
    %v737 = vrot.slane %v723, %v736
    %v738 = vcombine.high %v730, %v730
    %v739 = vcombine.high %v737, %v737
    %744 = vmatprep.subr.mxu0 %v141
    %745 = vmatpush1.msra.mxu0 %v140
    %746 = vmatprep.subr.mxu0 %v137
    %747 = vmatpush1.msra.mxu0 %v136
    %748 = vmatprep.subr.mxu0 %v133
    %749 = vmatpush1.msra.mxu0 %v132
    %750 = vmatprep.subr.mxu0 %v129
    %751 = vmatpush1.msra.mxu0 %v128
    %752 = vmatprep.subr.mxu0 %v125
    %753 = vmatpush1.msra.mxu0 %v124
    %754 = vmatprep.subr.mxu0 %v121
    %755 = vmatpush1.msra.mxu0 %v120
    %756 = vmatprep.subr.mxu0 %v117
    %757 = vmatpush1.msra.mxu0 %v116
    %758 = vmatprep.subr.mxu0 %v113
    %759 = vmatpush1.msra.mxu0 %v112
    %760 = vmatprep.subr.mxu0 %v109
    %761 = vmatpush1.msra.mxu0 %v108
    %762 = vmatprep.subr.mxu0 %v105
    %763 = vmatpush1.msra.mxu0 %v104
    %764 = vmatprep.subr.mxu0 %v101
    %765 = vmatpush1.msra.mxu0 %v100
    %766 = vmatprep.subr.mxu0 %v97
    %767 = vmatpush1.msra.mxu0 %v96
    %768 = vmatprep.subr.mxu0 %v93
    %769 = vmatpush1.msra.mxu0 %v92
    %770 = vmatprep.subr.mxu0 %v89
    %771 = vmatpush1.msra.mxu0 %v88
    %772 = vmatprep.subr.mxu0 %v85
    %773 = vmatpush1.msra.mxu0 %v84
    %774 = vmatprep.subr.mxu0 %v81
    %775 = vmatpush1.msra.mxu0 %v80
    %776 = vmatprep.subr.mxu0 0.0
    %777 = vmatpush2.msra.mxu0 0.0
    %778 = vmatprep.subr.mxu0 0.0
    %779 = vmatpush2.msra.mxu0 0.0
    %780 = vmatprep.subr.mxu0 0.0
    %781 = vmatpush2.msra.mxu0 0.0
    %782 = vmatprep.subr.mxu0 0.0
    %783 = vmatpush2.msra.mxu0 0.0
    %784 = vmatprep.subr.mxu0 0.0
    %785 = vmatpush2.msra.mxu0 0.0
    %786 = vmatprep.subr.mxu0 0.0
    %787 = vmatpush2.msra.mxu0 0.0
    %788 = vmatprep.subr.mxu0 0.0
    %789 = vmatpush2.msra.mxu0 0.0
    %790 = vmatprep.subr.mxu0 0.0
    %791 = vmatpush2.msra.mxu0 0.0
    %792 = vmatprep.subr.mxu0 0.0
    %793 = vmatpush2.msra.mxu0 0.0
    %794 = vmatprep.subr.mxu0 0.0
    %795 = vmatpush2.msra.mxu0 0.0
    %796 = vmatprep.subr.mxu0 0.0
    %797 = vmatpush2.msra.mxu0 0.0
    %798 = vmatprep.subr.mxu0 0.0
    %799 = vmatpush2.msra.mxu0 0.0
    %800 = vmatprep.subr.mxu0 0.0
    %801 = vmatpush2.msra.mxu0 0.0
    %802 = vmatprep.subr.mxu0 0.0
    %803 = vmatpush2.msra.mxu0 0.0
    %804 = vmatprep.subr.mxu0 0.0
    %805 = vmatpush2.msra.mxu0 0.0
    %806 = vmatprep.subr.mxu0 0.0
    %807 = vmatpush2.msra.mxu0 0.0
    %808 = vmatprep.mubr.f32.mxu0 0.0
    %809 = vmatmul.mubr.f32.gmra.mxu0 %v717
    %v810 = vpop.f32.mrf.mxu0
    %v811 = vadd.f32 %v730, %v810
    %v812 = vpop.f32.mrf.mxu0
    %v813 = vadd.f32 %v738, %v812
    %814 = vdwg.mxu0
    %815 = vmatprep.subr.mxu0 %v143
    %816 = vmatpush1.msra.mxu0 %v142
    %817 = vmatprep.subr.mxu0 %v139
    %818 = vmatpush1.msra.mxu0 %v138
    %819 = vmatprep.subr.mxu0 %v135
    %820 = vmatpush1.msra.mxu0 %v134
    %821 = vmatprep.subr.mxu0 %v131
    %822 = vmatpush1.msra.mxu0 %v130
    %823 = vmatprep.subr.mxu0 %v127
    %824 = vmatpush1.msra.mxu0 %v126
    %825 = vmatprep.subr.mxu0 %v123
    %826 = vmatpush1.msra.mxu0 %v122
    %827 = vmatprep.subr.mxu0 %v119
    %828 = vmatpush1.msra.mxu0 %v118
    %829 = vmatprep.subr.mxu0 %v115
    %830 = vmatpush1.msra.mxu0 %v114
    %831 = vmatprep.subr.mxu0 %v111
    %832 = vmatpush1.msra.mxu0 %v110
    %833 = vmatprep.subr.mxu0 %v107
    %834 = vmatpush1.msra.mxu0 %v106
    %835 = vmatprep.subr.mxu0 %v103
    %836 = vmatpush1.msra.mxu0 %v102
    %837 = vmatprep.subr.mxu0 %v99
    %838 = vmatpush1.msra.mxu0 %v98
    %839 = vmatprep.subr.mxu0 %v95
    %840 = vmatpush1.msra.mxu0 %v94
    %841 = vmatprep.subr.mxu0 %v91
    %842 = vmatpush1.msra.mxu0 %v90
    %843 = vmatprep.subr.mxu0 %v87
    %844 = vmatpush1.msra.mxu0 %v86
    %845 = vmatprep.subr.mxu0 %v83
    %846 = vmatpush1.msra.mxu0 %v82
    %847 = vmatprep.subr.mxu0 0.0
    %848 = vmatpush2.msra.mxu0 0.0
    %849 = vmatprep.subr.mxu0 0.0
    %850 = vmatpush2.msra.mxu0 0.0
    %851 = vmatprep.subr.mxu0 0.0
    %852 = vmatpush2.msra.mxu0 0.0
    %853 = vmatprep.subr.mxu0 0.0
    %854 = vmatpush2.msra.mxu0 0.0
    %855 = vmatprep.subr.mxu0 0.0
    %856 = vmatpush2.msra.mxu0 0.0
    %857 = vmatprep.subr.mxu0 0.0
    %858 = vmatpush2.msra.mxu0 0.0
    %859 = vmatprep.subr.mxu0 0.0
    %860 = vmatpush2.msra.mxu0 0.0
    %861 = vmatprep.subr.mxu0 0.0
    %862 = vmatpush2.msra.mxu0 0.0
    %863 = vmatprep.subr.mxu0 0.0
    %864 = vmatpush2.msra.mxu0 0.0
    %865 = vmatprep.subr.mxu0 0.0
    %866 = vmatpush2.msra.mxu0 0.0
    %867 = vmatprep.subr.mxu0 0.0
    %868 = vmatpush2.msra.mxu0 0.0
    %869 = vmatprep.subr.mxu0 0.0
    %870 = vmatpush2.msra.mxu0 0.0
    %871 = vmatprep.subr.mxu0 0.0
    %872 = vmatpush2.msra.mxu0 0.0
    %873 = vmatprep.subr.mxu0 0.0
    %874 = vmatpush2.msra.mxu0 0.0
    %875 = vmatprep.subr.mxu0 0.0
    %876 = vmatpush2.msra.mxu0 0.0
    %877 = vmatprep.subr.mxu0 0.0
    %878 = vmatpush2.msra.mxu0 0.0
    %879 = vmatprep.mubr.f32.mxu0 0.0
    %880 = vmatmul.mubr.f32.gmra.mxu0 %v717
    %v881 = vpop.f32.mrf.mxu0
    %v882 = vadd.f32 %v737, %v881
    %v883 = vpop.f32.mrf.mxu0
    %v884 = vadd.f32 %v739, %v883
    %885 = vdwg.mxu0
    %886 = vmatprep.subr.mxu0 0.0
    %887 = vmatpush1.msra.mxu0 %v159
    %888 = vmatprep.subr.mxu0 0.0
    %889 = vmatpush1.msra.mxu0 %v158
    %890 = vmatprep.subr.mxu0 0.0
    %891 = vmatpush1.msra.mxu0 %v157
    %892 = vmatprep.subr.mxu0 0.0
    %893 = vmatpush1.msra.mxu0 %v156
    %894 = vmatprep.subr.mxu0 0.0
    %895 = vmatpush1.msra.mxu0 %v155
    %896 = vmatprep.subr.mxu0 0.0
    %897 = vmatpush1.msra.mxu0 %v154
    %898 = vmatprep.subr.mxu0 0.0
    %899 = vmatpush1.msra.mxu0 %v153
    %900 = vmatprep.subr.mxu0 0.0
    %901 = vmatpush1.msra.mxu0 %v152
    %902 = vmatprep.subr.mxu0 0.0
    %903 = vmatpush1.msra.mxu0 %v151
    %904 = vmatprep.subr.mxu0 0.0
    %905 = vmatpush1.msra.mxu0 %v150
    %906 = vmatprep.subr.mxu0 0.0
    %907 = vmatpush1.msra.mxu0 %v149
    %908 = vmatprep.subr.mxu0 0.0
    %909 = vmatpush1.msra.mxu0 %v148
    %910 = vmatprep.subr.mxu0 0.0
    %911 = vmatpush1.msra.mxu0 %v147
    %912 = vmatprep.subr.mxu0 0.0
    %913 = vmatpush1.msra.mxu0 %v146
    %914 = vmatprep.subr.mxu0 0.0
    %915 = vmatpush1.msra.mxu0 %v145
    %916 = vmatprep.subr.mxu0 0.0
    %917 = vmatpush1.msra.mxu0 %v144
    %918 = vmatprep.subr.mxu0 0.0
    %919 = vmatpush2.msra.mxu0 0.0
    %920 = vmatprep.subr.mxu0 0.0
    %921 = vmatpush2.msra.mxu0 0.0
    %922 = vmatprep.subr.mxu0 0.0
    %923 = vmatpush2.msra.mxu0 0.0
    %924 = vmatprep.subr.mxu0 0.0
    %925 = vmatpush2.msra.mxu0 0.0
    %926 = vmatprep.subr.mxu0 0.0
    %927 = vmatpush2.msra.mxu0 0.0
    %928 = vmatprep.subr.mxu0 0.0
    %929 = vmatpush2.msra.mxu0 0.0
    %930 = vmatprep.subr.mxu0 0.0
    %931 = vmatpush2.msra.mxu0 0.0
    %932 = vmatprep.subr.mxu0 0.0
    %933 = vmatpush2.msra.mxu0 0.0
    %934 = vmatprep.subr.mxu0 0.0
    %935 = vmatpush2.msra.mxu0 0.0
    %936 = vmatprep.subr.mxu0 0.0
    %937 = vmatpush2.msra.mxu0 0.0
    %938 = vmatprep.subr.mxu0 0.0
    %939 = vmatpush2.msra.mxu0 0.0
    %940 = vmatprep.subr.mxu0 0.0
    %941 = vmatpush2.msra.mxu0 0.0
    %942 = vmatprep.subr.mxu0 0.0
    %943 = vmatpush2.msra.mxu0 0.0
    %944 = vmatprep.subr.mxu0 0.0
    %945 = vmatpush2.msra.mxu0 0.0
    %946 = vmatprep.subr.mxu0 0.0
    %947 = vmatpush2.msra.mxu0 0.0
    %948 = vmatprep.subr.mxu0 0.0
    %949 = vmatpush2.msra.mxu0 0.0
    %950 = vmatprep.mubr.f32.mxu0 0.0
    %951 = vmatmul.mubr.f32.gmra.mxu0 %v715
    %v952 = vpop.f32.mrf.mxu0
    %v953 = vadd.f32 %v165, %v952
    %v954 = vpop.f32.mrf.mxu0
    %955 = vdwg.mxu0
    %v956 = vtanh.pop %v953
    %s957 = scalar_lea.vmem %s1, 4
    %v958 = vld [vmem:[%s957] sm:$0x3]
    %960 = vset.pattern.permute.xlu0 0
    %961 = vperm.xlu0 %960, %v958
    %v962 = vpop.permute.xlu0 %961
    %v964 = vmul.f32 %v956, %v962
    %v965 = vadd.f32 %v715, %v964
    %v966 = vxor.u32 %v811, 2147483648
    %v967 = vmul.f32 %v966, 1.442695
    %v968 = vpow.pop %v967
    %v969 = vadd.f32 %v968, 1.0
    %v970 = vrcp.pop %v969
    %v971 = vmul.f32 1.0, %v970
    %v972 = vxor.u32 %v813, 2147483648
    %v973 = vmul.f32 %v972, 1.442695
    %v974 = vpow.pop %v973
    %v975 = vadd.f32 %v974, 1.0
    %v976 = vrcp.pop %v975
    %v977 = vmul.f32 1.0, %v976
    %v978 = vxor.u32 %v882, 2147483648
    %v979 = vmul.f32 %v978, 1.442695
    %v980 = vpow.pop %v979
    %v981 = vadd.f32 %v980, 1.0
    %v982 = vrcp.pop %v981
    %v983 = vmul.f32 1.0, %v982
    %v984 = vxor.u32 %v884, 2147483648
    %v985 = vmul.f32 %v984, 1.442695
    %v986 = vpow.pop %v985
    %v987 = vadd.f32 %v986, 1.0
    %v988 = vrcp.pop %v987
    %v989 = vmul.f32 1.0, %v988
    %v990 = vmul.f32 %v971, %v965
    %v991 = vmul.f32 %v977, %v989
    %v992 = vadd.f32 %v990, %v991
    %v993 = vtanh.pop %v992
    %v994 = vmul.f32 %v983, %v993
    %s995 = scalar_lea.vmem [#allocation10], 4
    %996 = vst [vmem:[%s995] sm:$0x3] %v983
    %s997 = scalar_lea.vmem [#allocation4], 24
    %v998 = vld [vmem:[%s997] sm:$0xff]
    %v1000 = vcombine.high %v998, %v998
    %v1002 = vunpack.c.l.s4 1983009808
    %v1003 = vunpack.c.0.s8 %v1002
    %v1004 = vlaneseq
    %v1005 = vshrl.u32 %v1004, 7
    %v1006 = vsub.s32 %v1003, %v1005
    %v1007 = vrot.slane %v998, %v1006
    %v1009 = vunpack.c.l.s4 1983009808
    %v1010 = vunpack.c.0.s8 %v1009
    %v1011 = vlaneseq
    %v1012 = vshrl.u32 %v1011, 7
    %v1013 = vsub.s32 %v1010, %v1012
    %v1014 = vrot.slane %v1000, %v1013
    %v1015 = vcombine.high %v1007, %v1007
    %v1016 = vcombine.high %v1014, %v1014
    %1021 = vmatprep.subr.mxu0 %v141
    %1022 = vmatpush1.msra.mxu0 %v140
    %1023 = vmatprep.subr.mxu0 %v137
    %1024 = vmatpush1.msra.mxu0 %v136
    %1025 = vmatprep.subr.mxu0 %v133
    %1026 = vmatpush1.msra.mxu0 %v132
    %1027 = vmatprep.subr.mxu0 %v129
    %1028 = vmatpush1.msra.mxu0 %v128
    %1029 = vmatprep.subr.mxu0 %v125
    %1030 = vmatpush1.msra.mxu0 %v124
    %1031 = vmatprep.subr.mxu0 %v121
    %1032 = vmatpush1.msra.mxu0 %v120
    %1033 = vmatprep.subr.mxu0 %v117
    %1034 = vmatpush1.msra.mxu0 %v116
    %1035 = vmatprep.subr.mxu0 %v113
    %1036 = vmatpush1.msra.mxu0 %v112
    %1037 = vmatprep.subr.mxu0 %v109
    %1038 = vmatpush1.msra.mxu0 %v108
    %1039 = vmatprep.subr.mxu0 %v105
    %1040 = vmatpush1.msra.mxu0 %v104
    %1041 = vmatprep.subr.mxu0 %v101
    %1042 = vmatpush1.msra.mxu0 %v100
    %1043 = vmatprep.subr.mxu0 %v97
    %1044 = vmatpush1.msra.mxu0 %v96
    %1045 = vmatprep.subr.mxu0 %v93
    %1046 = vmatpush1.msra.mxu0 %v92
    %1047 = vmatprep.subr.mxu0 %v89
    %1048 = vmatpush1.msra.mxu0 %v88
    %1049 = vmatprep.subr.mxu0 %v85
    %1050 = vmatpush1.msra.mxu0 %v84
    %1051 = vmatprep.subr.mxu0 %v81
    %1052 = vmatpush1.msra.mxu0 %v80
    %1053 = vmatprep.subr.mxu0 0.0
    %1054 = vmatpush2.msra.mxu0 0.0
    %1055 = vmatprep.subr.mxu0 0.0
    %1056 = vmatpush2.msra.mxu0 0.0
    %1057 = vmatprep.subr.mxu0 0.0
    %1058 = vmatpush2.msra.mxu0 0.0
    %1059 = vmatprep.subr.mxu0 0.0
    %1060 = vmatpush2.msra.mxu0 0.0
    %1061 = vmatprep.subr.mxu0 0.0
    %1062 = vmatpush2.msra.mxu0 0.0
    %1063 = vmatprep.subr.mxu0 0.0
    %1064 = vmatpush2.msra.mxu0 0.0
    %1065 = vmatprep.subr.mxu0 0.0
    %1066 = vmatpush2.msra.mxu0 0.0
    %1067 = vmatprep.subr.mxu0 0.0
    %1068 = vmatpush2.msra.mxu0 0.0
    %1069 = vmatprep.subr.mxu0 0.0
    %1070 = vmatpush2.msra.mxu0 0.0
    %1071 = vmatprep.subr.mxu0 0.0
    %1072 = vmatpush2.msra.mxu0 0.0
    %1073 = vmatprep.subr.mxu0 0.0
    %1074 = vmatpush2.msra.mxu0 0.0
    %1075 = vmatprep.subr.mxu0 0.0
    %1076 = vmatpush2.msra.mxu0 0.0
    %1077 = vmatprep.subr.mxu0 0.0
    %1078 = vmatpush2.msra.mxu0 0.0
    %1079 = vmatprep.subr.mxu0 0.0
    %1080 = vmatpush2.msra.mxu0 0.0
    %1081 = vmatprep.subr.mxu0 0.0
    %1082 = vmatpush2.msra.mxu0 0.0
    %1083 = vmatprep.subr.mxu0 0.0
    %1084 = vmatpush2.msra.mxu0 0.0
    %1085 = vmatprep.mubr.f32.mxu0 0.0
    %1086 = vmatmul.mubr.f32.gmra.mxu0 %v994
    %v1087 = vpop.f32.mrf.mxu0
    %v1088 = vadd.f32 %v1007, %v1087
    %v1089 = vpop.f32.mrf.mxu0
    %v1090 = vadd.f32 %v1015, %v1089
    %1091 = vdwg.mxu0
    %1092 = vmatprep.subr.mxu0 %v143
    %1093 = vmatpush1.msra.mxu0 %v142
    %1094 = vmatprep.subr.mxu0 %v139
    %1095 = vmatpush1.msra.mxu0 %v138
    %1096 = vmatprep.subr.mxu0 %v135
    %1097 = vmatpush1.msra.mxu0 %v134
    %1098 = vmatprep.subr.mxu0 %v131
    %1099 = vmatpush1.msra.mxu0 %v130
    %1100 = vmatprep.subr.mxu0 %v127
    %1101 = vmatpush1.msra.mxu0 %v126
    %1102 = vmatprep.subr.mxu0 %v123
    %1103 = vmatpush1.msra.mxu0 %v122
    %1104 = vmatprep.subr.mxu0 %v119
    %1105 = vmatpush1.msra.mxu0 %v118
    %1106 = vmatprep.subr.mxu0 %v115
    %1107 = vmatpush1.msra.mxu0 %v114
    %1108 = vmatprep.subr.mxu0 %v111
    %1109 = vmatpush1.msra.mxu0 %v110
    %1110 = vmatprep.subr.mxu0 %v107
    %1111 = vmatpush1.msra.mxu0 %v106
    %1112 = vmatprep.subr.mxu0 %v103
    %1113 = vmatpush1.msra.mxu0 %v102
    %1114 = vmatprep.subr.mxu0 %v99
    %1115 = vmatpush1.msra.mxu0 %v98
    %1116 = vmatprep.subr.mxu0 %v95
    %1117 = vmatpush1.msra.mxu0 %v94
    %1118 = vmatprep.subr.mxu0 %v91
    %1119 = vmatpush1.msra.mxu0 %v90
    %1120 = vmatprep.subr.mxu0 %v87
    %1121 = vmatpush1.msra.mxu0 %v86
    %1122 = vmatprep.subr.mxu0 %v83
    %1123 = vmatpush1.msra.mxu0 %v82
    %1124 = vmatprep.subr.mxu0 0.0
    %1125 = vmatpush2.msra.mxu0 0.0
    %1126 = vmatprep.subr.mxu0 0.0
    %1127 = vmatpush2.msra.mxu0 0.0
    %1128 = vmatprep.subr.mxu0 0.0
    %1129 = vmatpush2.msra.mxu0 0.0
    %1130 = vmatprep.subr.mxu0 0.0
    %1131 = vmatpush2.msra.mxu0 0.0
    %1132 = vmatprep.subr.mxu0 0.0
    %1133 = vmatpush2.msra.mxu0 0.0
    %1134 = vmatprep.subr.mxu0 0.0
    %1135 = vmatpush2.msra.mxu0 0.0
    %1136 = vmatprep.subr.mxu0 0.0
    %1137 = vmatpush2.msra.mxu0 0.0
    %1138 = vmatprep.subr.mxu0 0.0
    %1139 = vmatpush2.msra.mxu0 0.0
    %1140 = vmatprep.subr.mxu0 0.0
    %1141 = vmatpush2.msra.mxu0 0.0
    %1142 = vmatprep.subr.mxu0 0.0
    %1143 = vmatpush2.msra.mxu0 0.0
    %1144 = vmatprep.subr.mxu0 0.0
    %1145 = vmatpush2.msra.mxu0 0.0
    %1146 = vmatprep.subr.mxu0 0.0
    %1147 = vmatpush2.msra.mxu0 0.0
    %1148 = vmatprep.subr.mxu0 0.0
    %1149 = vmatpush2.msra.mxu0 0.0
    %1150 = vmatprep.subr.mxu0 0.0
    %1151 = vmatpush2.msra.mxu0 0.0
    %1152 = vmatprep.subr.mxu0 0.0
    %1153 = vmatpush2.msra.mxu0 0.0
    %1154 = vmatprep.subr.mxu0 0.0
    %1155 = vmatpush2.msra.mxu0 0.0
    %1156 = vmatprep.mubr.f32.mxu0 0.0
    %1157 = vmatmul.mubr.f32.gmra.mxu0 %v994
    %v1158 = vpop.f32.mrf.mxu0
    %v1159 = vadd.f32 %v1014, %v1158
    %v1160 = vpop.f32.mrf.mxu0
    %v1161 = vadd.f32 %v1016, %v1160
    %1162 = vdwg.mxu0
    %1163 = vmatprep.subr.mxu0 0.0
    %1164 = vmatpush1.msra.mxu0 %v159
    %1165 = vmatprep.subr.mxu0 0.0
    %1166 = vmatpush1.msra.mxu0 %v158
    %1167 = vmatprep.subr.mxu0 0.0
    %1168 = vmatpush1.msra.mxu0 %v157
    %1169 = vmatprep.subr.mxu0 0.0
    %1170 = vmatpush1.msra.mxu0 %v156
    %1171 = vmatprep.subr.mxu0 0.0
    %1172 = vmatpush1.msra.mxu0 %v155
    %1173 = vmatprep.subr.mxu0 0.0
    %1174 = vmatpush1.msra.mxu0 %v154
    %1175 = vmatprep.subr.mxu0 0.0
    %1176 = vmatpush1.msra.mxu0 %v153
    %1177 = vmatprep.subr.mxu0 0.0
    %1178 = vmatpush1.msra.mxu0 %v152
    %1179 = vmatprep.subr.mxu0 0.0
    %1180 = vmatpush1.msra.mxu0 %v151
    %1181 = vmatprep.subr.mxu0 0.0
    %1182 = vmatpush1.msra.mxu0 %v150
    %1183 = vmatprep.subr.mxu0 0.0
    %1184 = vmatpush1.msra.mxu0 %v149
    %1185 = vmatprep.subr.mxu0 0.0
    %1186 = vmatpush1.msra.mxu0 %v148
    %1187 = vmatprep.subr.mxu0 0.0
    %1188 = vmatpush1.msra.mxu0 %v147
    %1189 = vmatprep.subr.mxu0 0.0
    %1190 = vmatpush1.msra.mxu0 %v146
    %1191 = vmatprep.subr.mxu0 0.0
    %1192 = vmatpush1.msra.mxu0 %v145
    %1193 = vmatprep.subr.mxu0 0.0
    %1194 = vmatpush1.msra.mxu0 %v144
    %1195 = vmatprep.subr.mxu0 0.0
    %1196 = vmatpush2.msra.mxu0 0.0
    %1197 = vmatprep.subr.mxu0 0.0
    %1198 = vmatpush2.msra.mxu0 0.0
    %1199 = vmatprep.subr.mxu0 0.0
    %1200 = vmatpush2.msra.mxu0 0.0
    %1201 = vmatprep.subr.mxu0 0.0
    %1202 = vmatpush2.msra.mxu0 0.0
    %1203 = vmatprep.subr.mxu0 0.0
    %1204 = vmatpush2.msra.mxu0 0.0
    %1205 = vmatprep.subr.mxu0 0.0
    %1206 = vmatpush2.msra.mxu0 0.0
    %1207 = vmatprep.subr.mxu0 0.0
    %1208 = vmatpush2.msra.mxu0 0.0
    %1209 = vmatprep.subr.mxu0 0.0
    %1210 = vmatpush2.msra.mxu0 0.0
    %1211 = vmatprep.subr.mxu0 0.0
    %1212 = vmatpush2.msra.mxu0 0.0
    %1213 = vmatprep.subr.mxu0 0.0
    %1214 = vmatpush2.msra.mxu0 0.0
    %1215 = vmatprep.subr.mxu0 0.0
    %1216 = vmatpush2.msra.mxu0 0.0
    %1217 = vmatprep.subr.mxu0 0.0
    %1218 = vmatpush2.msra.mxu0 0.0
    %1219 = vmatprep.subr.mxu0 0.0
    %1220 = vmatpush2.msra.mxu0 0.0
    %1221 = vmatprep.subr.mxu0 0.0
    %1222 = vmatpush2.msra.mxu0 0.0
    %1223 = vmatprep.subr.mxu0 0.0
    %1224 = vmatpush2.msra.mxu0 0.0
    %1225 = vmatprep.subr.mxu0 0.0
    %1226 = vmatpush2.msra.mxu0 0.0
    %1227 = vmatprep.mubr.f32.mxu0 0.0
    %1228 = vmatmul.mubr.f32.gmra.mxu0 %v992
    %v1229 = vpop.f32.mrf.mxu0
    %v1230 = vadd.f32 %v165, %v1229
    %v1231 = vpop.f32.mrf.mxu0
    %1232 = vdwg.mxu0
    %v1233 = vtanh.pop %v1230
    %s1234 = scalar_lea.vmem %s1, 6
    %v1235 = vld [vmem:[%s1234] sm:$0x3]
    %1237 = vset.pattern.permute.xlu0 0
    %1238 = vperm.xlu0 %1237, %v1235
    %v1239 = vpop.permute.xlu0 %1238
    %v1241 = vmul.f32 %v1233, %v1239
    %v1242 = vadd.f32 %v992, %v1241
    %v1243 = vxor.u32 %v1088, 2147483648
    %v1244 = vmul.f32 %v1243, 1.442695
    %v1245 = vpow.pop %v1244
    %v1246 = vadd.f32 %v1245, 1.0
    %v1247 = vrcp.pop %v1246
    %v1248 = vmul.f32 1.0, %v1247
    %v1249 = vxor.u32 %v1090, 2147483648
    %v1250 = vmul.f32 %v1249, 1.442695
    %v1251 = vpow.pop %v1250
    %v1252 = vadd.f32 %v1251, 1.0
    %v1253 = vrcp.pop %v1252
    %v1254 = vmul.f32 1.0, %v1253
    %v1255 = vxor.u32 %v1159, 2147483648
    %v1256 = vmul.f32 %v1255, 1.442695
    %v1257 = vpow.pop %v1256
    %v1258 = vadd.f32 %v1257, 1.0
    %v1259 = vrcp.pop %v1258
    %v1260 = vmul.f32 1.0, %v1259
    %v1261 = vxor.u32 %v1161, 2147483648
    %v1262 = vmul.f32 %v1261, 1.442695
    %v1263 = vpow.pop %v1262
    %v1264 = vadd.f32 %v1263, 1.0
    %v1265 = vrcp.pop %v1264
    %v1266 = vmul.f32 1.0, %v1265
    %v1267 = vmul.f32 %v1248, %v1242
    %v1268 = vmul.f32 %v1254, %v1266
    %v1269 = vadd.f32 %v1267, %v1268
    %v1270 = vtanh.pop %v1269
    %v1271 = vmul.f32 %v1260, %v1270
    %s1272 = scalar_lea.vmem [#allocation10], 6
    %1273 = vst [vmem:[%s1272] sm:$0x3] %v1260
    %s1274 = scalar_lea.vmem [#allocation4], 32
    %v1275 = vld [vmem:[%s1274] sm:$0xff]
    %v1277 = vcombine.high %v1275, %v1275
    %v1279 = vunpack.c.l.s4 1983009808
    %v1280 = vunpack.c.0.s8 %v1279
    %v1281 = vlaneseq
    %v1282 = vshrl.u32 %v1281, 7
    %v1283 = vsub.s32 %v1280, %v1282
    %v1284 = vrot.slane %v1275, %v1283
    %v1286 = vunpack.c.l.s4 1983009808
    %v1287 = vunpack.c.0.s8 %v1286
    %v1288 = vlaneseq
    %v1289 = vshrl.u32 %v1288, 7
    %v1290 = vsub.s32 %v1287, %v1289
    %v1291 = vrot.slane %v1277, %v1290
    %v1292 = vcombine.high %v1284, %v1284
    %v1293 = vcombine.high %v1291, %v1291
    %1298 = vmatprep.subr.mxu0 %v141
    %1299 = vmatpush1.msra.mxu0 %v140
    %1300 = vmatprep.subr.mxu0 %v137
    %1301 = vmatpush1.msra.mxu0 %v136
    %1302 = vmatprep.subr.mxu0 %v133
    %1303 = vmatpush1.msra.mxu0 %v132
    %1304 = vmatprep.subr.mxu0 %v129
    %1305 = vmatpush1.msra.mxu0 %v128
    %1306 = vmatprep.subr.mxu0 %v125
    %1307 = vmatpush1.msra.mxu0 %v124
    %1308 = vmatprep.subr.mxu0 %v121
    %1309 = vmatpush1.msra.mxu0 %v120
    %1310 = vmatprep.subr.mxu0 %v117
    %1311 = vmatpush1.msra.mxu0 %v116
    %1312 = vmatprep.subr.mxu0 %v113
    %1313 = vmatpush1.msra.mxu0 %v112
    %1314 = vmatprep.subr.mxu0 %v109
    %1315 = vmatpush1.msra.mxu0 %v108
    %1316 = vmatprep.subr.mxu0 %v105
    %1317 = vmatpush1.msra.mxu0 %v104
    %1318 = vmatprep.subr.mxu0 %v101
    %1319 = vmatpush1.msra.mxu0 %v100
    %1320 = vmatprep.subr.mxu0 %v97
    %1321 = vmatpush1.msra.mxu0 %v96
    %1322 = vmatprep.subr.mxu0 %v93
    %1323 = vmatpush1.msra.mxu0 %v92
    %1324 = vmatprep.subr.mxu0 %v89
    %1325 = vmatpush1.msra.mxu0 %v88
    %1326 = vmatprep.subr.mxu0 %v85
    %1327 = vmatpush1.msra.mxu0 %v84
    %1328 = vmatprep.subr.mxu0 %v81
    %1329 = vmatpush1.msra.mxu0 %v80
    %1330 = vmatprep.subr.mxu0 0.0
    %1331 = vmatpush2.msra.mxu0 0.0
    %1332 = vmatprep.subr.mxu0 0.0
    %1333 = vmatpush2.msra.mxu0 0.0
    %1334 = vmatprep.subr.mxu0 0.0
    %1335 = vmatpush2.msra.mxu0 0.0
    %1336 = vmatprep.subr.mxu0 0.0
    %1337 = vmatpush2.msra.mxu0 0.0
    %1338 = vmatprep.subr.mxu0 0.0
    %1339 = vmatpush2.msra.mxu0 0.0
    %1340 = vmatprep.subr.mxu0 0.0
    %1341 = vmatpush2.msra.mxu0 0.0
    %1342 = vmatprep.subr.mxu0 0.0
    %1343 = vmatpush2.msra.mxu0 0.0
    %1344 = vmatprep.subr.mxu0 0.0
    %1345 = vmatpush2.msra.mxu0 0.0
    %1346 = vmatprep.subr.mxu0 0.0
    %1347 = vmatpush2.msra.mxu0 0.0
    %1348 = vmatprep.subr.mxu0 0.0
    %1349 = vmatpush2.msra.mxu0 0.0
    %1350 = vmatprep.subr.mxu0 0.0
    %1351 = vmatpush2.msra.mxu0 0.0
    %1352 = vmatprep.subr.mxu0 0.0
    %1353 = vmatpush2.msra.mxu0 0.0
    %1354 = vmatprep.subr.mxu0 0.0
    %1355 = vmatpush2.msra.mxu0 0.0
    %1356 = vmatprep.subr.mxu0 0.0
    %1357 = vmatpush2.msra.mxu0 0.0
    %1358 = vmatprep.subr.mxu0 0.0
    %1359 = vmatpush2.msra.mxu0 0.0
    %1360 = vmatprep.subr.mxu0 0.0
    %1361 = vmatpush2.msra.mxu0 0.0
    %1362 = vmatprep.mubr.f32.mxu0 0.0
    %1363 = vmatmul.mubr.f32.gmra.mxu0 %v1271
    %v1364 = vpop.f32.mrf.mxu0
    %v1365 = vadd.f32 %v1284, %v1364
    %v1366 = vpop.f32.mrf.mxu0
    %v1367 = vadd.f32 %v1292, %v1366
    %1368 = vdwg.mxu0
    %1369 = vmatprep.subr.mxu0 %v143
    %1370 = vmatpush1.msra.mxu0 %v142
    %1371 = vmatprep.subr.mxu0 %v139
    %1372 = vmatpush1.msra.mxu0 %v138
    %1373 = vmatprep.subr.mxu0 %v135
    %1374 = vmatpush1.msra.mxu0 %v134
    %1375 = vmatprep.subr.mxu0 %v131
    %1376 = vmatpush1.msra.mxu0 %v130
    %1377 = vmatprep.subr.mxu0 %v127
    %1378 = vmatpush1.msra.mxu0 %v126
    %1379 = vmatprep.subr.mxu0 %v123
    %1380 = vmatpush1.msra.mxu0 %v122
    %1381 = vmatprep.subr.mxu0 %v119
    %1382 = vmatpush1.msra.mxu0 %v118
    %1383 = vmatprep.subr.mxu0 %v115
    %1384 = vmatpush1.msra.mxu0 %v114
    %1385 = vmatprep.subr.mxu0 %v111
    %1386 = vmatpush1.msra.mxu0 %v110
    %1387 = vmatprep.subr.mxu0 %v107
    %1388 = vmatpush1.msra.mxu0 %v106
    %1389 = vmatprep.subr.mxu0 %v103
    %1390 = vmatpush1.msra.mxu0 %v102
    %1391 = vmatprep.subr.mxu0 %v99
    %1392 = vmatpush1.msra.mxu0 %v98
    %1393 = vmatprep.subr.mxu0 %v95
    %1394 = vmatpush1.msra.mxu0 %v94
    %1395 = vmatprep.subr.mxu0 %v91
    %1396 = vmatpush1.msra.mxu0 %v90
    %1397 = vmatprep.subr.mxu0 %v87
    %1398 = vmatpush1.msra.mxu0 %v86
    %1399 = vmatprep.subr.mxu0 %v83
    %1400 = vmatpush1.msra.mxu0 %v82
    %1401 = vmatprep.subr.mxu0 0.0
    %1402 = vmatpush2.msra.mxu0 0.0
    %1403 = vmatprep.subr.mxu0 0.0
    %1404 = vmatpush2.msra.mxu0 0.0
    %1405 = vmatprep.subr.mxu0 0.0
    %1406 = vmatpush2.msra.mxu0 0.0
    %1407 = vmatprep.subr.mxu0 0.0
    %1408 = vmatpush2.msra.mxu0 0.0
    %1409 = vmatprep.subr.mxu0 0.0
    %1410 = vmatpush2.msra.mxu0 0.0
    %1411 = vmatprep.subr.mxu0 0.0
    %1412 = vmatpush2.msra.mxu0 0.0
    %1413 = vmatprep.subr.mxu0 0.0
    %1414 = vmatpush2.msra.mxu0 0.0
    %1415 = vmatprep.subr.mxu0 0.0
    %1416 = vmatpush2.msra.mxu0 0.0
    %1417 = vmatprep.subr.mxu0 0.0
    %1418 = vmatpush2.msra.mxu0 0.0
    %1419 = vmatprep.subr.mxu0 0.0
    %1420 = vmatpush2.msra.mxu0 0.0
    %1421 = vmatprep.subr.mxu0 0.0
    %1422 = vmatpush2.msra.mxu0 0.0
    %1423 = vmatprep.subr.mxu0 0.0
    %1424 = vmatpush2.msra.mxu0 0.0
    %1425 = vmatprep.subr.mxu0 0.0
    %1426 = vmatpush2.msra.mxu0 0.0
    %1427 = vmatprep.subr.mxu0 0.0
    %1428 = vmatpush2.msra.mxu0 0.0
    %1429 = vmatprep.subr.mxu0 0.0
    %1430 = vmatpush2.msra.mxu0 0.0
    %1431 = vmatprep.subr.mxu0 0.0
    %1432 = vmatpush2.msra.mxu0 0.0
    %1433 = vmatprep.mubr.f32.mxu0 0.0
    %1434 = vmatmul.mubr.f32.gmra.mxu0 %v1271
    %v1435 = vpop.f32.mrf.mxu0
    %v1436 = vadd.f32 %v1291, %v1435
    %v1437 = vpop.f32.mrf.mxu0
    %v1438 = vadd.f32 %v1293, %v1437
    %1439 = vdwg.mxu0
    %1440 = vmatprep.subr.mxu0 0.0
    %1441 = vmatpush1.msra.mxu0 %v159
    %1442 = vmatprep.subr.mxu0 0.0
    %1443 = vmatpush1.msra.mxu0 %v158
    %1444 = vmatprep.subr.mxu0 0.0
    %1445 = vmatpush1.msra.mxu0 %v157
    %1446 = vmatprep.subr.mxu0 0.0
    %1447 = vmatpush1.msra.mxu0 %v156
    %1448 = vmatprep.subr.mxu0 0.0
    %1449 = vmatpush1.msra.mxu0 %v155
    %1450 = vmatprep.subr.mxu0 0.0
    %1451 = vmatpush1.msra.mxu0 %v154
    %1452 = vmatprep.subr.mxu0 0.0
    %1453 = vmatpush1.msra.mxu0 %v153
    %1454 = vmatprep.subr.mxu0 0.0
    %1455 = vmatpush1.msra.mxu0 %v152
    %1456 = vmatprep.subr.mxu0 0.0
    %1457 = vmatpush1.msra.mxu0 %v151
    %1458 = vmatprep.subr.mxu0 0.0
    %1459 = vmatpush1.msra.mxu0 %v150
    %1460 = vmatprep.subr.mxu0 0.0
    %1461 = vmatpush1.msra.mxu0 %v149
    %1462 = vmatprep.subr.mxu0 0.0
    %1463 = vmatpush1.msra.mxu0 %v148
    %1464 = vmatprep.subr.mxu0 0.0
    %1465 = vmatpush1.msra.mxu0 %v147
    %1466 = vmatprep.subr.mxu0 0.0
    %1467 = vmatpush1.msra.mxu0 %v146
    %1468 = vmatprep.subr.mxu0 0.0
    %1469 = vmatpush1.msra.mxu0 %v145
    %1470 = vmatprep.subr.mxu0 0.0
    %1471 = vmatpush1.msra.mxu0 %v144
    %1472 = vmatprep.subr.mxu0 0.0
    %1473 = vmatpush2.msra.mxu0 0.0
    %1474 = vmatprep.subr.mxu0 0.0
    %1475 = vmatpush2.msra.mxu0 0.0
    %1476 = vmatprep.subr.mxu0 0.0
    %1477 = vmatpush2.msra.mxu0 0.0
    %1478 = vmatprep.subr.mxu0 0.0
    %1479 = vmatpush2.msra.mxu0 0.0
    %1480 = vmatprep.subr.mxu0 0.0
    %1481 = vmatpush2.msra.mxu0 0.0
    %1482 = vmatprep.subr.mxu0 0.0
    %1483 = vmatpush2.msra.mxu0 0.0
    %1484 = vmatprep.subr.mxu0 0.0
    %1485 = vmatpush2.msra.mxu0 0.0
    %1486 = vmatprep.subr.mxu0 0.0
    %1487 = vmatpush2.msra.mxu0 0.0
    %1488 = vmatprep.subr.mxu0 0.0
    %1489 = vmatpush2.msra.mxu0 0.0
    %1490 = vmatprep.subr.mxu0 0.0
    %1491 = vmatpush2.msra.mxu0 0.0
    %1492 = vmatprep.subr.mxu0 0.0
    %1493 = vmatpush2.msra.mxu0 0.0
    %1494 = vmatprep.subr.mxu0 0.0
    %1495 = vmatpush2.msra.mxu0 0.0
    %1496 = vmatprep.subr.mxu0 0.0
    %1497 = vmatpush2.msra.mxu0 0.0
    %1498 = vmatprep.subr.mxu0 0.0
    %1499 = vmatpush2.msra.mxu0 0.0
    %1500 = vmatprep.subr.mxu0 0.0
    %1501 = vmatpush2.msra.mxu0 0.0
    %1502 = vmatprep.subr.mxu0 0.0
    %1503 = vmatpush2.msra.mxu0 0.0
    %1504 = vmatprep.mubr.f32.mxu0 0.0
    %1505 = vmatmul.mubr.f32.gmra.mxu0 %v1269
    %v1506 = vpop.f32.mrf.mxu0
    %v1507 = vadd.f32 %v165, %v1506
    %v1508 = vpop.f32.mrf.mxu0
    %1509 = vdwg.mxu0
    %v1510 = vtanh.pop %v1507
    %s1511 = scalar_lea.vmem %s1, 8
    %v1512 = vld [vmem:[%s1511] sm:$0x3]
    %1514 = vset.pattern.permute.xlu0 0
    %1515 = vperm.xlu0 %1514, %v1512
    %v1516 = vpop.permute.xlu0 %1515
    %v1518 = vmul.f32 %v1510, %v1516
    %v1519 = vadd.f32 %v1269, %v1518
    %v1520 = vxor.u32 %v1365, 2147483648
    %v1521 = vmul.f32 %v1520, 1.442695
    %v1522 = vpow.pop %v1521
    %v1523 = vadd.f32 %v1522, 1.0
    %v1524 = vrcp.pop %v1523
    %v1525 = vmul.f32 1.0, %v1524
    %v1526 = vxor.u32 %v1367, 2147483648
    %v1527 = vmul.f32 %v1526, 1.442695
    %v1528 = vpow.pop %v1527
    %v1529 = vadd.f32 %v1528, 1.0
    %v1530 = vrcp.pop %v1529
    %v1531 = vmul.f32 1.0, %v1530
    %v1532 = vxor.u32 %v1436, 2147483648
    %v1533 = vmul.f32 %v1532, 1.442695
    %v1534 = vpow.pop %v1533
    %v1535 = vadd.f32 %v1534, 1.0
    %v1536 = vrcp.pop %v1535
    %v1537 = vmul.f32 1.0, %v1536
    %v1538 = vxor.u32 %v1438, 2147483648
    %v1539 = vmul.f32 %v1538, 1.442695
    %v1540 = vpow.pop %v1539
    %v1541 = vadd.f32 %v1540, 1.0
    %v1542 = vrcp.pop %v1541
    %v1543 = vmul.f32 1.0, %v1542
    %v1544 = vmul.f32 %v1525, %v1519
    %v1545 = vmul.f32 %v1531, %v1543
    %v1546 = vadd.f32 %v1544, %v1545
    %v1547 = vtanh.pop %v1546
    %v1548 = vmul.f32 %v1537, %v1547
    %s1549 = scalar_lea.vmem [#allocation10], 8
    %1550 = vst [vmem:[%s1549] sm:$0x3] %v1537
    %s1551 = scalar_lea.vmem [#allocation4], 40
    %v1552 = vld [vmem:[%s1551] sm:$0xff]
    %v1554 = vcombine.high %v1552, %v1552
    %v1556 = vunpack.c.l.s4 1983009808
    %v1557 = vunpack.c.0.s8 %v1556
    %v1558 = vlaneseq
    %v1559 = vshrl.u32 %v1558, 7
    %v1560 = vsub.s32 %v1557, %v1559
    %v1561 = vrot.slane %v1552, %v1560
    %v1563 = vunpack.c.l.s4 1983009808
    %v1564 = vunpack.c.0.s8 %v1563
    %v1565 = vlaneseq
    %v1566 = vshrl.u32 %v1565, 7
    %v1567 = vsub.s32 %v1564, %v1566
    %v1568 = vrot.slane %v1554, %v1567
    %v1569 = vcombine.high %v1561, %v1561
    %v1570 = vcombine.high %v1568, %v1568
    %1575 = vmatprep.subr.mxu0 %v141
    %1576 = vmatpush1.msra.mxu0 %v140
    %1577 = vmatprep.subr.mxu0 %v137
    %1578 = vmatpush1.msra.mxu0 %v136
    %1579 = vmatprep.subr.mxu0 %v133
    %1580 = vmatpush1.msra.mxu0 %v132
    %1581 = vmatprep.subr.mxu0 %v129
    %1582 = vmatpush1.msra.mxu0 %v128
    %1583 = vmatprep.subr.mxu0 %v125
    %1584 = vmatpush1.msra.mxu0 %v124
    %1585 = vmatprep.subr.mxu0 %v121
    %1586 = vmatpush1.msra.mxu0 %v120
    %1587 = vmatprep.subr.mxu0 %v117
    %1588 = vmatpush1.msra.mxu0 %v116
    %1589 = vmatprep.subr.mxu0 %v113
    %1590 = vmatpush1.msra.mxu0 %v112
    %1591 = vmatprep.subr.mxu0 %v109
    %1592 = vmatpush1.msra.mxu0 %v108
    %1593 = vmatprep.subr.mxu0 %v105
    %1594 = vmatpush1.msra.mxu0 %v104
    %1595 = vmatprep.subr.mxu0 %v101
    %1596 = vmatpush1.msra.mxu0 %v100
    %1597 = vmatprep.subr.mxu0 %v97
    %1598 = vmatpush1.msra.mxu0 %v96
    %1599 = vmatprep.subr.mxu0 %v93
    %1600 = vmatpush1.msra.mxu0 %v92
    %1601 = vmatprep.subr.mxu0 %v89
    %1602 = vmatpush1.msra.mxu0 %v88
    %1603 = vmatprep.subr.mxu0 %v85
    %1604 = vmatpush1.msra.mxu0 %v84
    %1605 = vmatprep.subr.mxu0 %v81
    %1606 = vmatpush1.msra.mxu0 %v80
    %1607 = vmatprep.subr.mxu0 0.0
    %1608 = vmatpush2.msra.mxu0 0.0
    %1609 = vmatprep.subr.mxu0 0.0
    %1610 = vmatpush2.msra.mxu0 0.0
    %1611 = vmatprep.subr.mxu0 0.0
    %1612 = vmatpush2.msra.mxu0 0.0
    %1613 = vmatprep.subr.mxu0 0.0
    %1614 = vmatpush2.msra.mxu0 0.0
    %1615 = vmatprep.subr.mxu0 0.0
    %1616 = vmatpush2.msra.mxu0 0.0
    %1617 = vmatprep.subr.mxu0 0.0
    %1618 = vmatpush2.msra.mxu0 0.0
    %1619 = vmatprep.subr.mxu0 0.0
    %1620 = vmatpush2.msra.mxu0 0.0
    %1621 = vmatprep.subr.mxu0 0.0
    %1622 = vmatpush2.msra.mxu0 0.0
    %1623 = vmatprep.subr.mxu0 0.0
    %1624 = vmatpush2.msra.mxu0 0.0
    %1625 = vmatprep.subr.mxu0 0.0
    %1626 = vmatpush2.msra.mxu0 0.0
    %1627 = vmatprep.subr.mxu0 0.0
    %1628 = vmatpush2.msra.mxu0 0.0
    %1629 = vmatprep.subr.mxu0 0.0
    %1630 = vmatpush2.msra.mxu0 0.0
    %1631 = vmatprep.subr.mxu0 0.0
    %1632 = vmatpush2.msra.mxu0 0.0
    %1633 = vmatprep.subr.mxu0 0.0
    %1634 = vmatpush2.msra.mxu0 0.0
    %1635 = vmatprep.subr.mxu0 0.0
    %1636 = vmatpush2.msra.mxu0 0.0
    %1637 = vmatprep.subr.mxu0 0.0
    %1638 = vmatpush2.msra.mxu0 0.0
    %1639 = vmatprep.mubr.f32.mxu0 0.0
    %1640 = vmatmul.mubr.f32.gmra.mxu0 %v1548
    %v1641 = vpop.f32.mrf.mxu0
    %v1642 = vadd.f32 %v1561, %v1641
    %v1643 = vpop.f32.mrf.mxu0
    %v1644 = vadd.f32 %v1569, %v1643
    %1645 = vdwg.mxu0
    %1646 = vmatprep.subr.mxu0 %v143
    %1647 = vmatpush1.msra.mxu0 %v142
    %1648 = vmatprep.subr.mxu0 %v139
    %1649 = vmatpush1.msra.mxu0 %v138
    %1650 = vmatprep.subr.mxu0 %v135
    %1651 = vmatpush1.msra.mxu0 %v134
    %1652 = vmatprep.subr.mxu0 %v131
    %1653 = vmatpush1.msra.mxu0 %v130
    %1654 = vmatprep.subr.mxu0 %v127
    %1655 = vmatpush1.msra.mxu0 %v126
    %1656 = vmatprep.subr.mxu0 %v123
    %1657 = vmatpush1.msra.mxu0 %v122
    %1658 = vmatprep.subr.mxu0 %v119
    %1659 = vmatpush1.msra.mxu0 %v118
    %1660 = vmatprep.subr.mxu0 %v115
    %1661 = vmatpush1.msra.mxu0 %v114
    %1662 = vmatprep.subr.mxu0 %v111
    %1663 = vmatpush1.msra.mxu0 %v110
    %1664 = vmatprep.subr.mxu0 %v107
    %1665 = vmatpush1.msra.mxu0 %v106
    %1666 = vmatprep.subr.mxu0 %v103
    %1667 = vmatpush1.msra.mxu0 %v102
    %1668 = vmatprep.subr.mxu0 %v99
    %1669 = vmatpush1.msra.mxu0 %v98
    %1670 = vmatprep.subr.mxu0 %v95
    %1671 = vmatpush1.msra.mxu0 %v94
    %1672 = vmatprep.subr.mxu0 %v91
    %1673 = vmatpush1.msra.mxu0 %v90
    %1674 = vmatprep.subr.mxu0 %v87
    %1675 = vmatpush1.msra.mxu0 %v86
    %1676 = vmatprep.subr.mxu0 %v83
    %1677 = vmatpush1.msra.mxu0 %v82
    %1678 = vmatprep.subr.mxu0 0.0
    %1679 = vmatpush2.msra.mxu0 0.0
    %1680 = vmatprep.subr.mxu0 0.0
    %1681 = vmatpush2.msra.mxu0 0.0
    %1682 = vmatprep.subr.mxu0 0.0
    %1683 = vmatpush2.msra.mxu0 0.0
    %1684 = vmatprep.subr.mxu0 0.0
    %1685 = vmatpush2.msra.mxu0 0.0
    %1686 = vmatprep.subr.mxu0 0.0
    %1687 = vmatpush2.msra.mxu0 0.0
    %1688 = vmatprep.subr.mxu0 0.0
    %1689 = vmatpush2.msra.mxu0 0.0
    %1690 = vmatprep.subr.mxu0 0.0
    %1691 = vmatpush2.msra.mxu0 0.0
    %1692 = vmatprep.subr.mxu0 0.0
    %1693 = vmatpush2.msra.mxu0 0.0
    %1694 = vmatprep.subr.mxu0 0.0
    %1695 = vmatpush2.msra.mxu0 0.0
    %1696 = vmatprep.subr.mxu0 0.0
    %1697 = vmatpush2.msra.mxu0 0.0
    %1698 = vmatprep.subr.mxu0 0.0
    %1699 = vmatpush2.msra.mxu0 0.0
    %1700 = vmatprep.subr.mxu0 0.0
    %1701 = vmatpush2.msra.mxu0 0.0
    %1702 = vmatprep.subr.mxu0 0.0
    %1703 = vmatpush2.msra.mxu0 0.0
    %1704 = vmatprep.subr.mxu0 0.0
    %1705 = vmatpush2.msra.mxu0 0.0
    %1706 = vmatprep.subr.mxu0 0.0
    %1707 = vmatpush2.msra.mxu0 0.0
    %1708 = vmatprep.subr.mxu0 0.0
    %1709 = vmatpush2.msra.mxu0 0.0
    %1710 = vmatprep.mubr.f32.mxu0 0.0
    %1711 = vmatmul.mubr.f32.gmra.mxu0 %v1548
    %v1712 = vpop.f32.mrf.mxu0
    %v1713 = vadd.f32 %v1568, %v1712
    %v1714 = vpop.f32.mrf.mxu0
    %v1715 = vadd.f32 %v1570, %v1714
    %1716 = vdwg.mxu0
    %1717 = vmatprep.subr.mxu0 0.0
    %1718 = vmatpush1.msra.mxu0 %v159
    %1719 = vmatprep.subr.mxu0 0.0
    %1720 = vmatpush1.msra.mxu0 %v158
    %1721 = vmatprep.subr.mxu0 0.0
    %1722 = vmatpush1.msra.mxu0 %v157
    %1723 = vmatprep.subr.mxu0 0.0
    %1724 = vmatpush1.msra.mxu0 %v156
    %1725 = vmatprep.subr.mxu0 0.0
    %1726 = vmatpush1.msra.mxu0 %v155
    %1727 = vmatprep.subr.mxu0 0.0
    %1728 = vmatpush1.msra.mxu0 %v154
    %1729 = vmatprep.subr.mxu0 0.0
    %1730 = vmatpush1.msra.mxu0 %v153
    %1731 = vmatprep.subr.mxu0 0.0
    %1732 = vmatpush1.msra.mxu0 %v152
    %1733 = vmatprep.subr.mxu0 0.0
    %1734 = vmatpush1.msra.mxu0 %v151
    %1735 = vmatprep.subr.mxu0 0.0
    %1736 = vmatpush1.msra.mxu0 %v150
    %1737 = vmatprep.subr.mxu0 0.0
    %1738 = vmatpush1.msra.mxu0 %v149
    %1739 = vmatprep.subr.mxu0 0.0
    %1740 = vmatpush1.msra.mxu0 %v148
    %1741 = vmatprep.subr.mxu0 0.0
    %1742 = vmatpush1.msra.mxu0 %v147
    %1743 = vmatprep.subr.mxu0 0.0
    %1744 = vmatpush1.msra.mxu0 %v146
    %1745 = vmatprep.subr.mxu0 0.0
    %1746 = vmatpush1.msra.mxu0 %v145
    %1747 = vmatprep.subr.mxu0 0.0
    %1748 = vmatpush1.msra.mxu0 %v144
    %1749 = vmatprep.subr.mxu0 0.0
    %1750 = vmatpush2.msra.mxu0 0.0
    %1751 = vmatprep.subr.mxu0 0.0
    %1752 = vmatpush2.msra.mxu0 0.0
    %1753 = vmatprep.subr.mxu0 0.0
    %1754 = vmatpush2.msra.mxu0 0.0
    %1755 = vmatprep.subr.mxu0 0.0
    %1756 = vmatpush2.msra.mxu0 0.0
    %1757 = vmatprep.subr.mxu0 0.0
    %1758 = vmatpush2.msra.mxu0 0.0
    %1759 = vmatprep.subr.mxu0 0.0
    %1760 = vmatpush2.msra.mxu0 0.0
    %1761 = vmatprep.subr.mxu0 0.0
    %1762 = vmatpush2.msra.mxu0 0.0
    %1763 = vmatprep.subr.mxu0 0.0
    %1764 = vmatpush2.msra.mxu0 0.0
    %1765 = vmatprep.subr.mxu0 0.0
    %1766 = vmatpush2.msra.mxu0 0.0
    %1767 = vmatprep.subr.mxu0 0.0
    %1768 = vmatpush2.msra.mxu0 0.0
    %1769 = vmatprep.subr.mxu0 0.0
    %1770 = vmatpush2.msra.mxu0 0.0
    %1771 = vmatprep.subr.mxu0 0.0
    %1772 = vmatpush2.msra.mxu0 0.0
    %1773 = vmatprep.subr.mxu0 0.0
    %1774 = vmatpush2.msra.mxu0 0.0
    %1775 = vmatprep.subr.mxu0 0.0
    %1776 = vmatpush2.msra.mxu0 0.0
    %1777 = vmatprep.subr.mxu0 0.0
    %1778 = vmatpush2.msra.mxu0 0.0
    %1779 = vmatprep.subr.mxu0 0.0
    %1780 = vmatpush2.msra.mxu0 0.0
    %1781 = vmatprep.mubr.f32.mxu0 0.0
    %1782 = vmatmul.mubr.f32.gmra.mxu0 %v1546
    %v1783 = vpop.f32.mrf.mxu0
    %v1784 = vadd.f32 %v165, %v1783
    %v1785 = vpop.f32.mrf.mxu0
    %1786 = vdwg.mxu0
    %v1787 = vtanh.pop %v1784
    %s1788 = scalar_lea.vmem %s1, 10
    %v1789 = vld [vmem:[%s1788] sm:$0x3]
    %1791 = vset.pattern.permute.xlu0 0
    %1792 = vperm.xlu0 %1791, %v1789
    %v1793 = vpop.permute.xlu0 %1792
    %v1795 = vmul.f32 %v1787, %v1793
    %v1796 = vadd.f32 %v1546, %v1795
    %v1797 = vxor.u32 %v1642, 2147483648
    %v1798 = vmul.f32 %v1797, 1.442695
    %v1799 = vpow.pop %v1798
    %v1800 = vadd.f32 %v1799, 1.0
    %v1801 = vrcp.pop %v1800
    %v1802 = vmul.f32 1.0, %v1801
    %v1803 = vxor.u32 %v1644, 2147483648
    %v1804 = vmul.f32 %v1803, 1.442695
    %v1805 = vpow.pop %v1804
    %v1806 = vadd.f32 %v1805, 1.0
    %v1807 = vrcp.pop %v1806
    %v1808 = vmul.f32 1.0, %v1807
    %v1809 = vxor.u32 %v1713, 2147483648
    %v1810 = vmul.f32 %v1809, 1.442695
    %v1811 = vpow.pop %v1810
    %v1812 = vadd.f32 %v1811, 1.0
    %v1813 = vrcp.pop %v1812
    %v1814 = vmul.f32 1.0, %v1813
    %v1815 = vxor.u32 %v1715, 2147483648
    %v1816 = vmul.f32 %v1815, 1.442695
    %v1817 = vpow.pop %v1816
    %v1818 = vadd.f32 %v1817, 1.0
    %v1819 = vrcp.pop %v1818
    %v1820 = vmul.f32 1.0, %v1819
    %v1821 = vmul.f32 %v1802, %v1796
    %v1822 = vmul.f32 %v1808, %v1820
    %v1823 = vadd.f32 %v1821, %v1822
    %v1824 = vtanh.pop %v1823
    %v1825 = vmul.f32 %v1814, %v1824
    %s1826 = scalar_lea.vmem [#allocation10], 10
    %1827 = vst [vmem:[%s1826] sm:$0x3] %v1814
    %s1828 = scalar_lea.vmem [#allocation4], 48
    %v1829 = vld [vmem:[%s1828] sm:$0xff]
    %v1831 = vcombine.high %v1829, %v1829
    %v1833 = vunpack.c.l.s4 1983009808
    %v1834 = vunpack.c.0.s8 %v1833
    %v1835 = vlaneseq
    %v1836 = vshrl.u32 %v1835, 7
    %v1837 = vsub.s32 %v1834, %v1836
    %v1838 = vrot.slane %v1829, %v1837
    %v1840 = vunpack.c.l.s4 1983009808
    %v1841 = vunpack.c.0.s8 %v1840
    %v1842 = vlaneseq
    %v1843 = vshrl.u32 %v1842, 7
    %v1844 = vsub.s32 %v1841, %v1843
    %v1845 = vrot.slane %v1831, %v1844
    %v1846 = vcombine.high %v1838, %v1838
    %v1847 = vcombine.high %v1845, %v1845
    %1852 = vmatprep.subr.mxu0 %v141
    %1853 = vmatpush1.msra.mxu0 %v140
    %1854 = vmatprep.subr.mxu0 %v137
    %1855 = vmatpush1.msra.mxu0 %v136
    %1856 = vmatprep.subr.mxu0 %v133
    %1857 = vmatpush1.msra.mxu0 %v132
    %1858 = vmatprep.subr.mxu0 %v129
    %1859 = vmatpush1.msra.mxu0 %v128
    %1860 = vmatprep.subr.mxu0 %v125
    %1861 = vmatpush1.msra.mxu0 %v124
    %1862 = vmatprep.subr.mxu0 %v121
    %1863 = vmatpush1.msra.mxu0 %v120
    %1864 = vmatprep.subr.mxu0 %v117
    %1865 = vmatpush1.msra.mxu0 %v116
    %1866 = vmatprep.subr.mxu0 %v113
    %1867 = vmatpush1.msra.mxu0 %v112
    %1868 = vmatprep.subr.mxu0 %v109
    %1869 = vmatpush1.msra.mxu0 %v108
    %1870 = vmatprep.subr.mxu0 %v105
    %1871 = vmatpush1.msra.mxu0 %v104
    %1872 = vmatprep.subr.mxu0 %v101
    %1873 = vmatpush1.msra.mxu0 %v100
    %1874 = vmatprep.subr.mxu0 %v97
    %1875 = vmatpush1.msra.mxu0 %v96
    %1876 = vmatprep.subr.mxu0 %v93
    %1877 = vmatpush1.msra.mxu0 %v92
    %1878 = vmatprep.subr.mxu0 %v89
    %1879 = vmatpush1.msra.mxu0 %v88
    %1880 = vmatprep.subr.mxu0 %v85
    %1881 = vmatpush1.msra.mxu0 %v84
    %1882 = vmatprep.subr.mxu0 %v81
    %1883 = vmatpush1.msra.mxu0 %v80
    %1884 = vmatprep.subr.mxu0 0.0
    %1885 = vmatpush2.msra.mxu0 0.0
    %1886 = vmatprep.subr.mxu0 0.0
    %1887 = vmatpush2.msra.mxu0 0.0
    %1888 = vmatprep.subr.mxu0 0.0
    %1889 = vmatpush2.msra.mxu0 0.0
    %1890 = vmatprep.subr.mxu0 0.0
    %1891 = vmatpush2.msra.mxu0 0.0
    %1892 = vmatprep.subr.mxu0 0.0
    %1893 = vmatpush2.msra.mxu0 0.0
    %1894 = vmatprep.subr.mxu0 0.0
    %1895 = vmatpush2.msra.mxu0 0.0
    %1896 = vmatprep.subr.mxu0 0.0
    %1897 = vmatpush2.msra.mxu0 0.0
    %1898 = vmatprep.subr.mxu0 0.0
    %1899 = vmatpush2.msra.mxu0 0.0
    %1900 = vmatprep.subr.mxu0 0.0
    %1901 = vmatpush2.msra.mxu0 0.0
    %1902 = vmatprep.subr.mxu0 0.0
    %1903 = vmatpush2.msra.mxu0 0.0
    %1904 = vmatprep.subr.mxu0 0.0
    %1905 = vmatpush2.msra.mxu0 0.0
    %1906 = vmatprep.subr.mxu0 0.0
    %1907 = vmatpush2.msra.mxu0 0.0
    %1908 = vmatprep.subr.mxu0 0.0
    %1909 = vmatpush2.msra.mxu0 0.0
    %1910 = vmatprep.subr.mxu0 0.0
    %1911 = vmatpush2.msra.mxu0 0.0
    %1912 = vmatprep.subr.mxu0 0.0
    %1913 = vmatpush2.msra.mxu0 0.0
    %1914 = vmatprep.subr.mxu0 0.0
    %1915 = vmatpush2.msra.mxu0 0.0
    %1916 = vmatprep.mubr.f32.mxu0 0.0
    %1917 = vmatmul.mubr.f32.gmra.mxu0 %v1825
    %v1918 = vpop.f32.mrf.mxu0
    %v1919 = vadd.f32 %v1838, %v1918
    %v1920 = vpop.f32.mrf.mxu0
    %v1921 = vadd.f32 %v1846, %v1920
    %1922 = vdwg.mxu0
    %1923 = vmatprep.subr.mxu0 %v143
    %1924 = vmatpush1.msra.mxu0 %v142
    %1925 = vmatprep.subr.mxu0 %v139
    %1926 = vmatpush1.msra.mxu0 %v138
    %1927 = vmatprep.subr.mxu0 %v135
    %1928 = vmatpush1.msra.mxu0 %v134
    %1929 = vmatprep.subr.mxu0 %v131
    %1930 = vmatpush1.msra.mxu0 %v130
    %1931 = vmatprep.subr.mxu0 %v127
    %1932 = vmatpush1.msra.mxu0 %v126
    %1933 = vmatprep.subr.mxu0 %v123
    %1934 = vmatpush1.msra.mxu0 %v122
    %1935 = vmatprep.subr.mxu0 %v119
    %1936 = vmatpush1.msra.mxu0 %v118
    %1937 = vmatprep.subr.mxu0 %v115
    %1938 = vmatpush1.msra.mxu0 %v114
    %1939 = vmatprep.subr.mxu0 %v111
    %1940 = vmatpush1.msra.mxu0 %v110
    %1941 = vmatprep.subr.mxu0 %v107
    %1942 = vmatpush1.msra.mxu0 %v106
    %1943 = vmatprep.subr.mxu0 %v103
    %1944 = vmatpush1.msra.mxu0 %v102
    %1945 = vmatprep.subr.mxu0 %v99
    %1946 = vmatpush1.msra.mxu0 %v98
    %1947 = vmatprep.subr.mxu0 %v95
    %1948 = vmatpush1.msra.mxu0 %v94
    %1949 = vmatprep.subr.mxu0 %v91
    %1950 = vmatpush1.msra.mxu0 %v90
    %1951 = vmatprep.subr.mxu0 %v87
    %1952 = vmatpush1.msra.mxu0 %v86
    %1953 = vmatprep.subr.mxu0 %v83
    %1954 = vmatpush1.msra.mxu0 %v82
    %1955 = vmatprep.subr.mxu0 0.0
    %1956 = vmatpush2.msra.mxu0 0.0
    %1957 = vmatprep.subr.mxu0 0.0
    %1958 = vmatpush2.msra.mxu0 0.0
    %1959 = vmatprep.subr.mxu0 0.0
    %1960 = vmatpush2.msra.mxu0 0.0
    %1961 = vmatprep.subr.mxu0 0.0
    %1962 = vmatpush2.msra.mxu0 0.0
    %1963 = vmatprep.subr.mxu0 0.0
    %1964 = vmatpush2.msra.mxu0 0.0
    %1965 = vmatprep.subr.mxu0 0.0
    %1966 = vmatpush2.msra.mxu0 0.0
    %1967 = vmatprep.subr.mxu0 0.0
    %1968 = vmatpush2.msra.mxu0 0.0
    %1969 = vmatprep.subr.mxu0 0.0
    %1970 = vmatpush2.msra.mxu0 0.0
    %1971 = vmatprep.subr.mxu0 0.0
    %1972 = vmatpush2.msra.mxu0 0.0
    %1973 = vmatprep.subr.mxu0 0.0
    %1974 = vmatpush2.msra.mxu0 0.0
    %1975 = vmatprep.subr.mxu0 0.0
    %1976 = vmatpush2.msra.mxu0 0.0
    %1977 = vmatprep.subr.mxu0 0.0
    %1978 = vmatpush2.msra.mxu0 0.0
    %1979 = vmatprep.subr.mxu0 0.0
    %1980 = vmatpush2.msra.mxu0 0.0
    %1981 = vmatprep.subr.mxu0 0.0
    %1982 = vmatpush2.msra.mxu0 0.0
    %1983 = vmatprep.subr.mxu0 0.0
    %1984 = vmatpush2.msra.mxu0 0.0
    %1985 = vmatprep.subr.mxu0 0.0
    %1986 = vmatpush2.msra.mxu0 0.0
    %1987 = vmatprep.mubr.f32.mxu0 0.0
    %1988 = vmatmul.mubr.f32.gmra.mxu0 %v1825
    %v1989 = vpop.f32.mrf.mxu0
    %v1990 = vadd.f32 %v1845, %v1989
    %v1991 = vpop.f32.mrf.mxu0
    %v1992 = vadd.f32 %v1847, %v1991
    %1993 = vdwg.mxu0
    %1994 = vmatprep.subr.mxu0 0.0
    %1995 = vmatpush1.msra.mxu0 %v159
    %1996 = vmatprep.subr.mxu0 0.0
    %1997 = vmatpush1.msra.mxu0 %v158
    %1998 = vmatprep.subr.mxu0 0.0
    %1999 = vmatpush1.msra.mxu0 %v157
    %2000 = vmatprep.subr.mxu0 0.0
    %2001 = vmatpush1.msra.mxu0 %v156
    %2002 = vmatprep.subr.mxu0 0.0
    %2003 = vmatpush1.msra.mxu0 %v155
    %2004 = vmatprep.subr.mxu0 0.0
    %2005 = vmatpush1.msra.mxu0 %v154
    %2006 = vmatprep.subr.mxu0 0.0
    %2007 = vmatpush1.msra.mxu0 %v153
    %2008 = vmatprep.subr.mxu0 0.0
    %2009 = vmatpush1.msra.mxu0 %v152
    %2010 = vmatprep.subr.mxu0 0.0
    %2011 = vmatpush1.msra.mxu0 %v151
    %2012 = vmatprep.subr.mxu0 0.0
    %2013 = vmatpush1.msra.mxu0 %v150
    %2014 = vmatprep.subr.mxu0 0.0
    %2015 = vmatpush1.msra.mxu0 %v149
    %2016 = vmatprep.subr.mxu0 0.0
    %2017 = vmatpush1.msra.mxu0 %v148
    %2018 = vmatprep.subr.mxu0 0.0
    %2019 = vmatpush1.msra.mxu0 %v147
    %2020 = vmatprep.subr.mxu0 0.0
    %2021 = vmatpush1.msra.mxu0 %v146
    %2022 = vmatprep.subr.mxu0 0.0
    %2023 = vmatpush1.msra.mxu0 %v145
    %2024 = vmatprep.subr.mxu0 0.0
    %2025 = vmatpush1.msra.mxu0 %v144
    %2026 = vmatprep.subr.mxu0 0.0
    %2027 = vmatpush2.msra.mxu0 0.0
    %2028 = vmatprep.subr.mxu0 0.0
    %2029 = vmatpush2.msra.mxu0 0.0
    %2030 = vmatprep.subr.mxu0 0.0
    %2031 = vmatpush2.msra.mxu0 0.0
    %2032 = vmatprep.subr.mxu0 0.0
    %2033 = vmatpush2.msra.mxu0 0.0
    %2034 = vmatprep.subr.mxu0 0.0
    %2035 = vmatpush2.msra.mxu0 0.0
    %2036 = vmatprep.subr.mxu0 0.0
    %2037 = vmatpush2.msra.mxu0 0.0
    %2038 = vmatprep.subr.mxu0 0.0
    %2039 = vmatpush2.msra.mxu0 0.0
    %2040 = vmatprep.subr.mxu0 0.0
    %2041 = vmatpush2.msra.mxu0 0.0
    %2042 = vmatprep.subr.mxu0 0.0
    %2043 = vmatpush2.msra.mxu0 0.0
    %2044 = vmatprep.subr.mxu0 0.0
    %2045 = vmatpush2.msra.mxu0 0.0
    %2046 = vmatprep.subr.mxu0 0.0
    %2047 = vmatpush2.msra.mxu0 0.0
    %2048 = vmatprep.subr.mxu0 0.0
    %2049 = vmatpush2.msra.mxu0 0.0
    %2050 = vmatprep.subr.mxu0 0.0
    %2051 = vmatpush2.msra.mxu0 0.0
    %2052 = vmatprep.subr.mxu0 0.0
    %2053 = vmatpush2.msra.mxu0 0.0
    %2054 = vmatprep.subr.mxu0 0.0
    %2055 = vmatpush2.msra.mxu0 0.0
    %2056 = vmatprep.subr.mxu0 0.0
    %2057 = vmatpush2.msra.mxu0 0.0
    %2058 = vmatprep.mubr.f32.mxu0 0.0
    %2059 = vmatmul.mubr.f32.gmra.mxu0 %v1823
    %v2060 = vpop.f32.mrf.mxu0
    %v2061 = vadd.f32 %v165, %v2060
    %v2062 = vpop.f32.mrf.mxu0
    %2063 = vdwg.mxu0
    %v2064 = vtanh.pop %v2061
    %s2065 = scalar_lea.vmem %s1, 12
    %v2066 = vld [vmem:[%s2065] sm:$0x3]
    %2068 = vset.pattern.permute.xlu0 0
    %2069 = vperm.xlu0 %2068, %v2066
    %v2070 = vpop.permute.xlu0 %2069
    %v2072 = vmul.f32 %v2064, %v2070
    %v2073 = vadd.f32 %v1823, %v2072
    %v2074 = vxor.u32 %v1919, 2147483648
    %v2075 = vmul.f32 %v2074, 1.442695
    %v2076 = vpow.pop %v2075
    %v2077 = vadd.f32 %v2076, 1.0
    %v2078 = vrcp.pop %v2077
    %v2079 = vmul.f32 1.0, %v2078
    %v2080 = vxor.u32 %v1921, 2147483648
    %v2081 = vmul.f32 %v2080, 1.442695
    %v2082 = vpow.pop %v2081
    %v2083 = vadd.f32 %v2082, 1.0
    %v2084 = vrcp.pop %v2083
    %v2085 = vmul.f32 1.0, %v2084
    %v2086 = vxor.u32 %v1990, 2147483648
    %v2087 = vmul.f32 %v2086, 1.442695
    %v2088 = vpow.pop %v2087
    %v2089 = vadd.f32 %v2088, 1.0
    %v2090 = vrcp.pop %v2089
    %v2091 = vmul.f32 1.0, %v2090
    %v2092 = vxor.u32 %v1992, 2147483648
    %v2093 = vmul.f32 %v2092, 1.442695
    %v2094 = vpow.pop %v2093
    %v2095 = vadd.f32 %v2094, 1.0
    %v2096 = vrcp.pop %v2095
    %v2097 = vmul.f32 1.0, %v2096
    %v2098 = vmul.f32 %v2079, %v2073
    %v2099 = vmul.f32 %v2085, %v2097
    %v2100 = vadd.f32 %v2098, %v2099
    %v2101 = vtanh.pop %v2100
    %v2102 = vmul.f32 %v2091, %v2101
    %s2103 = scalar_lea.vmem [#allocation10], 12
    %2104 = vst [vmem:[%s2103] sm:$0x3] %v2091
    %s2105 = scalar_lea.vmem [#allocation4], 56
    %v2106 = vld [vmem:[%s2105] sm:$0xff]
    %v2108 = vcombine.high %v2106, %v2106
    %v2110 = vunpack.c.l.s4 1983009808
    %v2111 = vunpack.c.0.s8 %v2110
    %v2112 = vlaneseq
    %v2113 = vshrl.u32 %v2112, 7
    %v2114 = vsub.s32 %v2111, %v2113
    %v2115 = vrot.slane %v2106, %v2114
    %v2117 = vunpack.c.l.s4 1983009808
    %v2118 = vunpack.c.0.s8 %v2117
    %v2119 = vlaneseq
    %v2120 = vshrl.u32 %v2119, 7
    %v2121 = vsub.s32 %v2118, %v2120
    %v2122 = vrot.slane %v2108, %v2121
    %v2123 = vcombine.high %v2115, %v2115
    %v2124 = vcombine.high %v2122, %v2122
    %2129 = vmatprep.subr.mxu0 %v141
    %2130 = vmatpush1.msra.mxu0 %v140
    %2131 = vmatprep.subr.mxu0 %v137
    %2132 = vmatpush1.msra.mxu0 %v136
    %2133 = vmatprep.subr.mxu0 %v133
    %2134 = vmatpush1.msra.mxu0 %v132
    %2135 = vmatprep.subr.mxu0 %v129
    %2136 = vmatpush1.msra.mxu0 %v128
    %2137 = vmatprep.subr.mxu0 %v125
    %2138 = vmatpush1.msra.mxu0 %v124
    %2139 = vmatprep.subr.mxu0 %v121
    %2140 = vmatpush1.msra.mxu0 %v120
    %2141 = vmatprep.subr.mxu0 %v117
    %2142 = vmatpush1.msra.mxu0 %v116
    %2143 = vmatprep.subr.mxu0 %v113
    %2144 = vmatpush1.msra.mxu0 %v112
    %2145 = vmatprep.subr.mxu0 %v109
    %2146 = vmatpush1.msra.mxu0 %v108
    %2147 = vmatprep.subr.mxu0 %v105
    %2148 = vmatpush1.msra.mxu0 %v104
    %2149 = vmatprep.subr.mxu0 %v101
    %2150 = vmatpush1.msra.mxu0 %v100
    %2151 = vmatprep.subr.mxu0 %v97
    %2152 = vmatpush1.msra.mxu0 %v96
    %2153 = vmatprep.subr.mxu0 %v93
    %2154 = vmatpush1.msra.mxu0 %v92
    %2155 = vmatprep.subr.mxu0 %v89
    %2156 = vmatpush1.msra.mxu0 %v88
    %2157 = vmatprep.subr.mxu0 %v85
    %2158 = vmatpush1.msra.mxu0 %v84
    %2159 = vmatprep.subr.mxu0 %v81
    %2160 = vmatpush1.msra.mxu0 %v80
    %2161 = vmatprep.subr.mxu0 0.0
    %2162 = vmatpush2.msra.mxu0 0.0
    %2163 = vmatprep.subr.mxu0 0.0
    %2164 = vmatpush2.msra.mxu0 0.0
    %2165 = vmatprep.subr.mxu0 0.0
    %2166 = vmatpush2.msra.mxu0 0.0
    %2167 = vmatprep.subr.mxu0 0.0
    %2168 = vmatpush2.msra.mxu0 0.0
    %2169 = vmatprep.subr.mxu0 0.0
    %2170 = vmatpush2.msra.mxu0 0.0
    %2171 = vmatprep.subr.mxu0 0.0
    %2172 = vmatpush2.msra.mxu0 0.0
    %2173 = vmatprep.subr.mxu0 0.0
    %2174 = vmatpush2.msra.mxu0 0.0
    %2175 = vmatprep.subr.mxu0 0.0
    %2176 = vmatpush2.msra.mxu0 0.0
    %2177 = vmatprep.subr.mxu0 0.0
    %2178 = vmatpush2.msra.mxu0 0.0
    %2179 = vmatprep.subr.mxu0 0.0
    %2180 = vmatpush2.msra.mxu0 0.0
    %2181 = vmatprep.subr.mxu0 0.0
    %2182 = vmatpush2.msra.mxu0 0.0
    %2183 = vmatprep.subr.mxu0 0.0
    %2184 = vmatpush2.msra.mxu0 0.0
    %2185 = vmatprep.subr.mxu0 0.0
    %2186 = vmatpush2.msra.mxu0 0.0
    %2187 = vmatprep.subr.mxu0 0.0
    %2188 = vmatpush2.msra.mxu0 0.0
    %2189 = vmatprep.subr.mxu0 0.0
    %2190 = vmatpush2.msra.mxu0 0.0
    %2191 = vmatprep.subr.mxu0 0.0
    %2192 = vmatpush2.msra.mxu0 0.0
    %2193 = vmatprep.mubr.f32.mxu0 0.0
    %2194 = vmatmul.mubr.f32.gmra.mxu0 %v2102
    %v2195 = vpop.f32.mrf.mxu0
    %v2196 = vadd.f32 %v2115, %v2195
    %v2197 = vpop.f32.mrf.mxu0
    %v2198 = vadd.f32 %v2123, %v2197
    %2199 = vdwg.mxu0
    %2200 = vmatprep.subr.mxu0 %v143
    %2201 = vmatpush1.msra.mxu0 %v142
    %2202 = vmatprep.subr.mxu0 %v139
    %2203 = vmatpush1.msra.mxu0 %v138
    %2204 = vmatprep.subr.mxu0 %v135
    %2205 = vmatpush1.msra.mxu0 %v134
    %2206 = vmatprep.subr.mxu0 %v131
    %2207 = vmatpush1.msra.mxu0 %v130
    %2208 = vmatprep.subr.mxu0 %v127
    %2209 = vmatpush1.msra.mxu0 %v126
    %2210 = vmatprep.subr.mxu0 %v123
    %2211 = vmatpush1.msra.mxu0 %v122
    %2212 = vmatprep.subr.mxu0 %v119
    %2213 = vmatpush1.msra.mxu0 %v118
    %2214 = vmatprep.subr.mxu0 %v115
    %2215 = vmatpush1.msra.mxu0 %v114
    %2216 = vmatprep.subr.mxu0 %v111
    %2217 = vmatpush1.msra.mxu0 %v110
    %2218 = vmatprep.subr.mxu0 %v107
    %2219 = vmatpush1.msra.mxu0 %v106
    %2220 = vmatprep.subr.mxu0 %v103
    %2221 = vmatpush1.msra.mxu0 %v102
    %2222 = vmatprep.subr.mxu0 %v99
    %2223 = vmatpush1.msra.mxu0 %v98
    %2224 = vmatprep.subr.mxu0 %v95
    %2225 = vmatpush1.msra.mxu0 %v94
    %2226 = vmatprep.subr.mxu0 %v91
    %2227 = vmatpush1.msra.mxu0 %v90
    %2228 = vmatprep.subr.mxu0 %v87
    %2229 = vmatpush1.msra.mxu0 %v86
    %2230 = vmatprep.subr.mxu0 %v83
    %2231 = vmatpush1.msra.mxu0 %v82
    %2232 = vmatprep.subr.mxu0 0.0
    %2233 = vmatpush2.msra.mxu0 0.0
    %2234 = vmatprep.subr.mxu0 0.0
    %2235 = vmatpush2.msra.mxu0 0.0
    %2236 = vmatprep.subr.mxu0 0.0
    %2237 = vmatpush2.msra.mxu0 0.0
    %2238 = vmatprep.subr.mxu0 0.0
    %2239 = vmatpush2.msra.mxu0 0.0
    %2240 = vmatprep.subr.mxu0 0.0
    %2241 = vmatpush2.msra.mxu0 0.0
    %2242 = vmatprep.subr.mxu0 0.0
    %2243 = vmatpush2.msra.mxu0 0.0
    %2244 = vmatprep.subr.mxu0 0.0
    %2245 = vmatpush2.msra.mxu0 0.0
    %2246 = vmatprep.subr.mxu0 0.0
    %2247 = vmatpush2.msra.mxu0 0.0
    %2248 = vmatprep.subr.mxu0 0.0
    %2249 = vmatpush2.msra.mxu0 0.0
    %2250 = vmatprep.subr.mxu0 0.0
    %2251 = vmatpush2.msra.mxu0 0.0
    %2252 = vmatprep.subr.mxu0 0.0
    %2253 = vmatpush2.msra.mxu0 0.0
    %2254 = vmatprep.subr.mxu0 0.0
    %2255 = vmatpush2.msra.mxu0 0.0
    %2256 = vmatprep.subr.mxu0 0.0
    %2257 = vmatpush2.msra.mxu0 0.0
    %2258 = vmatprep.subr.mxu0 0.0
    %2259 = vmatpush2.msra.mxu0 0.0
    %2260 = vmatprep.subr.mxu0 0.0
    %2261 = vmatpush2.msra.mxu0 0.0
    %2262 = vmatprep.subr.mxu0 0.0
    %2263 = vmatpush2.msra.mxu0 0.0
    %2264 = vmatprep.mubr.f32.mxu0 0.0
    %2265 = vmatmul.mubr.f32.gmra.mxu0 %v2102
    %v2266 = vpop.f32.mrf.mxu0
    %v2267 = vadd.f32 %v2122, %v2266
    %v2268 = vpop.f32.mrf.mxu0
    %v2269 = vadd.f32 %v2124, %v2268
    %2270 = vdwg.mxu0
    %2271 = vmatprep.subr.mxu0 0.0
    %2272 = vmatpush1.msra.mxu0 %v159
    %2273 = vmatprep.subr.mxu0 0.0
    %2274 = vmatpush1.msra.mxu0 %v158
    %2275 = vmatprep.subr.mxu0 0.0
    %2276 = vmatpush1.msra.mxu0 %v157
    %2277 = vmatprep.subr.mxu0 0.0
    %2278 = vmatpush1.msra.mxu0 %v156
    %2279 = vmatprep.subr.mxu0 0.0
    %2280 = vmatpush1.msra.mxu0 %v155
    %2281 = vmatprep.subr.mxu0 0.0
    %2282 = vmatpush1.msra.mxu0 %v154
    %2283 = vmatprep.subr.mxu0 0.0
    %2284 = vmatpush1.msra.mxu0 %v153
    %2285 = vmatprep.subr.mxu0 0.0
    %2286 = vmatpush1.msra.mxu0 %v152
    %2287 = vmatprep.subr.mxu0 0.0
    %2288 = vmatpush1.msra.mxu0 %v151
    %2289 = vmatprep.subr.mxu0 0.0
    %2290 = vmatpush1.msra.mxu0 %v150
    %2291 = vmatprep.subr.mxu0 0.0
    %2292 = vmatpush1.msra.mxu0 %v149
    %2293 = vmatprep.subr.mxu0 0.0
    %2294 = vmatpush1.msra.mxu0 %v148
    %2295 = vmatprep.subr.mxu0 0.0
    %2296 = vmatpush1.msra.mxu0 %v147
    %2297 = vmatprep.subr.mxu0 0.0
    %2298 = vmatpush1.msra.mxu0 %v146
    %2299 = vmatprep.subr.mxu0 0.0
    %2300 = vmatpush1.msra.mxu0 %v145
    %2301 = vmatprep.subr.mxu0 0.0
    %2302 = vmatpush1.msra.mxu0 %v144
    %2303 = vmatprep.subr.mxu0 0.0
    %2304 = vmatpush2.msra.mxu0 0.0
    %2305 = vmatprep.subr.mxu0 0.0
    %2306 = vmatpush2.msra.mxu0 0.0
    %2307 = vmatprep.subr.mxu0 0.0
    %2308 = vmatpush2.msra.mxu0 0.0
    %2309 = vmatprep.subr.mxu0 0.0
    %2310 = vmatpush2.msra.mxu0 0.0
    %2311 = vmatprep.subr.mxu0 0.0
    %2312 = vmatpush2.msra.mxu0 0.0
    %2313 = vmatprep.subr.mxu0 0.0
    %2314 = vmatpush2.msra.mxu0 0.0
    %2315 = vmatprep.subr.mxu0 0.0
    %2316 = vmatpush2.msra.mxu0 0.0
    %2317 = vmatprep.subr.mxu0 0.0
    %2318 = vmatpush2.msra.mxu0 0.0
    %2319 = vmatprep.subr.mxu0 0.0
    %2320 = vmatpush2.msra.mxu0 0.0
    %2321 = vmatprep.subr.mxu0 0.0
    %2322 = vmatpush2.msra.mxu0 0.0
    %2323 = vmatprep.subr.mxu0 0.0
    %2324 = vmatpush2.msra.mxu0 0.0
    %2325 = vmatprep.subr.mxu0 0.0
    %2326 = vmatpush2.msra.mxu0 0.0
    %2327 = vmatprep.subr.mxu0 0.0
    %2328 = vmatpush2.msra.mxu0 0.0
    %2329 = vmatprep.subr.mxu0 0.0
    %2330 = vmatpush2.msra.mxu0 0.0
    %2331 = vmatprep.subr.mxu0 0.0
    %2332 = vmatpush2.msra.mxu0 0.0
    %2333 = vmatprep.subr.mxu0 0.0
    %2334 = vmatpush2.msra.mxu0 0.0
    %2335 = vmatprep.mubr.f32.mxu0 0.0
    %2336 = vmatmul.mubr.f32.gmra.mxu0 %v2100
    %v2337 = vpop.f32.mrf.mxu0
    %v2338 = vadd.f32 %v165, %v2337
    %v2339 = vpop.f32.mrf.mxu0
    %2340 = vdwg.mxu0
    %v2341 = vtanh.pop %v2338
    %s2342 = scalar_lea.vmem %s1, 14
    %v2343 = vld [vmem:[%s2342] sm:$0x3]
    %2345 = vset.pattern.permute.xlu0 0
    %2346 = vperm.xlu0 %2345, %v2343
    %v2347 = vpop.permute.xlu0 %2346
    %v2349 = vmul.f32 %v2341, %v2347
    %v2350 = vadd.f32 %v2100, %v2349
    %v2351 = vxor.u32 %v2196, 2147483648
    %v2352 = vmul.f32 %v2351, 1.442695
    %v2353 = vpow.pop %v2352
    %v2354 = vadd.f32 %v2353, 1.0
    %v2355 = vrcp.pop %v2354
    %v2356 = vmul.f32 1.0, %v2355
    %v2357 = vxor.u32 %v2198, 2147483648
    %v2358 = vmul.f32 %v2357, 1.442695
    %v2359 = vpow.pop %v2358
    %v2360 = vadd.f32 %v2359, 1.0
    %v2361 = vrcp.pop %v2360
    %v2362 = vmul.f32 1.0, %v2361
    %v2363 = vxor.u32 %v2267, 2147483648
    %v2364 = vmul.f32 %v2363, 1.442695
    %v2365 = vpow.pop %v2364
    %v2366 = vadd.f32 %v2365, 1.0
    %v2367 = vrcp.pop %v2366
    %v2368 = vmul.f32 1.0, %v2367
    %v2369 = vxor.u32 %v2269, 2147483648
    %v2370 = vmul.f32 %v2369, 1.442695
    %v2371 = vpow.pop %v2370
    %v2372 = vadd.f32 %v2371, 1.0
    %v2373 = vrcp.pop %v2372
    %v2374 = vmul.f32 1.0, %v2373
    %v2375 = vmul.f32 %v2356, %v2350
    %v2376 = vmul.f32 %v2362, %v2374
    %v2377 = vadd.f32 %v2375, %v2376
    %v2378 = vtanh.pop %v2377
    %v2379 = vmul.f32 %v2368, %v2378
    %s2380 = scalar_lea.vmem [#allocation10], 14
    %2381 = vst [vmem:[%s2380] sm:$0x3] %v2368
    %2382 = vst [vmem:[#allocation2] sm:$0x3] %v2379
    %2383 = vst [vmem:[#allocation3] sm:$0x3] %v2377
    // Predicated region
    $region46: #{tpu_custom_call.1} parent=1 // pred_check
      %p2384 = pneg %p72
    $region47: #{tpu_custom_call.1} parent=1 // pred_check_branch
      %2386 = sbr.rel (%p2384) target = $region49
    $region48: #{tpu_custom_call.1} parent=1 // pred_region
      %2387 = vst [vmem:[#allocation11] sm:$0x3] %v2379
      %2388 = vst [vmem:[#allocation13] sm:$0x3] %v2377
    $region49: #{tpu_custom_call.1} parent=1 // pred_fallthru
      _
    // Predicated region
    $region50: #{tpu_custom_call.1} parent=1 // pred_check
      _
    $region51: #{tpu_custom_call.1} parent=1 // pred_check_branch
      %2390 = sbr.rel (0) target = $region53
    $region52: #{tpu_custom_call.1} parent=1 // pred_region
      %s2392 = ssub.s32 256, 256
      %2393 = vsyncadd [#allocation6], %s2392
      %s2394 = sshll.u32 [#allocation10], 4
      %s2395 = int_to_ptr.vmem [resolvable:$true] %s2394
      %2400 = dma.vmem_to_hbm [thread:$0]  %s2395, 256, %s7, [#allocation6], 32, 32, 2
    $region53: #{tpu_custom_call.1} parent=1 // pred_fallthru
      _
    // Predicated region
    $region54: #{tpu_custom_call.1} parent=1 // pred_check
      _
    $region55: #{tpu_custom_call.1} parent=1 // pred_check_branch
      %2402 = sbr.rel (0) target = $region57
    $region56: #{tpu_custom_call.1} parent=1 // pred_region
      %s2404 = ssub.s32 32, 32
      %2405 = vsyncadd [#allocation12], %s2404
      %s2407 = sshll.u32 [#allocation11], 4
      %s2408 = int_to_ptr.vmem [resolvable:$true] %s2407
      %2410 = dma.vmem_to_hbm [thread:$0]  %s2408, 32, %s8, [#allocation12]
    $region57: #{tpu_custom_call.1} parent=1 // pred_fallthru
      _
    // Predicated region
    $region58: #{tpu_custom_call.1} parent=1 // pred_check
      _
    $region59: #{tpu_custom_call.1} parent=1 // pred_check_branch
      %2412 = sbr.rel (0) target = $region61
    $region60: #{tpu_custom_call.1} parent=1 // pred_region
      %s2414 = ssub.s32 32, 32
      %2415 = vsyncadd [#allocation12], %s2414
      %s2417 = sshll.u32 [#allocation13], 4
      %s2418 = int_to_ptr.vmem [resolvable:$true] %s2417
      %2420 = dma.vmem_to_hbm [thread:$0]  %s2418, 32, %s9, [#allocation12]
    $region61: #{tpu_custom_call.1} parent=1 // pred_fallthru
      _
    // Predicated region
    $region62: #{tpu_custom_call.1} parent=1 // pred_check
      _
    $region63: #{tpu_custom_call.1} parent=1 // pred_check_branch
      %2422 = sbr.rel (0) target = $region65
    $region64: #{tpu_custom_call.1} parent=1 // pred_region
      %2423 = dma.done [#allocation6], 256
    $region65: #{tpu_custom_call.1} parent=1 // pred_fallthru
      _
    // Predicated region
    $region66: #{tpu_custom_call.1} parent=1 // pred_check
      _
    $region67: #{tpu_custom_call.1} parent=1 // pred_check_branch
      %2425 = sbr.rel (0) target = $region69
    $region68: #{tpu_custom_call.1} parent=1 // pred_region
      %2426 = dma.done [#allocation12], 32
    $region69: #{tpu_custom_call.1} parent=1 // pred_fallthru
      _
    // Predicated region
    $region70: #{tpu_custom_call.1} parent=1 // pred_check
      _
    $region71: #{tpu_custom_call.1} parent=1 // pred_check_branch
      %2428 = sbr.rel (0) target = $region73
    $region72: #{tpu_custom_call.1} parent=1 // pred_region
      %2429 = dma.done [#allocation12], 32
    $region73: #{tpu_custom_call.1} parent=1 // pred_fallthru
      _
    %2430 = vsyncpa [#allocation5], 1
    %2431 = vsyncpa [#allocation8], 1
    %2432 = vsyncpa [#allocation6], 1
    %2433 = vsyncpa [#allocation12], 1

</llo_original>
